<compile_context>
chip_gen: v7x
topology: tpu7x:2x2x1
jax: 0.10.0
libtpu: 0.0.40
codegen_flags: <defaults>
</compile_context>

<pallas_src>
import math

import jax
import jax.numpy as jnp
from jax.experimental import pallas as pl
from jax.experimental.pallas import tpu as pltpu

_VMEM = pltpu.MemorySpace.VMEM


# ----------------------------- small helpers -----------------------------

def _round_up(x, m):
    return ((x + m - 1) // m) * m


def _dim_tile(dim, max_tile, align):
    """Return (padded_dim, tile) such that tile divides padded_dim and the
    block-shape divisibility rules ((8,128) or full-dim) are satisfied."""
    d = _round_up(dim, align)
    if d <= max_tile:
        return d, d                     # single tile == full (padded) dim
    return _round_up(dim, max_tile), max_tile


def _pad2d(x, rows, cols, val=0.0):
    r, c = x.shape
    if r == rows and c == cols:
        return x
    return jnp.pad(x, ((0, rows - r), (0, cols - c)), constant_values=val)


def _fold_bn(bn, eps=1e-5):
    scale = bn["gamma"] / jnp.sqrt(bn["var"] + eps)
    bias = bn["beta"] - bn["mean"] * scale
    return scale.astype(jnp.float32), bias.astype(jnp.float32)


# ------------------- gridded fused matmul (conv/linear core) -------------------

def _make_matmul_kernel(has_pro, has_epi):
    """(tm,tk)@(tk,tn) accumulated over the K grid axis.

    Optional prologue: a := relu(a * scale_k + bias_k)   (BN+ReLU of the input)
    Optional epilogue: out := relu(acc * scale_n + bias_n) (BN+ReLU of the output)
    """
    def kernel(*refs):
        idx = 0
        a_ref = refs[idx]; idx += 1
        b_ref = refs[idx]; idx += 1
        if has_pro:
            sa_ref, ba_ref = refs[idx], refs[idx + 1]; idx += 2
        if has_epi:
            so_ref, bo_ref = refs[idx], refs[idx + 1]; idx += 2
        o_ref = refs[idx]
        acc_ref = refs[idx + 1]

        k = pl.program_id(2)

        @pl.when(k == 0)
        def _init():
            acc_ref[...] = jnp.zeros_like(acc_ref)

        a = a_ref[...]
        if has_pro:
            a = jnp.maximum(a.astype(jnp.float32) * sa_ref[...] + ba_ref[...], 0.0)
            a = a.astype(jnp.bfloat16)
        acc_ref[...] += jnp.dot(a, b_ref[...], preferred_element_type=jnp.float32)

        @pl.when(k == pl.num_programs(2) - 1)
        def _finalize():
            out = acc_ref[...]
            if has_epi:
                out = jnp.maximum(out * so_ref[...] + bo_ref[...], 0.0)
            o_ref[...] = out.astype(o_ref.dtype)

    return kernel


def fused_matmul(a, b, *, scale_a=None, bias_a=None, scale_o=None, bias_o=None,
                 out_dtype=jnp.bfloat16):
    """(M,K)@(K,N) with optional fused BN+ReLU prologue / epilogue.

    bf16 MXU inputs, f32 accumulation; N padded to a multiple of 128 so the
    output stores are lane dense; tiles sized to fit comfortably in the
    smallest (v7x 64 MiB physical / 32 MiB scoped) VMEM budget.
    """
    M, K = a.shape
    K2, N = b.shape
    assert K == K2
    has_pro = scale_a is not None
    has_epi = scale_o is not None

    M_pad, tm = _dim_tile(M, 256, 8)
    N_pad, tn = _dim_tile(N, 512, 128)     # lane-dense output (>=128)
    K_pad, tk = _dim_tile(K, 1024, 8)

    a_p = _pad2d(a.astype(jnp.bfloat16), M_pad, K_pad)
    b_p = _pad2d(b.astype(jnp.bfloat16), K_pad, N_pad)

    inputs = [a_p, b_p]
    in_specs = [
        pl.BlockSpec((tm, tk), lambda i, j, k: (i, k)),
        pl.BlockSpec((tk, tn), lambda i, j, k: (k, j)),
    ]
    if has_pro:
        inputs += [_pad2d(scale_a.reshape(1, K).astype(jnp.float32), 1, K_pad),
                   _pad2d(bias_a.reshape(1, K).astype(jnp.float32), 1, K_pad)]
        in_specs += [pl.BlockSpec((1, tk), lambda i, j, k: (0, k)),
                     pl.BlockSpec((1, tk), lambda i, j, k: (0, k))]
    if has_epi:
        inputs += [_pad2d(scale_o.reshape(1, N).astype(jnp.float32), 1, N_pad),
                   _pad2d(bias_o.reshape(1, N).astype(jnp.float32), 1, N_pad)]
        in_specs += [pl.BlockSpec((1, tn), lambda i, j, k: (0, j)),
                     pl.BlockSpec((1, tn), lambda i, j, k: (0, j))]

    grid = (M_pad // tm, N_pad // tn, K_pad // tk)
    out = pl.pallas_call(
        _make_matmul_kernel(has_pro, has_epi),
        out_shape=jax.ShapeDtypeStruct((M_pad, N_pad), out_dtype),
        grid_spec=pltpu.PrefetchScalarGridSpec(
            num_scalar_prefetch=0,
            grid=grid,
            in_specs=in_specs,
            out_specs=pl.BlockSpec((tm, tn), lambda i, j, k: (i, j)),
            scratch_shapes=[pltpu.VMEM((tm, tn), jnp.float32)]),
        compiler_params=pltpu.CompilerParams(
            dimension_semantics=("parallel", "parallel", "arbitrary")),
    )(*inputs)
    return out[:M, :N]


# ------------------- stride-1 conv via tap accumulation (no im2col) -------------------

def _make_tap_conv_kernel(shifts, rows_out):
    def kernel(x_ref, w_ref, o_ref):
        acc = None
        for t, s in enumerate(shifts):
            a = x_ref[s:s + rows_out, :]                       # shifted flat window
            p = jnp.dot(a, w_ref[t], preferred_element_type=jnp.float32)
            acc = p if acc is None else acc + p
        o_ref[...] = acc.astype(o_ref.dtype)
    return kernel


def conv2d_s1(x, w, pad):
    """Stride-1 conv (NHWC x, PyTorch (Cout,Cin,kh,kw) w) via kh*kw shifted
    matmuls over a flattened, zero-padded row view -- no patch materialization.
    Cout is padded to 128 lanes for dense stores."""
    # TODO(synk): for large feature maps, grid this over row blocks with a halo
    # instead of holding the whole flattened activation in VMEM.
    Cout, Cin, kh, kw = w.shape
    N, H, W, C = x.shape
    assert C == Cin
    Hp, Wp = H + 2 * pad, W + 2 * pad
    Ho, Wo = Hp - kh + 1, Wp - kw + 1

    xp = jnp.pad(x, ((0, 0), (pad, pad), (pad, pad), (0, 0))) if pad else x
    rows = N * Hp * Wp
    halo = (kh - 1) * Wp + (kw - 1)
    flat = jnp.pad(xp.reshape(rows, Cin), ((0, halo), (0, 0))).astype(jnp.bfloat16)

    Cout_p = _round_up(Cout, 128)
    wt = jnp.transpose(w, (2, 3, 1, 0)).reshape(kh * kw, Cin, Cout)
    wt = jnp.pad(wt, ((0, 0), (0, 0), (0, Cout_p - Cout))).astype(jnp.bfloat16)

    shifts = [di * Wp + dj for di in range(kh) for dj in range(kw)]
    out = pl.pallas_call(
        _make_tap_conv_kernel(shifts, rows),
        out_shape=jax.ShapeDtypeStruct((rows, Cout_p), jnp.bfloat16),
        in_specs=[pl.BlockSpec(memory_space=_VMEM),
                  pl.BlockSpec(memory_space=_VMEM)],
        out_specs=pl.BlockSpec(memory_space=_VMEM),
    )(flat, wt)
    out = out.reshape(N, Hp, Wp, Cout_p)
    return out[:, :Ho, :Wo, :Cout]


# ------------------- pooling via shifted-slice max/add tree -------------------

def _make_pool_kernel(shifts, rows_out, op):
    inv = 1.0 / len(shifts)

    def kernel(x_ref, o_ref):
        if op == "max":
            r = x_ref[shifts[0]:shifts[0] + rows_out, :]
            for s in shifts[1:]:
                r = jnp.maximum(r, x_ref[s:s + rows_out, :])
            o_ref[...] = r.astype(o_ref.dtype)
        else:
            r = x_ref[shifts[0]:shifts[0] + rows_out, :].astype(jnp.float32)
            for s in shifts[1:]:
                r = r + x_ref[s:s + rows_out, :].astype(jnp.float32)
            o_ref[...] = (r * inv).astype(o_ref.dtype)

    return kernel


def pool2d(x, k, stride, pad, op):
    """Max/avg pool as a single kernel over shifted flat row slices; the
    strided subsampling of the valid window starts is a cheap slice outside."""
    N, H, W, C = x.shape
    Hp, Wp = H + 2 * pad, W + 2 * pad
    Ho = (Hp - k) // stride + 1
    Wo = (Wp - k) // stride + 1
    pad_val = -jnp.inf if op == "max" else 0.0

    xp = x
    if pad:
        xp = jnp.pad(x, ((0, 0), (pad, pad), (pad, pad), (0, 0)),
                     constant_values=pad_val)
    rows = N * Hp * Wp
    halo = (k - 1) * Wp + (k - 1)
    flat = jnp.pad(xp.reshape(rows, C), ((0, halo), (0, 0)),
                   constant_values=pad_val)

    shifts = [di * Wp + dj for di in range(k) for dj in range(k)]
    out = pl.pallas_call(
        _make_pool_kernel(shifts, rows, op),
        out_shape=jax.ShapeDtypeStruct((rows, C), x.dtype),
        in_specs=[pl.BlockSpec(memory_space=_VMEM)],
        out_specs=pl.BlockSpec(memory_space=_VMEM),
    )(flat)
    out = out.reshape(N, Hp, Wp, C)
    return out[:, 0:stride * (Ho - 1) + 1:stride,
               0:stride * (Wo - 1) + 1:stride, :]


# ------------------- stem conv (7x7 / stride 2) via im2col + fused matmul -------------------

def _extract_patches(x, kh, kw, stride, pad, pad_val=0.0):
    N, H, W, C = x.shape
    if pad:
        x = jnp.pad(x, ((0, 0), (pad, pad), (pad, pad), (0, 0)),
                    constant_values=pad_val)
    Hp, Wp = H + 2 * pad, W + 2 * pad
    Ho = (Hp - kh) // stride + 1
    Wo = (Wp - kw) // stride + 1
    rows = []
    for i in range(kh):
        cols = []
        for j in range(kw):
            sl = jax.lax.slice(
                x, (0, i, j, 0),
                (N, i + stride * (Ho - 1) + 1, j + stride * (Wo - 1) + 1, C),
                (1, stride, stride, 1))
            cols.append(sl)
        rows.append(jnp.stack(cols, axis=3))
    patches = jnp.stack(rows, axis=3)          # (N,Ho,Wo,kh,kw,C)
    return patches, Ho, Wo


def conv2d_im2col(x, w, stride, pad, scale_o=None, bias_o=None):
    # TODO(synk): the stride-2 stem conv still uses im2col (one-off op on a tiny
    # input); a strided tap decomposition would remove the 49x patch blow-up at
    # full image resolution.
    Cout, Cin, kh, kw = w.shape
    patches, Ho, Wo = _extract_patches(x, kh, kw, stride, pad, 0.0)
    Nb = x.shape[0]
    a = patches.reshape(Nb * Ho * Wo, kh * kw * Cin)
    bmat = jnp.transpose(w, (2, 3, 1, 0)).reshape(kh * kw * Cin, Cout)
    out = fused_matmul(a, bmat, scale_o=scale_o, bias_o=bias_o)
    return out.reshape(Nb, Ho, Wo, Cout)


def conv1x1_fused(x, w, scale_a=None, bias_a=None, scale_o=None, bias_o=None):
    N, H, W, C = x.shape
    cout = w.shape[0]
    wmat = jnp.transpose(w[:, :, 0, 0], (1, 0))            # (Cin, Cout)
    y = fused_matmul(x.reshape(N * H * W, C), wmat,
                     scale_a=scale_a, bias_a=bias_a,
                     scale_o=scale_o, bias_o=bias_o)
    return y.reshape(N, H, W, cout)


# ------------------- fused head: norm5 + ReLU + global avg pool + linear -------------------

def _head_kernel(x_ref, s_ref, b_ref, w_ref, fb_ref, o_ref):
    x = jnp.maximum(x_ref[...].astype(jnp.float32) * s_ref[...] + b_ref[...], 0.0)
    pooled = jnp.mean(x, axis=1)                            # (N, C) global avg pool
    o_ref[...] = (jnp.dot(pooled, w_ref[...], preferred_element_type=jnp.float32)
                  + fb_ref[...])


def head_forward(x, bn, fc_w, fc_b):
    N, H, W, C = x.shape
    ncls = fc_w.shape[1]
    ncls_p = _round_up(ncls, 128)                           # lane-dense logits store
    scale, bias = _fold_bn(bn)
    w_p = _pad2d(fc_w.astype(jnp.float32), C, ncls_p)
    b_p = _pad2d(fc_b.reshape(1, ncls).astype(jnp.float32), 1, ncls_p)
    out = pl.pallas_call(
        _head_kernel,
        out_shape=jax.ShapeDtypeStruct((N, ncls_p), jnp.float32),
        in_specs=[pl.BlockSpec(memory_space=_VMEM)] * 5,
        out_specs=pl.BlockSpec(memory_space=_VMEM),
    )(x.reshape(N, H * W, C), scale.reshape(1, 1, C), bias.reshape(1, 1, C),
      w_p, b_p)
    return out[:, :ncls]


# ----------------------------- parameters -----------------------------

def _init_conv(key, cout, cin, kh, kw):
    fan_in = cin * kh * kw
    return jax.random.normal(key, (cout, cin, kh, kw), jnp.float32) * math.sqrt(
        2.0 / fan_in)


def _init_bn(key, c):
    k1, k2, k3, k4 = jax.random.split(key, 4)
    return dict(
        gamma=1.0 + 0.1 * jax.random.normal(k1, (c,), jnp.float32),
        beta=0.1 * jax.random.normal(k2, (c,), jnp.float32),
        mean=0.1 * jax.random.normal(k3, (c,), jnp.float32),
        var=0.5 + jax.random.uniform(k4, (c,), jnp.float32),
    )


def init_densenet_params(key, in_chans=4, init_feat=16, growth=8, bn_size=4,
                         block_config=(2, 2), num_classes=5):
    keys = iter(jax.random.split(key, 256))
    params = {}
    params["conv0"] = _init_conv(next(keys), init_feat, in_chans, 7, 7)
    params["norm0"] = _init_bn(next(keys), init_feat)
    c = init_feat
    blocks = []
    for bi, nlayers in enumerate(block_config):
        layers = []
        for _ in range(nlayers):
            layers.append(dict(
                norm1=_init_bn(next(keys), c),
                conv1=_init_conv(next(keys), bn_size * growth, c, 1, 1),
                norm2=_init_bn(next(keys), bn_size * growth),
                conv2=_init_conv(next(keys), growth, bn_size * growth, 3, 3),
            ))
            c += growth
        block = dict(layers=layers)
        if bi != len(block_config) - 1:
            cout = c // 2
            block["trans_norm"] = _init_bn(next(keys), c)
            block["trans_conv"] = _init_conv(next(keys), cout, c, 1, 1)
            c = cout
        blocks.append(block)
    params["blocks"] = blocks
    params["norm5"] = _init_bn(next(keys), c)
    kw_, kb_ = jax.random.split(next(keys))
    bound = 1.0 / math.sqrt(c)
    params["fc_w"] = jax.random.uniform(kw_, (c, num_classes), jnp.float32,
                                        -bound, bound)
    params["fc_b"] = jax.random.uniform(kb_, (num_classes,), jnp.float32,
                                        -bound, bound)
    return params


# ----------------------------- forward pass -----------------------------

def densenet_forward(params, x_nchw):
    """DenseNet.forward: features -> global_pool('avg') -> flatten -> linear head."""
    x = jnp.transpose(x_nchw, (0, 2, 3, 1)).astype(jnp.bfloat16)  # NCHW -> NHWC, bf16

    # stem: conv0 (7x7/s2) with norm0+ReLU fused as the matmul epilogue, then maxpool.
    s0, b0 = _fold_bn(params["norm0"])
    x = conv2d_im2col(x, params["conv0"], stride=2, pad=3, scale_o=s0, bias_o=b0)
    x = pool2d(x, 3, 2, 1, "max")

    # dense blocks + transitions
    for block in params["blocks"]:
        for layer in block["layers"]:
            s1, b1 = _fold_bn(layer["norm1"])
            s2, b2 = _fold_bn(layer["norm2"])
            # norm1+ReLU fused as prologue, norm2+ReLU fused as epilogue of the 1x1 conv.
            y = conv1x1_fused(x, layer["conv1"], scale_a=s1, bias_a=b1,
                              scale_o=s2, bias_o=b2)
            # 3x3 conv by tap accumulation; zero padding of the already-activated
            # tensor matches PyTorch Conv2d semantics.
            y = conv2d_s1(y, layer["conv2"], pad=1)
            # TODO(synk): fold the concat into the next conv1's K-split
            # (dot([x,y],W)=dot(x,Wx)+dot(y,Wy)); kept as a plain-JAX concat
            # at this block depth.
            x = jnp.concatenate([x, y], axis=-1)
        if "trans_conv" in block:
            st, bt = _fold_bn(block["trans_norm"])
            y = conv1x1_fused(x, block["trans_conv"], scale_a=st, bias_a=bt)
            x = pool2d(y, 2, 2, 0, "avg")

    # features.norm5 (BN+ReLU) + SelectAdaptivePool2d('avg') + flatten + linear w_fc,
    # all in a single fused kernel.
    return head_forward(x, params["norm5"], params["fc_w"], params["fc_b"])
    # TODO(synk): cfg.MODEL.CLS_HEAD == 'norm' (NormSoftmax) and the mish
    # activation conversion are config branches not exercised here.


# ----------------------------- main -----------------------------

if __name__ == "__main__":
    key = jax.random.PRNGKey(0)
    kx, kp = jax.random.split(key)
    # small config consistent with the module: batch=2, INP_CHANNEL=4, 16x16 images
    x = jax.random.normal(kx, (2, 4, 16, 16), jnp.float32)  # NCHW (PyTorch layout)
    params = init_densenet_params(kp, in_chans=4, num_classes=5)

    fwd = jax.jit(densenet_forward)
    out = fwd(params, x)
    jax.block_until_ready(out)
    assert out.shape == (2, 5) and out.dtype == jnp.float32
    print("KERNEL_OK")
</pallas_src>

<mosaic_0001>
module attributes {stable_mosaic.version = 11 : i64} {
  func.func @kernel(%arg0: i32, %arg1: i32, %arg2: i32, %arg3: memref<128x200xbf16, #tpu.memory_space<vmem>>, %arg4: memref<200x128xbf16, #tpu.memory_space<vmem>>, %arg5: memref<1x128xf32, #tpu.memory_space<vmem>>, %arg6: memref<1x128xf32, #tpu.memory_space<vmem>>, %arg7: memref<128x128xbf16, #tpu.memory_space<vmem>>, %arg8: memref<128x128xf32, #tpu.memory_space<vmem>>) attributes {dimension_semantics = [#tpu.dimension_semantics<parallel>, #tpu.dimension_semantics<parallel>, #tpu.dimension_semantics<arbitrary>], iteration_bounds = array<i64: 1, 1, 1>, scalar_prefetch = 0 : i64, scratch_operands = 1 : i64, tpu.core_type = #tpu.core_type<tc>, window_params = [{transform_indices = @transform_0, window_bounds = array<i64: 128, 200>}, {transform_indices = @transform_1, window_bounds = array<i64: 200, 128>}, {transform_indices = @transform_2, window_bounds = array<i64: 1, 128>}, {transform_indices = @transform_3, window_bounds = array<i64: 1, 128>}, {transform_indices = @transform_4, window_bounds = array<i64: 128, 128>}]} {
    %c0_i32 = arith.constant 0 : i32
    %0 = arith.cmpi eq, %arg2, %c0_i32 : i32
    %1 = arith.extui %0 : i1 to i32
    %c0_i32_0 = arith.constant 0 : i32
    %2 = arith.cmpi ne, %1, %c0_i32_0 : i32
    scf.if %2 {
      %cst_10 = arith.constant 0.000000e+00 : f32
      %12 = vector.broadcast %cst_10 : f32 to vector<128x128xf32>
      %c0_11 = arith.constant 0 : index
      %c0_12 = arith.constant 0 : index
      %13 = vector.load %arg8[%c0_11, %c0_12] : memref<128x128xf32, #tpu.memory_space<vmem>>, vector<128x128xf32>
      tpu.vector_store %arg8[%c0_11, %c0_12], %12 {strides = array<i32>} : memref<128x128xf32, #tpu.memory_space<vmem>>, vector<128x128xf32>,
    } else {
    }
    %c0 = arith.constant 0 : index
    %c0_1 = arith.constant 0 : index
    %3 = vector.load %arg3[%c0, %c0_1] : memref<128x200xbf16, #tpu.memory_space<vmem>>, vector<128x200xbf16>
    %c0_2 = arith.constant 0 : index
    %c0_3 = arith.constant 0 : index
    %4 = vector.load %arg8[%c0_2, %c0_3] : memref<128x128xf32, #tpu.memory_space<vmem>>, vector<128x128xf32>
    %c0_4 = arith.constant 0 : index
    %c0_5 = arith.constant 0 : index
    %5 = vector.load %arg4[%c0_4, %c0_5] : memref<200x128xbf16, #tpu.memory_space<vmem>>, vector<200x128xbf16>
    %cst = arith.constant dense<0.000000e+00> : vector<128x128xf32>
    %6 = tpu.matmul %3, %5, %cst {dimension_numbers = #tpu.dot_dimension_numbers<[1], [0], [0], [1], [0, 0, 1, 1], [], []>} : vector<128x200xbf16>, vector<200x128xbf16>, vector<128x128xf32> -> vector<128x128xf32>
    %7 = arith.addf %4, %6 : vector<128x128xf32>
    %c0_6 = arith.constant 0 : index
    %c0_7 = arith.constant 0 : index
    %8 = vector.load %arg8[%c0_6, %c0_7] : memref<128x128xf32, #tpu.memory_space<vmem>>, vector<128x128xf32>
    tpu.vector_store %arg8[%c0_6, %c0_7], %7 {strides = array<i32>} : memref<128x128xf32, #tpu.memory_space<vmem>>, vector<128x128xf32>,
    %c0_i32_8 = arith.constant 0 : i32
    %9 = arith.cmpi eq, %arg2, %c0_i32_8 : i32
    %10 = arith.extui %9 : i1 to i32
    %c0_i32_9 = arith.constant 0 : i32
    %11 = arith.cmpi ne, %10, %c0_i32_9 : i32
    scf.if %11 {
      %c0_10 = arith.constant 0 : index
      %c0_11 = arith.constant 0 : index
      %12 = vector.load %arg8[%c0_10, %c0_11] : memref<128x128xf32, #tpu.memory_space<vmem>>, vector<128x128xf32>
      %c0_12 = arith.constant 0 : index
      %c0_13 = arith.constant 0 : index
      %13 = vector.load %arg5[%c0_12, %c0_13] : memref<1x128xf32, #tpu.memory_space<vmem>>, vector<1x128xf32>
      %14 = vector.broadcast %13 : vector<1x128xf32> to vector<128x128xf32>
      %15 = arith.mulf %12, %14 : vector<128x128xf32>
      %c0_14 = arith.constant 0 : index
      %c0_15 = arith.constant 0 : index
      %16 = vector.load %arg6[%c0_14, %c0_15] : memref<1x128xf32, #tpu.memory_space<vmem>>, vector<1x128xf32>
      %17 = vector.broadcast %16 : vector<1x128xf32> to vector<128x128xf32>
      %18 = arith.addf %15, %17 : vector<128x128xf32>
      %cst_16 = arith.constant 0.000000e+00 : f32
      %19 = vector.broadcast %cst_16 : f32 to vector<128x128xf32>
      %20 = arith.maximumf %18, %19 : vector<128x128xf32>
      %21 = arith.truncf %20 : vector<128x128xf32> to vector<128x128xbf16>
      %c0_17 = arith.constant 0 : index
      %c0_18 = arith.constant 0 : index
      %22 = vector.load %arg7[%c0_17, %c0_18] : memref<128x128xbf16, #tpu.memory_space<vmem>>, vector<128x128xbf16>
      tpu.vector_store %arg7[%c0_17, %c0_18], %21 {strides = array<i32>} : memref<128x128xbf16, #tpu.memory_space<vmem>>, vector<128x128xbf16>,
    } else {
    }
    return
  }
  func.func @transform_0(%arg0: i32, %arg1: i32, %arg2: i32) -> (i32, i32) {
    %c0_i32 = arith.constant 0 : i32
    return %arg0, %arg2 : i32, i32
  }
  func.func @transform_1(%arg0: i32, %arg1: i32, %arg2: i32) -> (i32, i32) {
    %c0_i32 = arith.constant 0 : i32
    return %arg2, %arg1 : i32, i32
  }
  func.func @transform_2(%arg0: i32, %arg1: i32, %arg2: i32) -> (i32, i32) {
    %c0_i32 = arith.constant 0 : i32
    %c0_i32_0 = arith.constant 0 : i32
    return %c0_i32, %arg1 : i32, i32
  }
  func.func @transform_3(%arg0: i32, %arg1: i32, %arg2: i32) -> (i32, i32) {
    %c0_i32 = arith.constant 0 : i32
    %c0_i32_0 = arith.constant 0 : i32
    return %c0_i32, %arg1 : i32, i32
  }
  func.func @transform_4(%arg0: i32, %arg1: i32, %arg2: i32) -> (i32, i32) {
    %c0_i32 = arith.constant 0 : i32
    return %arg0, %arg1 : i32, i32
  }
}

module attributes {stable_mosaic.version = 11 : i64} {
  func.func @kernel(%arg0: memref<222x16xbf16, #tpu.memory_space<vmem>>, %arg1: memref<200x16xbf16, #tpu.memory_space<vmem>>) attributes {dimension_semantics = [], scalar_prefetch = 0 : i64, scratch_operands = 0 : i64, tpu.core_type = #tpu.core_type<tc>} {
    %c0 = arith.constant 0 : index
    %c0_0 = arith.constant 0 : index
    %0 = vector.load %arg0[%c0, %c0_0] : memref<222x16xbf16, #tpu.memory_space<vmem>>, vector<200x16xbf16>
    %c1 = arith.constant 1 : index
    %c0_1 = arith.constant 0 : index
    %1 = vector.load %arg0[%c1, %c0_1] : memref<222x16xbf16, #tpu.memory_space<vmem>>, vector<200x16xbf16>
    %2 = arith.maximumf %0, %1 : vector<200x16xbf16>
    %c2 = arith.constant 2 : index
    %c0_2 = arith.constant 0 : index
    %3 = vector.load %arg0[%c2, %c0_2] : memref<222x16xbf16, #tpu.memory_space<vmem>>, vector<200x16xbf16>
    %4 = arith.maximumf %2, %3 : vector<200x16xbf16>
    %c10 = arith.constant 10 : index
    %c0_3 = arith.constant 0 : index
    %5 = vector.load %arg0[%c10, %c0_3] : memref<222x16xbf16, #tpu.memory_space<vmem>>, vector<200x16xbf16>
    %6 = arith.maximumf %4, %5 : vector<200x16xbf16>
    %c11 = arith.constant 11 : index
    %c0_4 = arith.constant 0 : index
    %7 = vector.load %arg0[%c11, %c0_4] : memref<222x16xbf16, #tpu.memory_space<vmem>>, vector<200x16xbf16>
    %8 = arith.maximumf %6, %7 : vector<200x16xbf16>
    %c12 = arith.constant 12 : index
    %c0_5 = arith.constant 0 : index
    %9 = vector.load %arg0[%c12, %c0_5] : memref<222x16xbf16, #tpu.memory_space<vmem>>, vector<200x16xbf16>
    %10 = arith.maximumf %8, %9 : vector<200x16xbf16>
    %c20 = arith.constant 20 : index
    %c0_6 = arith.constant 0 : index
    %11 = vector.load %arg0[%c20, %c0_6] : memref<222x16xbf16, #tpu.memory_space<vmem>>, vector<200x16xbf16>
    %12 = arith.maximumf %10, %11 : vector<200x16xbf16>
    %c21 = arith.constant 21 : index
    %c0_7 = arith.constant 0 : index
    %13 = vector.load %arg0[%c21, %c0_7] : memref<222x16xbf16, #tpu.memory_space<vmem>>, vector<200x16xbf16>
    %14 = arith.maximumf %12, %13 : vector<200x16xbf16>
    %c22 = arith.constant 22 : index
    %c0_8 = arith.constant 0 : index
    %15 = vector.load %arg0[%c22, %c0_8] : memref<222x16xbf16, #tpu.memory_space<vmem>>, vector<200x16xbf16>
    %16 = arith.maximumf %14, %15 : vector<200x16xbf16>
    %c0_9 = arith.constant 0 : index
    %c0_10 = arith.constant 0 : index
    %17 = vector.load %arg1[%c0_9, %c0_10] : memref<200x16xbf16, #tpu.memory_space<vmem>>, vector<200x16xbf16>
    tpu.vector_store %arg1[%c0_9, %c0_10], %16 {strides = array<i32>} : memref<200x16xbf16, #tpu.memory_space<vmem>>, vector<200x16xbf16>,
    return
  }
}

module attributes {stable_mosaic.version = 11 : i64} {
  func.func @kernel(%arg0: i32, %arg1: i32, %arg2: i32, %arg3: memref<32x16xbf16, #tpu.memory_space<vmem>>, %arg4: memref<16x128xbf16, #tpu.memory_space<vmem>>, %arg5: memref<1x16xf32, #tpu.memory_space<vmem>>, %arg6: memref<1x16xf32, #tpu.memory_space<vmem>>, %arg7: memref<1x128xf32, #tpu.memory_space<vmem>>, %arg8: memref<1x128xf32, #tpu.memory_space<vmem>>, %arg9: memref<32x128xbf16, #tpu.memory_space<vmem>>, %arg10: memref<32x128xf32, #tpu.memory_space<vmem>>) attributes {dimension_semantics = [#tpu.dimension_semantics<parallel>, #tpu.dimension_semantics<parallel>, #tpu.dimension_semantics<arbitrary>], iteration_bounds = array<i64: 1, 1, 1>, scalar_prefetch = 0 : i64, scratch_operands = 1 : i64, tpu.core_type = #tpu.core_type<tc>, window_params = [{transform_indices = @transform_0, window_bounds = array<i64: 32, 16>}, {transform_indices = @transform_1, window_bounds = array<i64: 16, 128>}, {transform_indices = @transform_2, window_bounds = array<i64: 1, 16>}, {transform_indices = @transform_3, window_bounds = array<i64: 1, 16>}, {transform_indices = @transform_4, window_bounds = array<i64: 1, 128>}, {transform_indices = @transform_5, window_bounds = array<i64: 1, 128>}, {transform_indices = @transform_6, window_bounds = array<i64: 32, 128>}]} {
    %c0_i32 = arith.constant 0 : i32
    %0 = arith.cmpi eq, %arg2, %c0_i32 : i32
    %1 = arith.extui %0 : i1 to i32
    %c0_i32_0 = arith.constant 0 : i32
    %2 = arith.cmpi ne, %1, %c0_i32_0 : i32
    scf.if %2 {
      %cst_15 = arith.constant 0.000000e+00 : f32
      %22 = vector.broadcast %cst_15 : f32 to vector<32x128xf32>
      %c0_16 = arith.constant 0 : index
      %c0_17 = arith.constant 0 : index
      %23 = vector.load %arg10[%c0_16, %c0_17] : memref<32x128xf32, #tpu.memory_space<vmem>>, vector<32x128xf32>
      tpu.vector_store %arg10[%c0_16, %c0_17], %22 {strides = array<i32>} : memref<32x128xf32, #tpu.memory_space<vmem>>, vector<32x128xf32>,
    } else {
    }
    %c0 = arith.constant 0 : index
    %c0_1 = arith.constant 0 : index
    %3 = vector.load %arg3[%c0, %c0_1] : memref<32x16xbf16, #tpu.memory_space<vmem>>, vector<32x16xbf16>
    %4 = arith.extf %3 : vector<32x16xbf16> to vector<32x16xf32>
    %c0_2 = arith.constant 0 : index
    %c0_3 = arith.constant 0 : index
    %5 = vector.load %arg5[%c0_2, %c0_3] : memref<1x16xf32, #tpu.memory_space<vmem>>, vector<1x16xf32>
    %6 = vector.broadcast %5 : vector<1x16xf32> to vector<32x16xf32>
    %7 = arith.mulf %4, %6 : vector<32x16xf32>
    %c0_4 = arith.constant 0 : index
    %c0_5 = arith.constant 0 : index
    %8 = vector.load %arg6[%c0_4, %c0_5] : memref<1x16xf32, #tpu.memory_space<vmem>>, vector<1x16xf32>
    %9 = vector.broadcast %8 : vector<1x16xf32> to vector<32x16xf32>
    %10 = arith.addf %7, %9 : vector<32x16xf32>
    %cst = arith.constant 0.000000e+00 : f32
    %11 = vector.broadcast %cst : f32 to vector<32x16xf32>
    %12 = arith.maximumf %10, %11 : vector<32x16xf32>
    %13 = arith.truncf %12 : vector<32x16xf32> to vector<32x16xbf16>
    %c0_6 = arith.constant 0 : index
    %c0_7 = arith.constant 0 : index
    %14 = vector.load %arg10[%c0_6, %c0_7] : memref<32x128xf32, #tpu.memory_space<vmem>>, vector<32x128xf32>
    %c0_8 = arith.constant 0 : index
    %c0_9 = arith.constant 0 : index
    %15 = vector.load %arg4[%c0_8, %c0_9] : memref<16x128xbf16, #tpu.memory_space<vmem>>, vector<16x128xbf16>
    %cst_10 = arith.constant dense<0.000000e+00> : vector<32x128xf32>
    %16 = tpu.matmul %13, %15, %cst_10 {dimension_numbers = #tpu.dot_dimension_numbers<[1], [0], [0], [1], [0, 0, 1, 1], [], []>} : vector<32x16xbf16>, vector<16x128xbf16>, vector<32x128xf32> -> vector<32x128xf32>
    %17 = arith.addf %14, %16 : vector<32x128xf32>
    %c0_11 = arith.constant 0 : index
    %c0_12 = arith.constant 0 : index
    %18 = vector.load %arg10[%c0_11, %c0_12] : memref<32x128xf32, #tpu.memory_space<vmem>>, vector<32x128xf32>
    tpu.vector_store %arg10[%c0_11, %c0_12], %17 {strides = array<i32>} : memref<32x128xf32, #tpu.memory_space<vmem>>, vector<32x128xf32>,
    %c0_i32_13 = arith.constant 0 : i32
    %19 = arith.cmpi eq, %arg2, %c0_i32_13 : i32
    %20 = arith.extui %19 : i1 to i32
    %c0_i32_14 = arith.constant 0 : i32
    %21 = arith.cmpi ne, %20, %c0_i32_14 : i32
    scf.if %21 {
      %c0_15 = arith.constant 0 : index
      %c0_16 = arith.constant 0 : index
      %22 = vector.load %arg10[%c0_15, %c0_16] : memref<32x128xf32, #tpu.memory_space<vmem>>, vector<32x128xf32>
      %c0_17 = arith.constant 0 : index
      %c0_18 = arith.constant 0 : index
      %23 = vector.load %arg7[%c0_17, %c0_18] : memref<1x128xf32, #tpu.memory_space<vmem>>, vector<1x128xf32>
      %24 = vector.broadcast %23 : vector<1x128xf32> to vector<32x128xf32>
      %25 = arith.mulf %22, %24 : vector<32x128xf32>
      %c0_19 = arith.constant 0 : index
      %c0_20 = arith.constant 0 : index
      %26 = vector.load %arg8[%c0_19, %c0_20] : memref<1x128xf32, #tpu.memory_space<vmem>>, vector<1x128xf32>
      %27 = vector.broadcast %26 : vector<1x128xf32> to vector<32x128xf32>
      %28 = arith.addf %25, %27 : vector<32x128xf32>
      %cst_21 = arith.constant 0.000000e+00 : f32
      %29 = vector.broadcast %cst_21 : f32 to vector<32x128xf32>
      %30 = arith.maximumf %28, %29 : vector<32x128xf32>
      %31 = arith.truncf %30 : vector<32x128xf32> to vector<32x128xbf16>
      %c0_22 = arith.constant 0 : index
      %c0_23 = arith.constant 0 : index
      %32 = vector.load %arg9[%c0_22, %c0_23] : memref<32x128xbf16, #tpu.memory_space<vmem>>, vector<32x128xbf16>
      tpu.vector_store %arg9[%c0_22, %c0_23], %31 {strides = array<i32>} : memref<32x128xbf16, #tpu.memory_space<vmem>>, vector<32x128xbf16>,
    } else {
    }
    return
  }
  func.func @transform_0(%arg0: i32, %arg1: i32, %arg2: i32) -> (i32, i32) {
    %c0_i32 = arith.constant 0 : i32
    return %arg0, %arg2 : i32, i32
  }
  func.func @transform_1(%arg0: i32, %arg1: i32, %arg2: i32) -> (i32, i32) {
    %c0_i32 = arith.constant 0 : i32
    return %arg2, %arg1 : i32, i32
  }
  func.func @transform_2(%arg0: i32, %arg1: i32, %arg2: i32) -> (i32, i32) {
    %c0_i32 = arith.constant 0 : i32
    %c0_i32_0 = arith.constant 0 : i32
    return %c0_i32, %arg2 : i32, i32
  }
  func.func @transform_3(%arg0: i32, %arg1: i32, %arg2: i32) -> (i32, i32) {
    %c0_i32 = arith.constant 0 : i32
    %c0_i32_0 = arith.constant 0 : i32
    return %c0_i32, %arg2 : i32, i32
  }
  func.func @transform_4(%arg0: i32, %arg1: i32, %arg2: i32) -> (i32, i32) {
    %c0_i32 = arith.constant 0 : i32
    %c0_i32_0 = arith.constant 0 : i32
    return %c0_i32, %arg1 : i32, i32
  }
  func.func @transform_5(%arg0: i32, %arg1: i32, %arg2: i32) -> (i32, i32) {
    %c0_i32 = arith.constant 0 : i32
    %c0_i32_0 = arith.constant 0 : i32
    return %c0_i32, %arg1 : i32, i32
  }
  func.func @transform_6(%arg0: i32, %arg1: i32, %arg2: i32) -> (i32, i32) {
    %c0_i32 = arith.constant 0 : i32
    return %arg0, %arg1 : i32, i32
  }
}

module attributes {stable_mosaic.version = 11 : i64} {
  func.func @kernel(%arg0: memref<86x32xbf16, #tpu.memory_space<vmem>>, %arg1: memref<9x32x128xbf16, #tpu.memory_space<vmem>>, %arg2: memref<72x128xbf16, #tpu.memory_space<vmem>>) attributes {dimension_semantics = [], scalar_prefetch = 0 : i64, scratch_operands = 0 : i64, tpu.core_type = #tpu.core_type<tc>} {
    %c0 = arith.constant 0 : index
    %c0_0 = arith.constant 0 : index
    %0 = vector.load %arg0[%c0, %c0_0] : memref<86x32xbf16, #tpu.memory_space<vmem>>, vector<72x32xbf16>
    %c0_1 = arith.constant 0 : index
    %c0_2 = arith.constant 0 : index
    %c0_3 = arith.constant 0 : index
    %1 = vector.load %arg1[%c0_1, %c0_2, %c0_3] : memref<9x32x128xbf16, #tpu.memory_space<vmem>>, vector<1x32x128xbf16>
    %2 = vector.shape_cast %1 : vector<1x32x128xbf16> to vector<32x128xbf16>
    %cst = arith.constant dense<0.000000e+00> : vector<72x128xf32>
    %3 = tpu.matmul %0, %2, %cst {dimension_numbers = #tpu.dot_dimension_numbers<[1], [0], [0], [1], [0, 0, 1, 1], [], []>} : vector<72x32xbf16>, vector<32x128xbf16>, vector<72x128xf32> -> vector<72x128xf32>
    %c1 = arith.constant 1 : index
    %c0_4 = arith.constant 0 : index
    %4 = vector.load %arg0[%c1, %c0_4] : memref<86x32xbf16, #tpu.memory_space<vmem>>, vector<72x32xbf16>
    %c1_5 = arith.constant 1 : index
    %c0_6 = arith.constant 0 : index
    %c0_7 = arith.constant 0 : index
    %5 = vector.load %arg1[%c1_5, %c0_6, %c0_7] : memref<9x32x128xbf16, #tpu.memory_space<vmem>>, vector<1x32x128xbf16>
    %6 = vector.shape_cast %5 : vector<1x32x128xbf16> to vector<32x128xbf16>
    %cst_8 = arith.constant dense<0.000000e+00> : vector<72x128xf32>
    %7 = tpu.matmul %4, %6, %cst_8 {dimension_numbers = #tpu.dot_dimension_numbers<[1], [0], [0], [1], [0, 0, 1, 1], [], []>} : vector<72x32xbf16>, vector<32x128xbf16>, vector<72x128xf32> -> vector<72x128xf32>
    %8 = arith.addf %3, %7 : vector<72x128xf32>
    %c2 = arith.constant 2 : index
    %c0_9 = arith.constant 0 : index
    %9 = vector.load %arg0[%c2, %c0_9] : memref<86x32xbf16, #tpu.memory_space<vmem>>, vector<72x32xbf16>
    %c2_10 = arith.constant 2 : index
    %c0_11 = arith.constant 0 : index
    %c0_12 = arith.constant 0 : index
    %10 = vector.load %arg1[%c2_10, %c0_11, %c0_12] : memref<9x32x128xbf16, #tpu.memory_space<vmem>>, vector<1x32x128xbf16>
    %11 = vector.shape_cast %10 : vector<1x32x128xbf16> to vector<32x128xbf16>
    %cst_13 = arith.constant dense<0.000000e+00> : vector<72x128xf32>
    %12 = tpu.matmul %9, %11, %cst_13 {dimension_numbers = #tpu.dot_dimension_numbers<[1], [0], [0], [1], [0, 0, 1, 1], [], []>} : vector<72x32xbf16>, vector<32x128xbf16>, vector<72x128xf32> -> vector<72x128xf32>
    %13 = arith.addf %8, %12 : vector<72x128xf32>
    %c6 = arith.constant 6 : index
    %c0_14 = arith.constant 0 : index
    %14 = vector.load %arg0[%c6, %c0_14] : memref<86x32xbf16, #tpu.memory_space<vmem>>, vector<72x32xbf16>
    %c3 = arith.constant 3 : index
    %c0_15 = arith.constant 0 : index
    %c0_16 = arith.constant 0 : index
    %15 = vector.load %arg1[%c3, %c0_15, %c0_16] : memref<9x32x128xbf16, #tpu.memory_space<vmem>>, vector<1x32x128xbf16>
    %16 = vector.shape_cast %15 : vector<1x32x128xbf16> to vector<32x128xbf16>
    %cst_17 = arith.constant dense<0.000000e+00> : vector<72x128xf32>
    %17 = tpu.matmul %14, %16, %cst_17 {dimension_numbers = #tpu.dot_dimension_numbers<[1], [0], [0], [1], [0, 0, 1, 1], [], []>} : vector<72x32xbf16>, vector<32x128xbf16>, vector<72x128xf32> -> vector<72x128xf32>
    %18 = arith.addf %13, %17 : vector<72x128xf32>
    %c7 = arith.constant 7 : index
    %c0_18 = arith.constant 0 : index
    %19 = vector.load %arg0[%c7, %c0_18] : memref<86x32xbf16, #tpu.memory_space<vmem>>, vector<72x32xbf16>
    %c4 = arith.constant 4 : index
    %c0_19 = arith.constant 0 : index
    %c0_20 = arith.constant 0 : index
    %20 = vector.load %arg1[%c4, %c0_19, %c0_20] : memref<9x32x128xbf16, #tpu.memory_space<vmem>>, vector<1x32x128xbf16>
    %21 = vector.shape_cast %20 : vector<1x32x128xbf16> to vector<32x128xbf16>
    %cst_21 = arith.constant dense<0.000000e+00> : vector<72x128xf32>
    %22 = tpu.matmul %19, %21, %cst_21 {dimension_numbers = #tpu.dot_dimension_numbers<[1], [0], [0], [1], [0, 0, 1, 1], [], []>} : vector<72x32xbf16>, vector<32x128xbf16>, vector<72x128xf32> -> vector<72x128xf32>
    %23 = arith.addf %18, %22 : vector<72x128xf32>
    %c8 = arith.constant 8 : index
    %c0_22 = arith.constant 0 : index
    %24 = vector.load %arg0[%c8, %c0_22] : memref<86x32xbf16, #tpu.memory_space<vmem>>, vector<72x32xbf16>
    %c5 = arith.constant 5 : index
    %c0_23 = arith.constant 0 : index
    %c0_24 = arith.constant 0 : index
    %25 = vector.load %arg1[%c5, %c0_23, %c0_24] : memref<9x32x128xbf16, #tpu.memory_space<vmem>>, vector<1x32x128xbf16>
    %26 = vector.shape_cast %25 : vector<1x32x128xbf16> to vector<32x128xbf16>
    %cst_25 = arith.constant dense<0.000000e+00> : vector<72x128xf32>
    %27 = tpu.matmul %24, %26, %cst_25 {dimension_numbers = #tpu.dot_dimension_numbers<[1], [0], [0], [1], [0, 0, 1, 1], [], []>} : vector<72x32xbf16>, vector<32x128xbf16>, vector<72x128xf32> -> vector<72x128xf32>
    %28 = arith.addf %23, %27 : vector<72x128xf32>
    %c12 = arith.constant 12 : index
    %c0_26 = arith.constant 0 : index
    %29 = vector.load %arg0[%c12, %c0_26] : memref<86x32xbf16, #tpu.memory_space<vmem>>, vector<72x32xbf16>
    %c6_27 = arith.constant 6 : index
    %c0_28 = arith.constant 0 : index
    %c0_29 = arith.constant 0 : index
    %30 = vector.load %arg1[%c6_27, %c0_28, %c0_29] : memref<9x32x128xbf16, #tpu.memory_space<vmem>>, vector<1x32x128xbf16>
    %31 = vector.shape_cast %30 : vector<1x32x128xbf16> to vector<32x128xbf16>
    %cst_30 = arith.constant dense<0.000000e+00> : vector<72x128xf32>
    %32 = tpu.matmul %29, %31, %cst_30 {dimension_numbers = #tpu.dot_dimension_numbers<[1], [0], [0], [1], [0, 0, 1, 1], [], []>} : vector<72x32xbf16>, vector<32x128xbf16>, vector<72x128xf32> -> vector<72x128xf32>
    %33 = arith.addf %28, %32 : vector<72x128xf32>
    %c13 = arith.constant 13 : index
    %c0_31 = arith.constant 0 : index
    %34 = vector.load %arg0[%c13, %c0_31] : memref<86x32xbf16, #tpu.memory_space<vmem>>, vector<72x32xbf16>
    %c7_32 = arith.constant 7 : index
    %c0_33 = arith.constant 0 : index
    %c0_34 = arith.constant 0 : index
    %35 = vector.load %arg1[%c7_32, %c0_33, %c0_34] : memref<9x32x128xbf16, #tpu.memory_space<vmem>>, vector<1x32x128xbf16>
    %36 = vector.shape_cast %35 : vector<1x32x128xbf16> to vector<32x128xbf16>
    %cst_35 = arith.constant dense<0.000000e+00> : vector<72x128xf32>
    %37 = tpu.matmul %34, %36, %cst_35 {dimension_numbers = #tpu.dot_dimension_numbers<[1], [0], [0], [1], [0, 0, 1, 1], [], []>} : vector<72x32xbf16>, vector<32x128xbf16>, vector<72x128xf32> -> vector<72x128xf32>
    %38 = arith.addf %33, %37 : vector<72x128xf32>
    %c14 = arith.constant 14 : index
    %c0_36 = arith.constant 0 : index
    %39 = vector.load %arg0[%c14, %c0_36] : memref<86x32xbf16, #tpu.memory_space<vmem>>, vector<72x32xbf16>
    %c8_37 = arith.constant 8 : index
    %c0_38 = arith.constant 0 : index
    %c0_39 = arith.constant 0 : index
    %40 = vector.load %arg1[%c8_37, %c0_38, %c0_39] : memref<9x32x128xbf16, #tpu.memory_space<vmem>>, vector<1x32x128xbf16>
    %41 = vector.shape_cast %40 : vector<1x32x128xbf16> to vector<32x128xbf16>
    %cst_40 = arith.constant dense<0.000000e+00> : vector<72x128xf32>
    %42 = tpu.matmul %39, %41, %cst_40 {dimension_numbers = #tpu.dot_dimension_numbers<[1], [0], [0], [1], [0, 0, 1, 1], [], []>} : vector<72x32xbf16>, vector<32x128xbf16>, vector<72x128xf32> -> vector<72x128xf32>
    %43 = arith.addf %38, %42 : vector<72x128xf32>
    %44 = arith.truncf %43 : vector<72x128xf32> to vector<72x128xbf16>
    %c0_41 = arith.constant 0 : index
    %c0_42 = arith.constant 0 : index
    %45 = vector.load %arg2[%c0_41, %c0_42] : memref<72x128xbf16, #tpu.memory_space<vmem>>, vector<72x128xbf16>
    tpu.vector_store %arg2[%c0_41, %c0_42], %44 {strides = array<i32>} : memref<72x128xbf16, #tpu.memory_space<vmem>>, vector<72x128xbf16>,
    return
  }
}

module attributes {stable_mosaic.version = 11 : i64} {
  func.func @kernel(%arg0: i32, %arg1: i32, %arg2: i32, %arg3: memref<32x24xbf16, #tpu.memory_space<vmem>>, %arg4: memref<24x128xbf16, #tpu.memory_space<vmem>>, %arg5: memref<1x24xf32, #tpu.memory_space<vmem>>, %arg6: memref<1x24xf32, #tpu.memory_space<vmem>>, %arg7: memref<1x128xf32, #tpu.memory_space<vmem>>, %arg8: memref<1x128xf32, #tpu.memory_space<vmem>>, %arg9: memref<32x128xbf16, #tpu.memory_space<vmem>>, %arg10: memref<32x128xf32, #tpu.memory_space<vmem>>) attributes {dimension_semantics = [#tpu.dimension_semantics<parallel>, #tpu.dimension_semantics<parallel>, #tpu.dimension_semantics<arbitrary>], iteration_bounds = array<i64: 1, 1, 1>, scalar_prefetch = 0 : i64, scratch_operands = 1 : i64, tpu.core_type = #tpu.core_type<tc>, window_params = [{transform_indices = @transform_0, window_bounds = array<i64: 32, 24>}, {transform_indices = @transform_1, window_bounds = array<i64: 24, 128>}, {transform_indices = @transform_2, window_bounds = array<i64: 1, 24>}, {transform_indices = @transform_3, window_bounds = array<i64: 1, 24>}, {transform_indices = @transform_4, window_bounds = array<i64: 1, 128>}, {transform_indices = @transform_5, window_bounds = array<i64: 1, 128>}, {transform_indices = @transform_6, window_bounds = array<i64: 32, 128>}]} {
    %c0_i32 = arith.constant 0 : i32
    %0 = arith.cmpi eq, %arg2, %c0_i32 : i32
    %1 = arith.extui %0 : i1 to i32
    %c0_i32_0 = arith.constant 0 : i32
    %2 = arith.cmpi ne, %1, %c0_i32_0 : i32
    scf.if %2 {
      %cst_15 = arith.constant 0.000000e+00 : f32
      %22 = vector.broadcast %cst_15 : f32 to vector<32x128xf32>
      %c0_16 = arith.constant 0 : index
      %c0_17 = arith.constant 0 : index
      %23 = vector.load %arg10[%c0_16, %c0_17] : memref<32x128xf32, #tpu.memory_space<vmem>>, vector<32x128xf32>
      tpu.vector_store %arg10[%c0_16, %c0_17], %22 {strides = array<i32>} : memref<32x128xf32, #tpu.memory_space<vmem>>, vector<32x128xf32>,
    } else {
    }
    %c0 = arith.constant 0 : index
    %c0_1 = arith.constant 0 : index
    %3 = vector.load %arg3[%c0, %c0_1] : memref<32x24xbf16, #tpu.memory_space<vmem>>, vector<32x24xbf16>
    %4 = arith.extf %3 : vector<32x24xbf16> to vector<32x24xf32>
    %c0_2 = arith.constant 0 : index
    %c0_3 = arith.constant 0 : index
    %5 = vector.load %arg5[%c0_2, %c0_3] : memref<1x24xf32, #tpu.memory_space<vmem>>, vector<1x24xf32>
    %6 = vector.broadcast %5 : vector<1x24xf32> to vector<32x24xf32>
    %7 = arith.mulf %4, %6 : vector<32x24xf32>
    %c0_4 = arith.constant 0 : index
    %c0_5 = arith.constant 0 : index
    %8 = vector.load %arg6[%c0_4, %c0_5] : memref<1x24xf32, #tpu.memory_space<vmem>>, vector<1x24xf32>
    %9 = vector.broadcast %8 : vector<1x24xf32> to vector<32x24xf32>
    %10 = arith.addf %7, %9 : vector<32x24xf32>
    %cst = arith.constant 0.000000e+00 : f32
    %11 = vector.broadcast %cst : f32 to vector<32x24xf32>
    %12 = arith.maximumf %10, %11 : vector<32x24xf32>
    %13 = arith.truncf %12 : vector<32x24xf32> to vector<32x24xbf16>
    %c0_6 = arith.constant 0 : index
    %c0_7 = arith.constant 0 : index
    %14 = vector.load %arg10[%c0_6, %c0_7] : memref<32x128xf32, #tpu.memory_space<vmem>>, vector<32x128xf32>
    %c0_8 = arith.constant 0 : index
    %c0_9 = arith.constant 0 : index
    %15 = vector.load %arg4[%c0_8, %c0_9] : memref<24x128xbf16, #tpu.memory_space<vmem>>, vector<24x128xbf16>
    %cst_10 = arith.constant dense<0.000000e+00> : vector<32x128xf32>
    %16 = tpu.matmul %13, %15, %cst_10 {dimension_numbers = #tpu.dot_dimension_numbers<[1], [0], [0], [1], [0, 0, 1, 1], [], []>} : vector<32x24xbf16>, vector<24x128xbf16>, vector<32x128xf32> -> vector<32x128xf32>
    %17 = arith.addf %14, %16 : vector<32x128xf32>
    %c0_11 = arith.constant 0 : index
    %c0_12 = arith.constant 0 : index
    %18 = vector.load %arg10[%c0_11, %c0_12] : memref<32x128xf32, #tpu.memory_space<vmem>>, vector<32x128xf32>
    tpu.vector_store %arg10[%c0_11, %c0_12], %17 {strides = array<i32>} : memref<32x128xf32, #tpu.memory_space<vmem>>, vector<32x128xf32>,
    %c0_i32_13 = arith.constant 0 : i32
    %19 = arith.cmpi eq, %arg2, %c0_i32_13 : i32
    %20 = arith.extui %19 : i1 to i32
    %c0_i32_14 = arith.constant 0 : i32
    %21 = arith.cmpi ne, %20, %c0_i32_14 : i32
    scf.if %21 {
      %c0_15 = arith.constant 0 : index
      %c0_16 = arith.constant 0 : index
      %22 = vector.load %arg10[%c0_15, %c0_16] : memref<32x128xf32, #tpu.memory_space<vmem>>, vector<32x128xf32>
      %c0_17 = arith.constant 0 : index
      %c0_18 = arith.constant 0 : index
      %23 = vector.load %arg7[%c0_17, %c0_18] : memref<1x128xf32, #tpu.memory_space<vmem>>, vector<1x128xf32>
      %24 = vector.broadcast %23 : vector<1x128xf32> to vector<32x128xf32>
      %25 = arith.mulf %22, %24 : vector<32x128xf32>
      %c0_19 = arith.constant 0 : index
      %c0_20 = arith.constant 0 : index
      %26 = vector.load %arg8[%c0_19, %c0_20] : memref<1x128xf32, #tpu.memory_space<vmem>>, vector<1x128xf32>
      %27 = vector.broadcast %26 : vector<1x128xf32> to vector<32x128xf32>
      %28 = arith.addf %25, %27 : vector<32x128xf32>
      %cst_21 = arith.constant 0.000000e+00 : f32
      %29 = vector.broadcast %cst_21 : f32 to vector<32x128xf32>
      %30 = arith.maximumf %28, %29 : vector<32x128xf32>
      %31 = arith.truncf %30 : vector<32x128xf32> to vector<32x128xbf16>
      %c0_22 = arith.constant 0 : index
      %c0_23 = arith.constant 0 : index
      %32 = vector.load %arg9[%c0_22, %c0_23] : memref<32x128xbf16, #tpu.memory_space<vmem>>, vector<32x128xbf16>
      tpu.vector_store %arg9[%c0_22, %c0_23], %31 {strides = array<i32>} : memref<32x128xbf16, #tpu.memory_space<vmem>>, vector<32x128xbf16>,
    } else {
    }
    return
  }
  func.func @transform_0(%arg0: i32, %arg1: i32, %arg2: i32) -> (i32, i32) {
    %c0_i32 = arith.constant 0 : i32
    return %arg0, %arg2 : i32, i32
  }
  func.func @transform_1(%arg0: i32, %arg1: i32, %arg2: i32) -> (i32, i32) {
    %c0_i32 = arith.constant 0 : i32
    return %arg2, %arg1 : i32, i32
  }
  func.func @transform_2(%arg0: i32, %arg1: i32, %arg2: i32) -> (i32, i32) {
    %c0_i32 = arith.constant 0 : i32
    %c0_i32_0 = arith.constant 0 : i32
    return %c0_i32, %arg2 : i32, i32
  }
  func.func @transform_3(%arg0: i32, %arg1: i32, %arg2: i32) -> (i32, i32) {
    %c0_i32 = arith.constant 0 : i32
    %c0_i32_0 = arith.constant 0 : i32
    return %c0_i32, %arg2 : i32, i32
  }
  func.func @transform_4(%arg0: i32, %arg1: i32, %arg2: i32) -> (i32, i32) {
    %c0_i32 = arith.constant 0 : i32
    %c0_i32_0 = arith.constant 0 : i32
    return %c0_i32, %arg1 : i32, i32
  }
  func.func @transform_5(%arg0: i32, %arg1: i32, %arg2: i32) -> (i32, i32) {
    %c0_i32 = arith.constant 0 : i32
    %c0_i32_0 = arith.constant 0 : i32
    return %c0_i32, %arg1 : i32, i32
  }
  func.func @transform_6(%arg0: i32, %arg1: i32, %arg2: i32) -> (i32, i32) {
    %c0_i32 = arith.constant 0 : i32
    return %arg0, %arg1 : i32, i32
  }
}

module attributes {stable_mosaic.version = 11 : i64} {
  func.func @kernel(%arg0: i32, %arg1: i32, %arg2: i32, %arg3: memref<32x32xbf16, #tpu.memory_space<vmem>>, %arg4: memref<32x128xbf16, #tpu.memory_space<vmem>>, %arg5: memref<1x32xf32, #tpu.memory_space<vmem>>, %arg6: memref<1x32xf32, #tpu.memory_space<vmem>>, %arg7: memref<32x128xbf16, #tpu.memory_space<vmem>>, %arg8: memref<32x128xf32, #tpu.memory_space<vmem>>) attributes {dimension_semantics = [#tpu.dimension_semantics<parallel>, #tpu.dimension_semantics<parallel>, #tpu.dimension_semantics<arbitrary>], iteration_bounds = array<i64: 1, 1, 1>, scalar_prefetch = 0 : i64, scratch_operands = 1 : i64, tpu.core_type = #tpu.core_type<tc>, window_params = [{transform_indices = @transform_0, window_bounds = array<i64: 32, 32>}, {transform_indices = @transform_1, window_bounds = array<i64: 32, 128>}, {transform_indices = @transform_2, window_bounds = array<i64: 1, 32>}, {transform_indices = @transform_3, window_bounds = array<i64: 1, 32>}, {transform_indices = @transform_4, window_bounds = array<i64: 32, 128>}]} {
    %c0_i32 = arith.constant 0 : i32
    %0 = arith.cmpi eq, %arg2, %c0_i32 : i32
    %1 = arith.extui %0 : i1 to i32
    %c0_i32_0 = arith.constant 0 : i32
    %2 = arith.cmpi ne, %1, %c0_i32_0 : i32
    scf.if %2 {
      %cst_15 = arith.constant 0.000000e+00 : f32
      %22 = vector.broadcast %cst_15 : f32 to vector<32x128xf32>
      %c0_16 = arith.constant 0 : index
      %c0_17 = arith.constant 0 : index
      %23 = vector.load %arg8[%c0_16, %c0_17] : memref<32x128xf32, #tpu.memory_space<vmem>>, vector<32x128xf32>
      tpu.vector_store %arg8[%c0_16, %c0_17], %22 {strides = array<i32>} : memref<32x128xf32, #tpu.memory_space<vmem>>, vector<32x128xf32>,
    } else {
    }
    %c0 = arith.constant 0 : index
    %c0_1 = arith.constant 0 : index
    %3 = vector.load %arg3[%c0, %c0_1] : memref<32x32xbf16, #tpu.memory_space<vmem>>, vector<32x32xbf16>
    %4 = arith.extf %3 : vector<32x32xbf16> to vector<32x32xf32>
    %c0_2 = arith.constant 0 : index
    %c0_3 = arith.constant 0 : index
    %5 = vector.load %arg5[%c0_2, %c0_3] : memref<1x32xf32, #tpu.memory_space<vmem>>, vector<1x32xf32>
    %6 = vector.broadcast %5 : vector<1x32xf32> to vector<32x32xf32>
    %7 = arith.mulf %4, %6 : vector<32x32xf32>
    %c0_4 = arith.constant 0 : index
    %c0_5 = arith.constant 0 : index
    %8 = vector.load %arg6[%c0_4, %c0_5] : memref<1x32xf32, #tpu.memory_space<vmem>>, vector<1x32xf32>
    %9 = vector.broadcast %8 : vector<1x32xf32> to vector<32x32xf32>
    %10 = arith.addf %7, %9 : vector<32x32xf32>
    %cst = arith.constant 0.000000e+00 : f32
    %11 = vector.broadcast %cst : f32 to vector<32x32xf32>
    %12 = arith.maximumf %10, %11 : vector<32x32xf32>
    %13 = arith.truncf %12 : vector<32x32xf32> to vector<32x32xbf16>
    %c0_6 = arith.constant 0 : index
    %c0_7 = arith.constant 0 : index
    %14 = vector.load %arg8[%c0_6, %c0_7] : memref<32x128xf32, #tpu.memory_space<vmem>>, vector<32x128xf32>
    %c0_8 = arith.constant 0 : index
    %c0_9 = arith.constant 0 : index
    %15 = vector.load %arg4[%c0_8, %c0_9] : memref<32x128xbf16, #tpu.memory_space<vmem>>, vector<32x128xbf16>
    %cst_10 = arith.constant dense<0.000000e+00> : vector<32x128xf32>
    %16 = tpu.matmul %13, %15, %cst_10 {dimension_numbers = #tpu.dot_dimension_numbers<[1], [0], [0], [1], [0, 0, 1, 1], [], []>} : vector<32x32xbf16>, vector<32x128xbf16>, vector<32x128xf32> -> vector<32x128xf32>
    %17 = arith.addf %14, %16 : vector<32x128xf32>
    %c0_11 = arith.constant 0 : index
    %c0_12 = arith.constant 0 : index
    %18 = vector.load %arg8[%c0_11, %c0_12] : memref<32x128xf32, #tpu.memory_space<vmem>>, vector<32x128xf32>
    tpu.vector_store %arg8[%c0_11, %c0_12], %17 {strides = array<i32>} : memref<32x128xf32, #tpu.memory_space<vmem>>, vector<32x128xf32>,
    %c0_i32_13 = arith.constant 0 : i32
    %19 = arith.cmpi eq, %arg2, %c0_i32_13 : i32
    %20 = arith.extui %19 : i1 to i32
    %c0_i32_14 = arith.constant 0 : i32
    %21 = arith.cmpi ne, %20, %c0_i32_14 : i32
    scf.if %21 {
      %c0_15 = arith.constant 0 : index
      %c0_16 = arith.constant 0 : index
      %22 = vector.load %arg8[%c0_15, %c0_16] : memref<32x128xf32, #tpu.memory_space<vmem>>, vector<32x128xf32>
      %23 = arith.truncf %22 : vector<32x128xf32> to vector<32x128xbf16>
      %c0_17 = arith.constant 0 : index
      %c0_18 = arith.constant 0 : index
      %24 = vector.load %arg7[%c0_17, %c0_18] : memref<32x128xbf16, #tpu.memory_space<vmem>>, vector<32x128xbf16>
      tpu.vector_store %arg7[%c0_17, %c0_18], %23 {strides = array<i32>} : memref<32x128xbf16, #tpu.memory_space<vmem>>, vector<32x128xbf16>,
    } else {
    }
    return
  }
  func.func @transform_0(%arg0: i32, %arg1: i32, %arg2: i32) -> (i32, i32) {
    %c0_i32 = arith.constant 0 : i32
    return %arg0, %arg2 : i32, i32
  }
  func.func @transform_1(%arg0: i32, %arg1: i32, %arg2: i32) -> (i32, i32) {
    %c0_i32 = arith.constant 0 : i32
    return %arg2, %arg1 : i32, i32
  }
  func.func @transform_2(%arg0: i32, %arg1: i32, %arg2: i32) -> (i32, i32) {
    %c0_i32 = arith.constant 0 : i32
    %c0_i32_0 = arith.constant 0 : i32
    return %c0_i32, %arg2 : i32, i32
  }
  func.func @transform_3(%arg0: i32, %arg1: i32, %arg2: i32) -> (i32, i32) {
    %c0_i32 = arith.constant 0 : i32
    %c0_i32_0 = arith.constant 0 : i32
    return %c0_i32, %arg2 : i32, i32
  }
  func.func @transform_4(%arg0: i32, %arg1: i32, %arg2: i32) -> (i32, i32) {
    %c0_i32 = arith.constant 0 : i32
    return %arg0, %arg1 : i32, i32
  }
}

module attributes {stable_mosaic.version = 11 : i64} {
  func.func @kernel(%arg0: memref<37x16xbf16, #tpu.memory_space<vmem>>, %arg1: memref<32x16xbf16, #tpu.memory_space<vmem>>) attributes {dimension_semantics = [], scalar_prefetch = 0 : i64, scratch_operands = 0 : i64, tpu.core_type = #tpu.core_type<tc>} {
    %c0 = arith.constant 0 : index
    %c0_0 = arith.constant 0 : index
    %0 = vector.load %arg0[%c0, %c0_0] : memref<37x16xbf16, #tpu.memory_space<vmem>>, vector<32x16xbf16>
    %1 = arith.extf %0 : vector<32x16xbf16> to vector<32x16xf32>
    %c1 = arith.constant 1 : index
    %c0_1 = arith.constant 0 : index
    %2 = vector.load %arg0[%c1, %c0_1] : memref<37x16xbf16, #tpu.memory_space<vmem>>, vector<32x16xbf16>
    %3 = arith.extf %2 : vector<32x16xbf16> to vector<32x16xf32>
    %4 = arith.addf %1, %3 : vector<32x16xf32>
    %c4 = arith.constant 4 : index
    %c0_2 = arith.constant 0 : index
    %5 = vector.load %arg0[%c4, %c0_2] : memref<37x16xbf16, #tpu.memory_space<vmem>>, vector<32x16xbf16>
    %6 = arith.extf %5 : vector<32x16xbf16> to vector<32x16xf32>
    %7 = arith.addf %4, %6 : vector<32x16xf32>
    %c5 = arith.constant 5 : index
    %c0_3 = arith.constant 0 : index
    %8 = vector.load %arg0[%c5, %c0_3] : memref<37x16xbf16, #tpu.memory_space<vmem>>, vector<32x16xbf16>
    %9 = arith.extf %8 : vector<32x16xbf16> to vector<32x16xf32>
    %10 = arith.addf %7, %9 : vector<32x16xf32>
    %cst = arith.constant 2.500000e-01 : f32
    %11 = vector.broadcast %cst : f32 to vector<32x16xf32>
    %12 = arith.mulf %10, %11 : vector<32x16xf32>
    %13 = arith.truncf %12 : vector<32x16xf32> to vector<32x16xbf16>
    %c0_4 = arith.constant 0 : index
    %c0_5 = arith.constant 0 : index
    %14 = vector.load %arg1[%c0_4, %c0_5] : memref<32x16xbf16, #tpu.memory_space<vmem>>, vector<32x16xbf16>
    tpu.vector_store %arg1[%c0_4, %c0_5], %13 {strides = array<i32>} : memref<32x16xbf16, #tpu.memory_space<vmem>>, vector<32x16xbf16>,
    return
  }
}

module attributes {stable_mosaic.version = 11 : i64} {
  func.func @kernel(%arg0: i32, %arg1: i32, %arg2: i32, %arg3: memref<8x16xbf16, #tpu.memory_space<vmem>>, %arg4: memref<16x128xbf16, #tpu.memory_space<vmem>>, %arg5: memref<1x16xf32, #tpu.memory_space<vmem>>, %arg6: memref<1x16xf32, #tpu.memory_space<vmem>>, %arg7: memref<1x128xf32, #tpu.memory_space<vmem>>, %arg8: memref<1x128xf32, #tpu.memory_space<vmem>>, %arg9: memref<8x128xbf16, #tpu.memory_space<vmem>>, %arg10: memref<8x128xf32, #tpu.memory_space<vmem>>) attributes {dimension_semantics = [#tpu.dimension_semantics<parallel>, #tpu.dimension_semantics<parallel>, #tpu.dimension_semantics<arbitrary>], iteration_bounds = array<i64: 1, 1, 1>, scalar_prefetch = 0 : i64, scratch_operands = 1 : i64, tpu.core_type = #tpu.core_type<tc>, window_params = [{transform_indices = @transform_0, window_bounds = array<i64: 8, 16>}, {transform_indices = @transform_1, window_bounds = array<i64: 16, 128>}, {transform_indices = @transform_2, window_bounds = array<i64: 1, 16>}, {transform_indices = @transform_3, window_bounds = array<i64: 1, 16>}, {transform_indices = @transform_4, window_bounds = array<i64: 1, 128>}, {transform_indices = @transform_5, window_bounds = array<i64: 1, 128>}, {transform_indices = @transform_6, window_bounds = array<i64: 8, 128>}]} {
    %c0_i32 = arith.constant 0 : i32
    %0 = arith.cmpi eq, %arg2, %c0_i32 : i32
    %1 = arith.extui %0 : i1 to i32
    %c0_i32_0 = arith.constant 0 : i32
    %2 = arith.cmpi ne, %1, %c0_i32_0 : i32
    scf.if %2 {
      %cst_15 = arith.constant 0.000000e+00 : f32
      %22 = vector.broadcast %cst_15 : f32 to vector<8x128xf32>
      %c0_16 = arith.constant 0 : index
      %c0_17 = arith.constant 0 : index
      %23 = vector.load %arg10[%c0_16, %c0_17] : memref<8x128xf32, #tpu.memory_space<vmem>>, vector<8x128xf32>
      tpu.vector_store %arg10[%c0_16, %c0_17], %22 {strides = array<i32>} : memref<8x128xf32, #tpu.memory_space<vmem>>, vector<8x128xf32>,
    } else {
    }
    %c0 = arith.constant 0 : index
    %c0_1 = arith.constant 0 : index
    %3 = vector.load %arg3[%c0, %c0_1] : memref<8x16xbf16, #tpu.memory_space<vmem>>, vector<8x16xbf16>
    %4 = arith.extf %3 : vector<8x16xbf16> to vector<8x16xf32>
    %c0_2 = arith.constant 0 : index
    %c0_3 = arith.constant 0 : index
    %5 = vector.load %arg5[%c0_2, %c0_3] : memref<1x16xf32, #tpu.memory_space<vmem>>, vector<1x16xf32>
    %6 = vector.broadcast %5 : vector<1x16xf32> to vector<8x16xf32>
    %7 = arith.mulf %4, %6 : vector<8x16xf32>
    %c0_4 = arith.constant 0 : index
    %c0_5 = arith.constant 0 : index
    %8 = vector.load %arg6[%c0_4, %c0_5] : memref<1x16xf32, #tpu.memory_space<vmem>>, vector<1x16xf32>
    %9 = vector.broadcast %8 : vector<1x16xf32> to vector<8x16xf32>
    %10 = arith.addf %7, %9 : vector<8x16xf32>
    %cst = arith.constant 0.000000e+00 : f32
    %11 = vector.broadcast %cst : f32 to vector<8x16xf32>
    %12 = arith.maximumf %10, %11 : vector<8x16xf32>
    %13 = arith.truncf %12 : vector<8x16xf32> to vector<8x16xbf16>
    %c0_6 = arith.constant 0 : index
    %c0_7 = arith.constant 0 : index
    %14 = vector.load %arg10[%c0_6, %c0_7] : memref<8x128xf32, #tpu.memory_space<vmem>>, vector<8x128xf32>
    %c0_8 = arith.constant 0 : index
    %c0_9 = arith.constant 0 : index
    %15 = vector.load %arg4[%c0_8, %c0_9] : memref<16x128xbf16, #tpu.memory_space<vmem>>, vector<16x128xbf16>
    %cst_10 = arith.constant dense<0.000000e+00> : vector<8x128xf32>
    %16 = tpu.matmul %13, %15, %cst_10 {dimension_numbers = #tpu.dot_dimension_numbers<[1], [0], [0], [1], [0, 0, 1, 1], [], []>} : vector<8x16xbf16>, vector<16x128xbf16>, vector<8x128xf32> -> vector<8x128xf32>
    %17 = arith.addf %14, %16 : vector<8x128xf32>
    %c0_11 = arith.constant 0 : index
    %c0_12 = arith.constant 0 : index
    %18 = vector.load %arg10[%c0_11, %c0_12] : memref<8x128xf32, #tpu.memory_space<vmem>>, vector<8x128xf32>
    tpu.vector_store %arg10[%c0_11, %c0_12], %17 {strides = array<i32>} : memref<8x128xf32, #tpu.memory_space<vmem>>, vector<8x128xf32>,
    %c0_i32_13 = arith.constant 0 : i32
    %19 = arith.cmpi eq, %arg2, %c0_i32_13 : i32
    %20 = arith.extui %19 : i1 to i32
    %c0_i32_14 = arith.constant 0 : i32
    %21 = arith.cmpi ne, %20, %c0_i32_14 : i32
    scf.if %21 {
      %c0_15 = arith.constant 0 : index
      %c0_16 = arith.constant 0 : index
      %22 = vector.load %arg10[%c0_15, %c0_16] : memref<8x128xf32, #tpu.memory_space<vmem>>, vector<8x128xf32>
      %c0_17 = arith.constant 0 : index
      %c0_18 = arith.constant 0 : index
      %23 = vector.load %arg7[%c0_17, %c0_18] : memref<1x128xf32, #tpu.memory_space<vmem>>, vector<1x128xf32>
      %24 = vector.broadcast %23 : vector<1x128xf32> to vector<8x128xf32>
      %25 = arith.mulf %22, %24 : vector<8x128xf32>
      %c0_19 = arith.constant 0 : index
      %c0_20 = arith.constant 0 : index
      %26 = vector.load %arg8[%c0_19, %c0_20] : memref<1x128xf32, #tpu.memory_space<vmem>>, vector<1x128xf32>
      %27 = vector.broadcast %26 : vector<1x128xf32> to vector<8x128xf32>
      %28 = arith.addf %25, %27 : vector<8x128xf32>
      %cst_21 = arith.constant 0.000000e+00 : f32
      %29 = vector.broadcast %cst_21 : f32 to vector<8x128xf32>
      %30 = arith.maximumf %28, %29 : vector<8x128xf32>
      %31 = arith.truncf %30 : vector<8x128xf32> to vector<8x128xbf16>
      %c0_22 = arith.constant 0 : index
      %c0_23 = arith.constant 0 : index
      %32 = vector.load %arg9[%c0_22, %c0_23] : memref<8x128xbf16, #tpu.memory_space<vmem>>, vector<8x128xbf16>
      tpu.vector_store %arg9[%c0_22, %c0_23], %31 {strides = array<i32>} : memref<8x128xbf16, #tpu.memory_space<vmem>>, vector<8x128xbf16>,
    } else {
    }
    return
  }
  func.func @transform_0(%arg0: i32, %arg1: i32, %arg2: i32) -> (i32, i32) {
    %c0_i32 = arith.constant 0 : i32
    return %arg0, %arg2 : i32, i32
  }
  func.func @transform_1(%arg0: i32, %arg1: i32, %arg2: i32) -> (i32, i32) {
    %c0_i32 = arith.constant 0 : i32
    return %arg2, %arg1 : i32, i32
  }
  func.func @transform_2(%arg0: i32, %arg1: i32, %arg2: i32) -> (i32, i32) {
    %c0_i32 = arith.constant 0 : i32
    %c0_i32_0 = arith.constant 0 : i32
    return %c0_i32, %arg2 : i32, i32
  }
  func.func @transform_3(%arg0: i32, %arg1: i32, %arg2: i32) -> (i32, i32) {
    %c0_i32 = arith.constant 0 : i32
    %c0_i32_0 = arith.constant 0 : i32
    return %c0_i32, %arg2 : i32, i32
  }
  func.func @transform_4(%arg0: i32, %arg1: i32, %arg2: i32) -> (i32, i32) {
    %c0_i32 = arith.constant 0 : i32
    %c0_i32_0 = arith.constant 0 : i32
    return %c0_i32, %arg1 : i32, i32
  }
  func.func @transform_5(%arg0: i32, %arg1: i32, %arg2: i32) -> (i32, i32) {
    %c0_i32 = arith.constant 0 : i32
    %c0_i32_0 = arith.constant 0 : i32
    return %c0_i32, %arg1 : i32, i32
  }
  func.func @transform_6(%arg0: i32, %arg1: i32, %arg2: i32) -> (i32, i32) {
    %c0_i32 = arith.constant 0 : i32
    return %arg0, %arg1 : i32, i32
  }
}

module attributes {stable_mosaic.version = 11 : i64} {
  func.func @kernel(%arg0: memref<42x32xbf16, #tpu.memory_space<vmem>>, %arg1: memref<9x32x128xbf16, #tpu.memory_space<vmem>>, %arg2: memref<32x128xbf16, #tpu.memory_space<vmem>>) attributes {dimension_semantics = [], scalar_prefetch = 0 : i64, scratch_operands = 0 : i64, tpu.core_type = #tpu.core_type<tc>} {
    %c0 = arith.constant 0 : index
    %c0_0 = arith.constant 0 : index
    %0 = vector.load %arg0[%c0, %c0_0] : memref<42x32xbf16, #tpu.memory_space<vmem>>, vector<32x32xbf16>
    %c0_1 = arith.constant 0 : index
    %c0_2 = arith.constant 0 : index
    %c0_3 = arith.constant 0 : index
    %1 = vector.load %arg1[%c0_1, %c0_2, %c0_3] : memref<9x32x128xbf16, #tpu.memory_space<vmem>>, vector<1x32x128xbf16>
    %2 = vector.shape_cast %1 : vector<1x32x128xbf16> to vector<32x128xbf16>
    %cst = arith.constant dense<0.000000e+00> : vector<32x128xf32>
    %3 = tpu.matmul %0, %2, %cst {dimension_numbers = #tpu.dot_dimension_numbers<[1], [0], [0], [1], [0, 0, 1, 1], [], []>} : vector<32x32xbf16>, vector<32x128xbf16>, vector<32x128xf32> -> vector<32x128xf32>
    %c1 = arith.constant 1 : index
    %c0_4 = arith.constant 0 : index
    %4 = vector.load %arg0[%c1, %c0_4] : memref<42x32xbf16, #tpu.memory_space<vmem>>, vector<32x32xbf16>
    %c1_5 = arith.constant 1 : index
    %c0_6 = arith.constant 0 : index
    %c0_7 = arith.constant 0 : index
    %5 = vector.load %arg1[%c1_5, %c0_6, %c0_7] : memref<9x32x128xbf16, #tpu.memory_space<vmem>>, vector<1x32x128xbf16>
    %6 = vector.shape_cast %5 : vector<1x32x128xbf16> to vector<32x128xbf16>
    %cst_8 = arith.constant dense<0.000000e+00> : vector<32x128xf32>
    %7 = tpu.matmul %4, %6, %cst_8 {dimension_numbers = #tpu.dot_dimension_numbers<[1], [0], [0], [1], [0, 0, 1, 1], [], []>} : vector<32x32xbf16>, vector<32x128xbf16>, vector<32x128xf32> -> vector<32x128xf32>
    %8 = arith.addf %3, %7 : vector<32x128xf32>
    %c2 = arith.constant 2 : index
    %c0_9 = arith.constant 0 : index
    %9 = vector.load %arg0[%c2, %c0_9] : memref<42x32xbf16, #tpu.memory_space<vmem>>, vector<32x32xbf16>
    %c2_10 = arith.constant 2 : index
    %c0_11 = arith.constant 0 : index
    %c0_12 = arith.constant 0 : index
    %10 = vector.load %arg1[%c2_10, %c0_11, %c0_12] : memref<9x32x128xbf16, #tpu.memory_space<vmem>>, vector<1x32x128xbf16>
    %11 = vector.shape_cast %10 : vector<1x32x128xbf16> to vector<32x128xbf16>
    %cst_13 = arith.constant dense<0.000000e+00> : vector<32x128xf32>
    %12 = tpu.matmul %9, %11, %cst_13 {dimension_numbers = #tpu.dot_dimension_numbers<[1], [0], [0], [1], [0, 0, 1, 1], [], []>} : vector<32x32xbf16>, vector<32x128xbf16>, vector<32x128xf32> -> vector<32x128xf32>
    %13 = arith.addf %8, %12 : vector<32x128xf32>
    %c4 = arith.constant 4 : index
    %c0_14 = arith.constant 0 : index
    %14 = vector.load %arg0[%c4, %c0_14] : memref<42x32xbf16, #tpu.memory_space<vmem>>, vector<32x32xbf16>
    %c3 = arith.constant 3 : index
    %c0_15 = arith.constant 0 : index
    %c0_16 = arith.constant 0 : index
    %15 = vector.load %arg1[%c3, %c0_15, %c0_16] : memref<9x32x128xbf16, #tpu.memory_space<vmem>>, vector<1x32x128xbf16>
    %16 = vector.shape_cast %15 : vector<1x32x128xbf16> to vector<32x128xbf16>
    %cst_17 = arith.constant dense<0.000000e+00> : vector<32x128xf32>
    %17 = tpu.matmul %14, %16, %cst_17 {dimension_numbers = #tpu.dot_dimension_numbers<[1], [0], [0], [1], [0, 0, 1, 1], [], []>} : vector<32x32xbf16>, vector<32x128xbf16>, vector<32x128xf32> -> vector<32x128xf32>
    %18 = arith.addf %13, %17 : vector<32x128xf32>
    %c5 = arith.constant 5 : index
    %c0_18 = arith.constant 0 : index
    %19 = vector.load %arg0[%c5, %c0_18] : memref<42x32xbf16, #tpu.memory_space<vmem>>, vector<32x32xbf16>
    %c4_19 = arith.constant 4 : index
    %c0_20 = arith.constant 0 : index
    %c0_21 = arith.constant 0 : index
    %20 = vector.load %arg1[%c4_19, %c0_20, %c0_21] : memref<9x32x128xbf16, #tpu.memory_space<vmem>>, vector<1x32x128xbf16>
    %21 = vector.shape_cast %20 : vector<1x32x128xbf16> to vector<32x128xbf16>
    %cst_22 = arith.constant dense<0.000000e+00> : vector<32x128xf32>
    %22 = tpu.matmul %19, %21, %cst_22 {dimension_numbers = #tpu.dot_dimension_numbers<[1], [0], [0], [1], [0, 0, 1, 1], [], []>} : vector<32x32xbf16>, vector<32x128xbf16>, vector<32x128xf32> -> vector<32x128xf32>
    %23 = arith.addf %18, %22 : vector<32x128xf32>
    %c6 = arith.constant 6 : index
    %c0_23 = arith.constant 0 : index
    %24 = vector.load %arg0[%c6, %c0_23] : memref<42x32xbf16, #tpu.memory_space<vmem>>, vector<32x32xbf16>
    %c5_24 = arith.constant 5 : index
    %c0_25 = arith.constant 0 : index
    %c0_26 = arith.constant 0 : index
    %25 = vector.load %arg1[%c5_24, %c0_25, %c0_26] : memref<9x32x128xbf16, #tpu.memory_space<vmem>>, vector<1x32x128xbf16>
    %26 = vector.shape_cast %25 : vector<1x32x128xbf16> to vector<32x128xbf16>
    %cst_27 = arith.constant dense<0.000000e+00> : vector<32x128xf32>
    %27 = tpu.matmul %24, %26, %cst_27 {dimension_numbers = #tpu.dot_dimension_numbers<[1], [0], [0], [1], [0, 0, 1, 1], [], []>} : vector<32x32xbf16>, vector<32x128xbf16>, vector<32x128xf32> -> vector<32x128xf32>
    %28 = arith.addf %23, %27 : vector<32x128xf32>
    %c8 = arith.constant 8 : index
    %c0_28 = arith.constant 0 : index
    %29 = vector.load %arg0[%c8, %c0_28] : memref<42x32xbf16, #tpu.memory_space<vmem>>, vector<32x32xbf16>
    %c6_29 = arith.constant 6 : index
    %c0_30 = arith.constant 0 : index
    %c0_31 = arith.constant 0 : index
    %30 = vector.load %arg1[%c6_29, %c0_30, %c0_31] : memref<9x32x128xbf16, #tpu.memory_space<vmem>>, vector<1x32x128xbf16>
    %31 = vector.shape_cast %30 : vector<1x32x128xbf16> to vector<32x128xbf16>
    %cst_32 = arith.constant dense<0.000000e+00> : vector<32x128xf32>
    %32 = tpu.matmul %29, %31, %cst_32 {dimension_numbers = #tpu.dot_dimension_numbers<[1], [0], [0], [1], [0, 0, 1, 1], [], []>} : vector<32x32xbf16>, vector<32x128xbf16>, vector<32x128xf32> -> vector<32x128xf32>
    %33 = arith.addf %28, %32 : vector<32x128xf32>
    %c9 = arith.constant 9 : index
    %c0_33 = arith.constant 0 : index
    %34 = vector.load %arg0[%c9, %c0_33] : memref<42x32xbf16, #tpu.memory_space<vmem>>, vector<32x32xbf16>
    %c7 = arith.constant 7 : index
    %c0_34 = arith.constant 0 : index
    %c0_35 = arith.constant 0 : index
    %35 = vector.load %arg1[%c7, %c0_34, %c0_35] : memref<9x32x128xbf16, #tpu.memory_space<vmem>>, vector<1x32x128xbf16>
    %36 = vector.shape_cast %35 : vector<1x32x128xbf16> to vector<32x128xbf16>
    %cst_36 = arith.constant dense<0.000000e+00> : vector<32x128xf32>
    %37 = tpu.matmul %34, %36, %cst_36 {dimension_numbers = #tpu.dot_dimension_numbers<[1], [0], [0], [1], [0, 0, 1, 1], [], []>} : vector<32x32xbf16>, vector<32x128xbf16>, vector<32x128xf32> -> vector<32x128xf32>
    %38 = arith.addf %33, %37 : vector<32x128xf32>
    %c10 = arith.constant 10 : index
    %c0_37 = arith.constant 0 : index
    %39 = vector.load %arg0[%c10, %c0_37] : memref<42x32xbf16, #tpu.memory_space<vmem>>, vector<32x32xbf16>
    %c8_38 = arith.constant 8 : index
    %c0_39 = arith.constant 0 : index
    %c0_40 = arith.constant 0 : index
    %40 = vector.load %arg1[%c8_38, %c0_39, %c0_40] : memref<9x32x128xbf16, #tpu.memory_space<vmem>>, vector<1x32x128xbf16>
    %41 = vector.shape_cast %40 : vector<1x32x128xbf16> to vector<32x128xbf16>
    %cst_41 = arith.constant dense<0.000000e+00> : vector<32x128xf32>
    %42 = tpu.matmul %39, %41, %cst_41 {dimension_numbers = #tpu.dot_dimension_numbers<[1], [0], [0], [1], [0, 0, 1, 1], [], []>} : vector<32x32xbf16>, vector<32x128xbf16>, vector<32x128xf32> -> vector<32x128xf32>
    %43 = arith.addf %38, %42 : vector<32x128xf32>
    %44 = arith.truncf %43 : vector<32x128xf32> to vector<32x128xbf16>
    %c0_42 = arith.constant 0 : index
    %c0_43 = arith.constant 0 : index
    %45 = vector.load %arg2[%c0_42, %c0_43] : memref<32x128xbf16, #tpu.memory_space<vmem>>, vector<32x128xbf16>
    tpu.vector_store %arg2[%c0_42, %c0_43], %44 {strides = array<i32>} : memref<32x128xbf16, #tpu.memory_space<vmem>>, vector<32x128xbf16>,
    return
  }
}

module attributes {stable_mosaic.version = 11 : i64} {
  func.func @kernel(%arg0: i32, %arg1: i32, %arg2: i32, %arg3: memref<8x24xbf16, #tpu.memory_space<vmem>>, %arg4: memref<24x128xbf16, #tpu.memory_space<vmem>>, %arg5: memref<1x24xf32, #tpu.memory_space<vmem>>, %arg6: memref<1x24xf32, #tpu.memory_space<vmem>>, %arg7: memref<1x128xf32, #tpu.memory_space<vmem>>, %arg8: memref<1x128xf32, #tpu.memory_space<vmem>>, %arg9: memref<8x128xbf16, #tpu.memory_space<vmem>>, %arg10: memref<8x128xf32, #tpu.memory_space<vmem>>) attributes {dimension_semantics = [#tpu.dimension_semantics<parallel>, #tpu.dimension_semantics<parallel>, #tpu.dimension_semantics<arbitrary>], iteration_bounds = array<i64: 1, 1, 1>, scalar_prefetch = 0 : i64, scratch_operands = 1 : i64, tpu.core_type = #tpu.core_type<tc>, window_params = [{transform_indices = @transform_0, window_bounds = array<i64: 8, 24>}, {transform_indices = @transform_1, window_bounds = array<i64: 24, 128>}, {transform_indices = @transform_2, window_bounds = array<i64: 1, 24>}, {transform_indices = @transform_3, window_bounds = array<i64: 1, 24>}, {transform_indices = @transform_4, window_bounds = array<i64: 1, 128>}, {transform_indices = @transform_5, window_bounds = array<i64: 1, 128>}, {transform_indices = @transform_6, window_bounds = array<i64: 8, 128>}]} {
    %c0_i32 = arith.constant 0 : i32
    %0 = arith.cmpi eq, %arg2, %c0_i32 : i32
    %1 = arith.extui %0 : i1 to i32
    %c0_i32_0 = arith.constant 0 : i32
    %2 = arith.cmpi ne, %1, %c0_i32_0 : i32
    scf.if %2 {
      %cst_15 = arith.constant 0.000000e+00 : f32
      %22 = vector.broadcast %cst_15 : f32 to vector<8x128xf32>
      %c0_16 = arith.constant 0 : index
      %c0_17 = arith.constant 0 : index
      %23 = vector.load %arg10[%c0_16, %c0_17] : memref<8x128xf32, #tpu.memory_space<vmem>>, vector<8x128xf32>
      tpu.vector_store %arg10[%c0_16, %c0_17], %22 {strides = array<i32>} : memref<8x128xf32, #tpu.memory_space<vmem>>, vector<8x128xf32>,
    } else {
    }
    %c0 = arith.constant 0 : index
    %c0_1 = arith.constant 0 : index
    %3 = vector.load %arg3[%c0, %c0_1] : memref<8x24xbf16, #tpu.memory_space<vmem>>, vector<8x24xbf16>
    %4 = arith.extf %3 : vector<8x24xbf16> to vector<8x24xf32>
    %c0_2 = arith.constant 0 : index
    %c0_3 = arith.constant 0 : index
    %5 = vector.load %arg5[%c0_2, %c0_3] : memref<1x24xf32, #tpu.memory_space<vmem>>, vector<1x24xf32>
    %6 = vector.broadcast %5 : vector<1x24xf32> to vector<8x24xf32>
    %7 = arith.mulf %4, %6 : vector<8x24xf32>
    %c0_4 = arith.constant 0 : index
    %c0_5 = arith.constant 0 : index
    %8 = vector.load %arg6[%c0_4, %c0_5] : memref<1x24xf32, #tpu.memory_space<vmem>>, vector<1x24xf32>
    %9 = vector.broadcast %8 : vector<1x24xf32> to vector<8x24xf32>
    %10 = arith.addf %7, %9 : vector<8x24xf32>
    %cst = arith.constant 0.000000e+00 : f32
    %11 = vector.broadcast %cst : f32 to vector<8x24xf32>
    %12 = arith.maximumf %10, %11 : vector<8x24xf32>
    %13 = arith.truncf %12 : vector<8x24xf32> to vector<8x24xbf16>
    %c0_6 = arith.constant 0 : index
    %c0_7 = arith.constant 0 : index
    %14 = vector.load %arg10[%c0_6, %c0_7] : memref<8x128xf32, #tpu.memory_space<vmem>>, vector<8x128xf32>
    %c0_8 = arith.constant 0 : index
    %c0_9 = arith.constant 0 : index
    %15 = vector.load %arg4[%c0_8, %c0_9] : memref<24x128xbf16, #tpu.memory_space<vmem>>, vector<24x128xbf16>
    %cst_10 = arith.constant dense<0.000000e+00> : vector<8x128xf32>
    %16 = tpu.matmul %13, %15, %cst_10 {dimension_numbers = #tpu.dot_dimension_numbers<[1], [0], [0], [1], [0, 0, 1, 1], [], []>} : vector<8x24xbf16>, vector<24x128xbf16>, vector<8x128xf32> -> vector<8x128xf32>
    %17 = arith.addf %14, %16 : vector<8x128xf32>
    %c0_11 = arith.constant 0 : index
    %c0_12 = arith.constant 0 : index
    %18 = vector.load %arg10[%c0_11, %c0_12] : memref<8x128xf32, #tpu.memory_space<vmem>>, vector<8x128xf32>
    tpu.vector_store %arg10[%c0_11, %c0_12], %17 {strides = array<i32>} : memref<8x128xf32, #tpu.memory_space<vmem>>, vector<8x128xf32>,
    %c0_i32_13 = arith.constant 0 : i32
    %19 = arith.cmpi eq, %arg2, %c0_i32_13 : i32
    %20 = arith.extui %19 : i1 to i32
    %c0_i32_14 = arith.constant 0 : i32
    %21 = arith.cmpi ne, %20, %c0_i32_14 : i32
    scf.if %21 {
      %c0_15 = arith.constant 0 : index
      %c0_16 = arith.constant 0 : index
      %22 = vector.load %arg10[%c0_15, %c0_16] : memref<8x128xf32, #tpu.memory_space<vmem>>, vector<8x128xf32>
      %c0_17 = arith.constant 0 : index
      %c0_18 = arith.constant 0 : index
      %23 = vector.load %arg7[%c0_17, %c0_18] : memref<1x128xf32, #tpu.memory_space<vmem>>, vector<1x128xf32>
      %24 = vector.broadcast %23 : vector<1x128xf32> to vector<8x128xf32>
      %25 = arith.mulf %22, %24 : vector<8x128xf32>
      %c0_19 = arith.constant 0 : index
      %c0_20 = arith.constant 0 : index
      %26 = vector.load %arg8[%c0_19, %c0_20] : memref<1x128xf32, #tpu.memory_space<vmem>>, vector<1x128xf32>
      %27 = vector.broadcast %26 : vector<1x128xf32> to vector<8x128xf32>
      %28 = arith.addf %25, %27 : vector<8x128xf32>
      %cst_21 = arith.constant 0.000000e+00 : f32
      %29 = vector.broadcast %cst_21 : f32 to vector<8x128xf32>
      %30 = arith.maximumf %28, %29 : vector<8x128xf32>
      %31 = arith.truncf %30 : vector<8x128xf32> to vector<8x128xbf16>
      %c0_22 = arith.constant 0 : index
      %c0_23 = arith.constant 0 : index
      %32 = vector.load %arg9[%c0_22, %c0_23] : memref<8x128xbf16, #tpu.memory_space<vmem>>, vector<8x128xbf16>
      tpu.vector_store %arg9[%c0_22, %c0_23], %31 {strides = array<i32>} : memref<8x128xbf16, #tpu.memory_space<vmem>>, vector<8x128xbf16>,
    } else {
    }
    return
  }
  func.func @transform_0(%arg0: i32, %arg1: i32, %arg2: i32) -> (i32, i32) {
    %c0_i32 = arith.constant 0 : i32
    return %arg0, %arg2 : i32, i32
  }
  func.func @transform_1(%arg0: i32, %arg1: i32, %arg2: i32) -> (i32, i32) {
    %c0_i32 = arith.constant 0 : i32
    return %arg2, %arg1 : i32, i32
  }
  func.func @transform_2(%arg0: i32, %arg1: i32, %arg2: i32) -> (i32, i32) {
    %c0_i32 = arith.constant 0 : i32
    %c0_i32_0 = arith.constant 0 : i32
    return %c0_i32, %arg2 : i32, i32
  }
  func.func @transform_3(%arg0: i32, %arg1: i32, %arg2: i32) -> (i32, i32) {
    %c0_i32 = arith.constant 0 : i32
    %c0_i32_0 = arith.constant 0 : i32
    return %c0_i32, %arg2 : i32, i32
  }
  func.func @transform_4(%arg0: i32, %arg1: i32, %arg2: i32) -> (i32, i32) {
    %c0_i32 = arith.constant 0 : i32
    %c0_i32_0 = arith.constant 0 : i32
    return %c0_i32, %arg1 : i32, i32
  }
  func.func @transform_5(%arg0: i32, %arg1: i32, %arg2: i32) -> (i32, i32) {
    %c0_i32 = arith.constant 0 : i32
    %c0_i32_0 = arith.constant 0 : i32
    return %c0_i32, %arg1 : i32, i32
  }
  func.func @transform_6(%arg0: i32, %arg1: i32, %arg2: i32) -> (i32, i32) {
    %c0_i32 = arith.constant 0 : i32
    return %arg0, %arg1 : i32, i32
  }
}

module attributes {stable_mosaic.version = 11 : i64} {
  func.func @_head_kernel(%arg0: memref<2x4x32xbf16, #tpu.memory_space<vmem>>, %arg1: memref<1x1x32xf32, #tpu.memory_space<vmem>>, %arg2: memref<1x1x32xf32, #tpu.memory_space<vmem>>, %arg3: memref<32x128xf32, #tpu.memory_space<vmem>>, %arg4: memref<1x128xf32, #tpu.memory_space<vmem>>, %arg5: memref<2x128xf32, #tpu.memory_space<vmem>>) attributes {dimension_semantics = [], scalar_prefetch = 0 : i64, scratch_operands = 0 : i64, tpu.core_type = #tpu.core_type<tc>} {
    %c0 = arith.constant 0 : index
    %c0_0 = arith.constant 0 : index
    %c0_1 = arith.constant 0 : index
    %0 = vector.load %arg0[%c0, %c0_0, %c0_1] : memref<2x4x32xbf16, #tpu.memory_space<vmem>>, vector<2x4x32xbf16>
    %1 = arith.extf %0 : vector<2x4x32xbf16> to vector<2x4x32xf32>
    %c0_2 = arith.constant 0 : index
    %c0_3 = arith.constant 0 : index
    %c0_4 = arith.constant 0 : index
    %2 = vector.load %arg1[%c0_2, %c0_3, %c0_4] : memref<1x1x32xf32, #tpu.memory_space<vmem>>, vector<1x1x32xf32>
    %3 = vector.broadcast %2 : vector<1x1x32xf32> to vector<2x4x32xf32>
    %4 = arith.mulf %1, %3 : vector<2x4x32xf32>
    %c0_5 = arith.constant 0 : index
    %c0_6 = arith.constant 0 : index
    %c0_7 = arith.constant 0 : index
    %5 = vector.load %arg2[%c0_5, %c0_6, %c0_7] : memref<1x1x32xf32, #tpu.memory_space<vmem>>, vector<1x1x32xf32>
    %6 = vector.broadcast %5 : vector<1x1x32xf32> to vector<2x4x32xf32>
    %7 = arith.addf %4, %6 : vector<2x4x32xf32>
    %cst = arith.constant 0.000000e+00 : f32
    %8 = vector.broadcast %cst : f32 to vector<2x4x32xf32>
    %9 = arith.maximumf %7, %8 : vector<2x4x32xf32>
    %cst_8 = arith.constant dense<0.000000e+00> : vector<2x32xf32>
    %10 = vector.multi_reduction <add>, %9, %cst_8 [1] : vector<2x4x32xf32> to vector<2x32xf32>
    %cst_9 = arith.constant 4.000000e+00 : f32
    %11 = vector.broadcast %cst_9 : f32 to vector<2x32xf32>
    %12 = arith.divf %10, %11 : vector<2x32xf32>
    %c0_10 = arith.constant 0 : index
    %c0_11 = arith.constant 0 : index
    %13 = vector.load %arg3[%c0_10, %c0_11] : memref<32x128xf32, #tpu.memory_space<vmem>>, vector<32x128xf32>
    %cst_12 = arith.constant dense<0.000000e+00> : vector<2x128xf32>
    %14 = tpu.matmul %12, %13, %cst_12 {dimension_numbers = #tpu.dot_dimension_numbers<[1], [0], [0], [1], [0, 0, 1, 1], [], []>} : vector<2x32xf32>, vector<32x128xf32>, vector<2x128xf32> -> vector<2x128xf32>
    %c0_13 = arith.constant 0 : index
    %c0_14 = arith.constant 0 : index
    %15 = vector.load %arg4[%c0_13, %c0_14] : memref<1x128xf32, #tpu.memory_space<vmem>>, vector<1x128xf32>
    %16 = vector.broadcast %15 : vector<1x128xf32> to vector<2x128xf32>
    %17 = arith.addf %14, %16 : vector<2x128xf32>
    %c0_15 = arith.constant 0 : index
    %c0_16 = arith.constant 0 : index
    %18 = vector.load %arg5[%c0_15, %c0_16] : memref<2x128xf32, #tpu.memory_space<vmem>>, vector<2x128xf32>
    tpu.vector_store %arg5[%c0_15, %c0_16], %17 {strides = array<i32>} : memref<2x128xf32, #tpu.memory_space<vmem>>, vector<2x128xf32>,
    return
  }
}

</mosaic_0001>

<llo_original>
// kernel: densenet_forward.13
$region0: #{densenet_forward.13}
  #allocation0 [shape = 'u32[]', space=smem, size = 0x4, offset = 0x4, fixed_abs, tag = 'smem constant byte address 0x4 - core index']
  #allocation1 [shape = 'u32[144,128]{1,0:T(1,128)}', space=vmem, size = 0x12000, scoped, tag = 'internal scratch']
  #allocation2 [shape = 'f32[128,128]{1,0:T(8,128)}', space=vmem, size = 0x10000, scoped, tag = 'scratch operand']
  %s0 = inlined_call_operand.vmem [shape: bf16[128,200], index: 0, kind: input, shape index: {}]
  %s1 = inlined_call_operand.vmem [shape: bf16[200,128], index: 1, kind: input, shape index: {}]
  %s2 = inlined_call_operand.vmem [shape: f32[1,128], index: 2, kind: input, shape index: {}]
  %s3 = inlined_call_operand.vmem [shape: f32[1,128], index: 3, kind: input, shape index: {}]
  %s4 = inlined_call_operand.vmem [shape: bf16[128,128], index: 4, kind: output, shape index: {}]
  %s5 = sld [smem:[#allocation0]]
  $region34: #{densenet_forward.13} parent=0
    _
  %s7 = ssub.s32 1, %s5
  %s8 = scalar_select 0, %s7, %s5
  // Predicated region
  $region2: #{densenet_forward.13} parent=0 // pred_check
    _
  $region3: #{densenet_forward.13} parent=0 // pred_check_branch
    %10 = sbr.rel (0) target = $region5
  $region4: #{densenet_forward.13} parent=0 // pred_region
    _
  $region5: #{densenet_forward.13} parent=0 // pred_fallthru
    _
  // Predicated region
  $region6: #{densenet_forward.13} parent=0 // pred_check
    _
  $region7: #{densenet_forward.13} parent=0 // pred_check_branch
    %12 = sbr.rel (0) target = $region9
  $region8: #{densenet_forward.13} parent=0 // pred_region
    _
  $region9: #{densenet_forward.13} parent=0 // pred_fallthru
    _
  // Predicated region
  $region10: #{densenet_forward.13} parent=0 // pred_check
    _
  $region11: #{densenet_forward.13} parent=0 // pred_check_branch
    %14 = sbr.rel (0) target = $region13
  $region12: #{densenet_forward.13} parent=0 // pred_region
    _
  $region13: #{densenet_forward.13} parent=0 // pred_fallthru
    _
  // Predicated region
  $region14: #{densenet_forward.13} parent=0 // pred_check
    _
  $region15: #{densenet_forward.13} parent=0 // pred_check_branch
    %16 = sbr.rel (0) target = $region17
  $region16: #{densenet_forward.13} parent=0 // pred_region
    _
  $region17: #{densenet_forward.13} parent=0 // pred_fallthru
    _
  %p18 = scmp.eq.s32.totalorder 0, 0
  // Predicated region
  $region18: #{densenet_forward.13} parent=0 // pred_check
    %p19 = pneg %p18
  $region19: #{densenet_forward.13} parent=0 // pred_check_branch
    %21 = sbr.rel (%p19) target = $region21
  $region20: #{densenet_forward.13} parent=0 // pred_region
    %22 = vst [vmem:[#allocation2] sm:$0xff] 0.0
    %23 = vst [vmem:[#allocation2 + $0x8] sm:$0xff] 0.0
    %24 = vst [vmem:[#allocation2 + $0x10] sm:$0xff] 0.0
    %25 = vst [vmem:[#allocation2 + $0x18] sm:$0xff] 0.0
    %26 = vst [vmem:[#allocation2 + $0x20] sm:$0xff] 0.0
    %27 = vst [vmem:[#allocation2 + $0x28] sm:$0xff] 0.0
    %28 = vst [vmem:[#allocation2 + $0x30] sm:$0xff] 0.0
    %29 = vst [vmem:[#allocation2 + $0x38] sm:$0xff] 0.0
    %30 = vst [vmem:[#allocation2 + $0x40] sm:$0xff] 0.0
    %31 = vst [vmem:[#allocation2 + $0x48] sm:$0xff] 0.0
    %32 = vst [vmem:[#allocation2 + $0x50] sm:$0xff] 0.0
    %33 = vst [vmem:[#allocation2 + $0x58] sm:$0xff] 0.0
    %34 = vst [vmem:[#allocation2 + $0x60] sm:$0xff] 0.0
    %35 = vst [vmem:[#allocation2 + $0x68] sm:$0xff] 0.0
    %36 = vst [vmem:[#allocation2 + $0x70] sm:$0xff] 0.0
    %37 = vst [vmem:[#allocation2 + $0x78] sm:$0xff] 0.0
  $region21: #{densenet_forward.13} parent=0 // pred_fallthru
    _
  %v38 = vld [vmem:[%s0] sm:$0xff]
  %v39 = vld [vmem:[%s0 + $0x8] sm:$0xff]
  %v40 = vld [vmem:[%s0 + $0x10] sm:$0xff]
  %v41 = vld [vmem:[%s0 + $0x18] sm:$0xff]
  %v42 = vld [vmem:[%s0 + $0x20] sm:$0xff]
  %v43 = vld [vmem:[%s0 + $0x28] sm:$0xff]
  %v44 = vld [vmem:[%s0 + $0x30] sm:$0xff]
  %v45 = vld [vmem:[%s0 + $0x38] sm:$0xff]
  %v46 = vld [vmem:[%s0 + $0x40] sm:$0xff]
  %v47 = vld [vmem:[%s0 + $0x48] sm:$0xff]
  %v48 = vld [vmem:[%s0 + $0x50] sm:$0xff]
  %v49 = vld [vmem:[%s0 + $0x58] sm:$0xff]
  %v50 = vld [vmem:[%s0 + $0x60] sm:$0xff]
  %v51 = vld [vmem:[%s0 + $0x68] sm:$0xff]
  %v52 = vld [vmem:[%s0 + $0x70] sm:$0xff]
  %v53 = vld [vmem:[%s0 + $0x78] sm:$0xff]
  %v54 = vld [vmem:[#allocation2] sm:$0xff]
  %v55 = vld [vmem:[#allocation2 + $0x8] sm:$0xff]
  %v56 = vld [vmem:[#allocation2 + $0x10] sm:$0xff]
  %v57 = vld [vmem:[#allocation2 + $0x18] sm:$0xff]
  %v58 = vld [vmem:[#allocation2 + $0x20] sm:$0xff]
  %v59 = vld [vmem:[#allocation2 + $0x28] sm:$0xff]
  %v60 = vld [vmem:[#allocation2 + $0x30] sm:$0xff]
  %v61 = vld [vmem:[#allocation2 + $0x38] sm:$0xff]
  %v62 = vld [vmem:[#allocation2 + $0x40] sm:$0xff]
  %v63 = vld [vmem:[#allocation2 + $0x48] sm:$0xff]
  %v64 = vld [vmem:[#allocation2 + $0x50] sm:$0xff]
  %v65 = vld [vmem:[#allocation2 + $0x58] sm:$0xff]
  %v66 = vld [vmem:[#allocation2 + $0x60] sm:$0xff]
  %v67 = vld [vmem:[#allocation2 + $0x68] sm:$0xff]
  %v68 = vld [vmem:[#allocation2 + $0x70] sm:$0xff]
  %v69 = vld [vmem:[#allocation2 + $0x78] sm:$0xff]
  %v70 = vld [vmem:[%s1] sm:$0xf]
  %v71 = vld [vmem:[%s1 + $0x4] sm:$0xf]
  %v72 = vld [vmem:[%s1 + $0x8] sm:$0xf]
  %v73 = vld [vmem:[%s1 + $0xc] sm:$0xf]
  %v74 = vld [vmem:[%s1 + $0x10] sm:$0xf]
  %v75 = vld [vmem:[%s1 + $0x14] sm:$0xf]
  %v76 = vld [vmem:[%s1 + $0x18] sm:$0xf]
  %v77 = vld [vmem:[%s1 + $0x1c] sm:$0xf]
  %v78 = vld [vmem:[%s1 + $0x20] sm:$0xf]
  %v79 = vld [vmem:[%s1 + $0x24] sm:$0xf]
  %v80 = vld [vmem:[%s1 + $0x28] sm:$0xf]
  %v81 = vld [vmem:[%s1 + $0x2c] sm:$0xf]
  %v82 = vld [vmem:[%s1 + $0x30] sm:$0xf]
  %v83 = vld [vmem:[%s1 + $0x34] sm:$0xf]
  %v84 = vld [vmem:[%s1 + $0x38] sm:$0xf]
  %v85 = vld [vmem:[%s1 + $0x3c] sm:$0xf]
  %v86 = vld [vmem:[%s1 + $0x40] sm:$0xf]
  %v87 = vld [vmem:[%s1 + $0x44] sm:$0xf]
  %v88 = vld [vmem:[%s1 + $0x48] sm:$0xf]
  %v89 = vld [vmem:[%s1 + $0x4c] sm:$0xf]
  %v90 = vld [vmem:[%s1 + $0x50] sm:$0xf]
  %v91 = vld [vmem:[%s1 + $0x54] sm:$0xf]
  %v92 = vld [vmem:[%s1 + $0x58] sm:$0xf]
  %v93 = vld [vmem:[%s1 + $0x5c] sm:$0xf]
  %v94 = vld [vmem:[%s1 + $0x60] sm:$0xf]
  %v111 = vunpack.c.l.b16 %v38
  %v112 = vunpack.c.h.b16 %v38
  %v113 = vunpack.c.l.b16 %v39
  %v114 = vunpack.c.h.b16 %v39
  %v115 = vunpack.c.l.b16 %v40
  %v116 = vunpack.c.h.b16 %v40
  %v117 = vunpack.c.l.b16 %v41
  %v118 = vunpack.c.h.b16 %v41
  %v119 = vunpack.c.l.b16 %v42
  %v120 = vunpack.c.h.b16 %v42
  %v121 = vunpack.c.l.b16 %v43
  %v122 = vunpack.c.h.b16 %v43
  %v123 = vunpack.c.l.b16 %v44
  %v124 = vunpack.c.h.b16 %v44
  %v125 = vunpack.c.l.b16 %v45
  %v126 = vunpack.c.h.b16 %v45
  %v127 = vunpack.c.l.b16 %v46
  %v128 = vunpack.c.h.b16 %v46
  %v129 = vunpack.c.l.b16 %v47
  %v130 = vunpack.c.h.b16 %v47
  %v131 = vunpack.c.l.b16 %v48
  %v132 = vunpack.c.h.b16 %v48
  %v133 = vunpack.c.l.b16 %v49
  %v134 = vunpack.c.h.b16 %v49
  %v135 = vunpack.c.l.b16 %v50
  %v136 = vunpack.c.h.b16 %v50
  %v137 = vunpack.c.l.b16 %v51
  %v138 = vunpack.c.h.b16 %v51
  %v139 = vunpack.c.l.b16 %v52
  %v140 = vunpack.c.h.b16 %v52
  %v141 = vunpack.c.l.b16 %v53
  %v142 = vunpack.c.h.b16 %v53
  %v143 = vpack.c.b16 %v113, %v111
  %v144 = vpack.c.b16 %v114, %v112
  %v145 = vpack.c.b16 %v117, %v115
  %v146 = vpack.c.b16 %v118, %v116
  %v147 = vpack.c.b16 %v121, %v119
  %v148 = vpack.c.b16 %v122, %v120
  %v149 = vpack.c.b16 %v125, %v123
  %v150 = vpack.c.b16 %v126, %v124
  %v151 = vpack.c.b16 %v129, %v127
  %v152 = vpack.c.b16 %v130, %v128
  %v153 = vpack.c.b16 %v133, %v131
  %v154 = vpack.c.b16 %v134, %v132
  %v155 = vpack.c.b16 %v137, %v135
  %v156 = vpack.c.b16 %v138, %v136
  %v157 = vpack.c.b16 %v141, %v139
  %v158 = vpack.c.b16 %v142, %v140
  %v192 = vunpack.c.l.b16 %v70
  %v193 = vunpack.c.l.b16 %v71
  %v194 = vunpack.c.l.b16 %v72
  %v195 = vunpack.c.l.b16 %v73
  %v196 = vunpack.c.l.b16 %v74
  %v197 = vunpack.c.l.b16 %v75
  %v198 = vunpack.c.l.b16 %v76
  %v199 = vunpack.c.l.b16 %v77
  %v200 = vunpack.c.l.b16 %v78
  %v201 = vunpack.c.l.b16 %v79
  %v202 = vunpack.c.l.b16 %v80
  %v203 = vunpack.c.l.b16 %v81
  %v204 = vunpack.c.l.b16 %v82
  %v205 = vunpack.c.l.b16 %v83
  %v206 = vunpack.c.l.b16 %v84
  %v207 = vunpack.c.l.b16 %v85
  %v208 = vunpack.c.l.b16 %v86
  %v209 = vunpack.c.l.b16 %v87
  %v210 = vunpack.c.l.b16 %v88
  %v211 = vunpack.c.l.b16 %v89
  %v212 = vunpack.c.l.b16 %v90
  %v213 = vunpack.c.l.b16 %v91
  %v214 = vunpack.c.l.b16 %v92
  %v215 = vunpack.c.l.b16 %v93
  %v216 = vunpack.c.l.b16 %v94
  %v217 = vpack.c.b16 %v193, %v192
  %v218 = vpack.c.b16 %v195, %v194
  %v219 = vpack.c.b16 %v197, %v196
  %v220 = vpack.c.b16 %v199, %v198
  %v221 = vpack.c.b16 %v201, %v200
  %v222 = vpack.c.b16 %v203, %v202
  %v223 = vpack.c.b16 %v205, %v204
  %v224 = vpack.c.b16 %v207, %v206
  %v225 = vpack.c.b16 %v209, %v208
  %v226 = vpack.c.b16 %v211, %v210
  %v227 = vpack.c.b16 %v213, %v212
  %v228 = vpack.c.b16 %v215, %v214
  %v229 = vpack.c.b16 %v216, %v216
  %vm242 = vcmask 588800
  %v244 = vsel %vm242, %v144, 0
  %v247 = vsel %vm242, %v146, 0
  %v250 = vsel %vm242, %v148, 0
  %v253 = vsel %vm242, %v150, 0
  %v256 = vsel %vm242, %v152, 0
  %v259 = vsel %vm242, %v154, 0
  %v262 = vsel %vm242, %v156, 0
  %v265 = vsel %vm242, %v158, 0
  %vm267 = vcmask 1043456
  %v269 = vsel %vm267, %v229, 0
  %271 = vmatprep.subr.bf16.mxu0 0
  %272 = vmatpush1.bf16.msra.mxu0 %v217
  %273 = vmatprep.subr.bf16.mxu0 0
  %274 = vmatpush1.bf16.msra.mxu0 %v218
  %275 = vmatprep.subr.bf16.mxu0 0
  %276 = vmatpush1.bf16.msra.mxu0 %v219
  %277 = vmatprep.subr.bf16.mxu0 0
  %278 = vmatpush1.bf16.msra.mxu0 %v220
  %279 = vmatprep.subr.bf16.mxu0 0
  %280 = vmatpush1.bf16.msra.mxu0 %v221
  %281 = vmatprep.subr.bf16.mxu0 0
  %282 = vmatpush1.bf16.msra.mxu0 %v222
  %283 = vmatprep.subr.bf16.mxu0 0
  %284 = vmatpush1.bf16.msra.mxu0 %v223
  %285 = vmatprep.subr.bf16.mxu0 0
  %286 = vmatpush1.bf16.msra.mxu0 %v224
  %287 = vmatprep.subr.bf16.mxu0 0
  %288 = vmatpush1.bf16.msra.mxu0 %v225
  %289 = vmatprep.subr.bf16.mxu0 0
  %290 = vmatpush1.bf16.msra.mxu0 %v226
  %291 = vmatprep.subr.bf16.mxu0 0
  %292 = vmatpush1.bf16.msra.mxu0 %v227
  %293 = vmatprep.subr.bf16.mxu0 0
  %294 = vmatpush1.bf16.msra.mxu0 %v228
  %295 = vmatprep.subr.bf16.mxu0 0
  %296 = vmatpush1.bf16.msra.mxu0 %v269
  %297 = vmatprep.subr.bf16.mxu0 0
  %298 = vmatpush1.bf16.msra.mxu0 0
  %299 = vmatprep.subr.bf16.mxu0 0
  %300 = vmatpush1.bf16.msra.mxu0 0
  %301 = vmatprep.subr.bf16.mxu0 0
  %302 = vmatpush1.bf16.msra.mxu0 0
  %303 = vmatprep.mubr.bf16.mxu0 %v244
  %304 = vmatmul.mubr.bf16.gmra.mrb[0].mxu0 %v143
  %v305 = vpop.f32.mrb[0].mxu0
  %v306 = vadd.f32 0.0, %v305
  %v307 = vpop.f32.mrb[0].mxu0
  %v308 = vpop.f32.mrb[0].mxu0
  %v309 = vadd.f32 0.0, %v308
  %v310 = vpop.f32.mrb[0].mxu0
  %311 = vmatprep.mubr.bf16.mxu0 %v247
  %312 = vmatmul.mubr.bf16.gmra.mrb[0].mxu0 %v145
  %v313 = vpop.f32.mrb[0].mxu0
  %v314 = vadd.f32 0.0, %v313
  %v315 = vpop.f32.mrb[0].mxu0
  %v316 = vpop.f32.mrb[0].mxu0
  %v317 = vadd.f32 0.0, %v316
  %v318 = vpop.f32.mrb[0].mxu0
  %319 = vmatprep.mubr.bf16.mxu0 %v250
  %320 = vmatmul.mubr.bf16.gmra.mrb[0].mxu0 %v147
  %v321 = vpop.f32.mrb[0].mxu0
  %v322 = vadd.f32 0.0, %v321
  %v323 = vpop.f32.mrb[0].mxu0
  %v324 = vpop.f32.mrb[0].mxu0
  %v325 = vadd.f32 0.0, %v324
  %v326 = vpop.f32.mrb[0].mxu0
  %327 = vmatprep.mubr.bf16.mxu0 %v253
  %328 = vmatmul.mubr.bf16.gmra.mrb[0].mxu0 %v149
  %v329 = vpop.f32.mrb[0].mxu0
  %v330 = vadd.f32 0.0, %v329
  %v331 = vpop.f32.mrb[0].mxu0
  %v332 = vpop.f32.mrb[0].mxu0
  %v333 = vadd.f32 0.0, %v332
  %v334 = vpop.f32.mrb[0].mxu0
  %335 = vmatprep.mubr.bf16.mxu0 %v256
  %336 = vmatmul.mubr.bf16.gmra.mrb[0].mxu0 %v151
  %v337 = vpop.f32.mrb[0].mxu0
  %v338 = vadd.f32 0.0, %v337
  %v339 = vpop.f32.mrb[0].mxu0
  %v340 = vpop.f32.mrb[0].mxu0
  %v341 = vadd.f32 0.0, %v340
  %v342 = vpop.f32.mrb[0].mxu0
  %343 = vmatprep.mubr.bf16.mxu0 %v259
  %344 = vmatmul.mubr.bf16.gmra.mrb[0].mxu0 %v153
  %v345 = vpop.f32.mrb[0].mxu0
  %v346 = vadd.f32 0.0, %v345
  %v347 = vpop.f32.mrb[0].mxu0
  %v348 = vpop.f32.mrb[0].mxu0
  %v349 = vadd.f32 0.0, %v348
  %v350 = vpop.f32.mrb[0].mxu0
  %351 = vmatprep.mubr.bf16.mxu0 %v262
  %352 = vmatmul.mubr.bf16.gmra.mrb[0].mxu0 %v155
  %v353 = vpop.f32.mrb[0].mxu0
  %v354 = vadd.f32 0.0, %v353
  %v355 = vpop.f32.mrb[0].mxu0
  %v356 = vpop.f32.mrb[0].mxu0
  %v357 = vadd.f32 0.0, %v356
  %v358 = vpop.f32.mrb[0].mxu0
  %359 = vmatprep.mubr.bf16.mxu0 %v265
  %360 = vmatmul.mubr.bf16.gmra.mrb[0].mxu0 %v157
  %v361 = vpop.f32.mrb[0].mxu0
  %v362 = vadd.f32 0.0, %v361
  %v363 = vpop.f32.mrb[0].mxu0
  %v364 = vpop.f32.mrb[0].mxu0
  %v365 = vadd.f32 0.0, %v364
  %v366 = vpop.f32.mrb[0].mxu0
  %367 = vdwg.mxu0
  %v368 = vadd.f32 %v54, %v306
  %v369 = vadd.f32 %v55, %v309
  %v370 = vadd.f32 %v56, %v314
  %v371 = vadd.f32 %v57, %v317
  %v372 = vadd.f32 %v58, %v322
  %v373 = vadd.f32 %v59, %v325
  %v374 = vadd.f32 %v60, %v330
  %v375 = vadd.f32 %v61, %v333
  %v376 = vadd.f32 %v62, %v338
  %v377 = vadd.f32 %v63, %v341
  %v378 = vadd.f32 %v64, %v346
  %v379 = vadd.f32 %v65, %v349
  %v380 = vadd.f32 %v66, %v354
  %v381 = vadd.f32 %v67, %v357
  %v382 = vadd.f32 %v68, %v362
  %v383 = vadd.f32 %v69, %v365
  %384 = vst [vmem:[#allocation2] sm:$0xff] %v368
  %385 = vst [vmem:[#allocation2 + $0x8] sm:$0xff] %v369
  %386 = vst [vmem:[#allocation2 + $0x10] sm:$0xff] %v370
  %387 = vst [vmem:[#allocation2 + $0x18] sm:$0xff] %v371
  %388 = vst [vmem:[#allocation2 + $0x20] sm:$0xff] %v372
  %389 = vst [vmem:[#allocation2 + $0x28] sm:$0xff] %v373
  %390 = vst [vmem:[#allocation2 + $0x30] sm:$0xff] %v374
  %391 = vst [vmem:[#allocation2 + $0x38] sm:$0xff] %v375
  %392 = vst [vmem:[#allocation2 + $0x40] sm:$0xff] %v376
  %393 = vst [vmem:[#allocation2 + $0x48] sm:$0xff] %v377
  %394 = vst [vmem:[#allocation2 + $0x50] sm:$0xff] %v378
  %395 = vst [vmem:[#allocation2 + $0x58] sm:$0xff] %v379
  %396 = vst [vmem:[#allocation2 + $0x60] sm:$0xff] %v380
  %397 = vst [vmem:[#allocation2 + $0x68] sm:$0xff] %v381
  %398 = vst [vmem:[#allocation2 + $0x70] sm:$0xff] %v382
  %399 = vst [vmem:[#allocation2 + $0x78] sm:$0xff] %v383
  // Predicated region
  $region22: #{densenet_forward.13} parent=0 // pred_check
    %p400 = pneg %p18
  $region23: #{densenet_forward.13} parent=0 // pred_check_branch
    %402 = sbr.rel (%p400) target = $region25
  $region24: #{densenet_forward.13} parent=0 // pred_region
    %v403 = vld [vmem:[#allocation2] sm:$0xff]
    %v404 = vld [vmem:[#allocation2 + $0x8] sm:$0xff]
    %v405 = vld [vmem:[#allocation2 + $0x10] sm:$0xff]
    %v406 = vld [vmem:[#allocation2 + $0x18] sm:$0xff]
    %v407 = vld [vmem:[#allocation2 + $0x20] sm:$0xff]
    %v408 = vld [vmem:[#allocation2 + $0x28] sm:$0xff]
    %v409 = vld [vmem:[#allocation2 + $0x30] sm:$0xff]
    %v410 = vld [vmem:[#allocation2 + $0x38] sm:$0xff]
    %v411 = vld [vmem:[#allocation2 + $0x40] sm:$0xff]
    %v412 = vld [vmem:[#allocation2 + $0x48] sm:$0xff]
    %v413 = vld [vmem:[#allocation2 + $0x50] sm:$0xff]
    %v414 = vld [vmem:[#allocation2 + $0x58] sm:$0xff]
    %v415 = vld [vmem:[#allocation2 + $0x60] sm:$0xff]
    %v416 = vld [vmem:[#allocation2 + $0x68] sm:$0xff]
    %v417 = vld [vmem:[#allocation2 + $0x70] sm:$0xff]
    %v418 = vld [vmem:[#allocation2 + $0x78] sm:$0xff]
    %v419 = vld [vmem:[%s2] sm:$0x1]
    %v421 = vlaneseq
    %v422 = vshrl.u32 %v421, 7
    %v423 = vsub.s32 0, %v422
    %v424 = vrot.slane %v419, %v423
    %v426 = vmul.f32 %v403, %v424
    %v427 = vmul.f32 %v404, %v424
    %v428 = vmul.f32 %v405, %v424
    %v429 = vmul.f32 %v406, %v424
    %v430 = vmul.f32 %v407, %v424
    %v431 = vmul.f32 %v408, %v424
    %v432 = vmul.f32 %v409, %v424
    %v433 = vmul.f32 %v410, %v424
    %v434 = vmul.f32 %v411, %v424
    %v435 = vmul.f32 %v412, %v424
    %v436 = vmul.f32 %v413, %v424
    %v437 = vmul.f32 %v414, %v424
    %v438 = vmul.f32 %v415, %v424
    %v439 = vmul.f32 %v416, %v424
    %v440 = vmul.f32 %v417, %v424
    %v441 = vmul.f32 %v418, %v424
    %v442 = vld [vmem:[%s3] sm:$0x1]
    %v444 = vlaneseq
    %v445 = vshrl.u32 %v444, 7
    %v446 = vsub.s32 0, %v445
    %v447 = vrot.slane %v442, %v446
    %v449 = vadd.f32 %v426, %v447
    %v450 = vadd.f32 %v427, %v447
    %v451 = vadd.f32 %v428, %v447
    %v452 = vadd.f32 %v429, %v447
    %v453 = vadd.f32 %v430, %v447
    %v454 = vadd.f32 %v431, %v447
    %v455 = vadd.f32 %v432, %v447
    %v456 = vadd.f32 %v433, %v447
    %v457 = vadd.f32 %v434, %v447
    %v458 = vadd.f32 %v435, %v447
    %v459 = vadd.f32 %v436, %v447
    %v460 = vadd.f32 %v437, %v447
    %v461 = vadd.f32 %v438, %v447
    %v462 = vadd.f32 %v439, %v447
    %v463 = vadd.f32 %v440, %v447
    %v464 = vadd.f32 %v441, %v447
    %v465 = vmax.f32 %v449, 0.0
    %v466 = vmax.f32 %v450, 0.0
    %v467 = vmax.f32 %v451, 0.0
    %v468 = vmax.f32 %v452, 0.0
    %v469 = vmax.f32 %v453, 0.0
    %v470 = vmax.f32 %v454, 0.0
    %v471 = vmax.f32 %v455, 0.0
    %v472 = vmax.f32 %v456, 0.0
    %v473 = vmax.f32 %v457, 0.0
    %v474 = vmax.f32 %v458, 0.0
    %v475 = vmax.f32 %v459, 0.0
    %v476 = vmax.f32 %v460, 0.0
    %v477 = vmax.f32 %v461, 0.0
    %v478 = vmax.f32 %v462, 0.0
    %v479 = vmax.f32 %v463, 0.0
    %v480 = vmax.f32 %v464, 0.0
    %v481 = vpack.c.bf16 %v466, %v465
    %v482 = vpack.c.bf16 %v468, %v467
    %v483 = vpack.c.bf16 %v470, %v469
    %v484 = vpack.c.bf16 %v472, %v471
    %v485 = vpack.c.bf16 %v474, %v473
    %v486 = vpack.c.bf16 %v476, %v475
    %v487 = vpack.c.bf16 %v478, %v477
    %v488 = vpack.c.bf16 %v480, %v479
    %v497 = vunpack.c.l.b16 %v481
    %v498 = vunpack.c.h.b16 %v481
    %v499 = vunpack.c.l.b16 %v482
    %v500 = vunpack.c.h.b16 %v482
    %v501 = vunpack.c.l.b16 %v483
    %v502 = vunpack.c.h.b16 %v483
    %v503 = vunpack.c.l.b16 %v484
    %v504 = vunpack.c.h.b16 %v484
    %v505 = vunpack.c.l.b16 %v485
    %v506 = vunpack.c.h.b16 %v485
    %v507 = vunpack.c.l.b16 %v486
    %v508 = vunpack.c.h.b16 %v486
    %v509 = vunpack.c.l.b16 %v487
    %v510 = vunpack.c.h.b16 %v487
    %v511 = vunpack.c.l.b16 %v488
    %v512 = vunpack.c.h.b16 %v488
    %v513 = vpack.c.b16 %v497, %v497
    %v514 = vpack.c.b16 %v498, %v498
    %v515 = vpack.c.b16 %v499, %v499
    %v516 = vpack.c.b16 %v500, %v500
    %v517 = vpack.c.b16 %v501, %v501
    %v518 = vpack.c.b16 %v502, %v502
    %v519 = vpack.c.b16 %v503, %v503
    %v520 = vpack.c.b16 %v504, %v504
    %v521 = vpack.c.b16 %v505, %v505
    %v522 = vpack.c.b16 %v506, %v506
    %v523 = vpack.c.b16 %v507, %v507
    %v524 = vpack.c.b16 %v508, %v508
    %v525 = vpack.c.b16 %v509, %v509
    %v526 = vpack.c.b16 %v510, %v510
    %v527 = vpack.c.b16 %v511, %v511
    %v528 = vpack.c.b16 %v512, %v512
    %545 = vst [vmem:[%s4] sm:$0xf] %v513
    %546 = vst [vmem:[%s4 + $0x4] sm:$0xf] %v514
    %547 = vst [vmem:[%s4 + $0x8] sm:$0xf] %v515
    %548 = vst [vmem:[%s4 + $0xc] sm:$0xf] %v516
    %549 = vst [vmem:[%s4 + $0x10] sm:$0xf] %v517
    %550 = vst [vmem:[%s4 + $0x14] sm:$0xf] %v518
    %551 = vst [vmem:[%s4 + $0x18] sm:$0xf] %v519
    %552 = vst [vmem:[%s4 + $0x1c] sm:$0xf] %v520
    %553 = vst [vmem:[%s4 + $0x20] sm:$0xf] %v521
    %554 = vst [vmem:[%s4 + $0x24] sm:$0xf] %v522
    %555 = vst [vmem:[%s4 + $0x28] sm:$0xf] %v523
    %556 = vst [vmem:[%s4 + $0x2c] sm:$0xf] %v524
    %557 = vst [vmem:[%s4 + $0x30] sm:$0xf] %v525
    %558 = vst [vmem:[%s4 + $0x34] sm:$0xf] %v526
    %559 = vst [vmem:[%s4 + $0x38] sm:$0xf] %v527
    %560 = vst [vmem:[%s4 + $0x3c] sm:$0xf] %v528
  $region25: #{densenet_forward.13} parent=0 // pred_fallthru
    _
  // Predicated region
  $region26: #{densenet_forward.13} parent=0 // pred_check
    _
  $region27: #{densenet_forward.13} parent=0 // pred_check_branch
    %562 = sbr.rel (0) target = $region29
  $region28: #{densenet_forward.13} parent=0 // pred_region
    _
  $region29: #{densenet_forward.13} parent=0 // pred_fallthru
    _
  // Predicated region
  $region30: #{densenet_forward.13} parent=0 // pred_check
    _
  $region31: #{densenet_forward.13} parent=0 // pred_check_branch
    %564 = sbr.rel (0) target = $region33
  $region32: #{densenet_forward.13} parent=0 // pred_region
    _
  $region33: #{densenet_forward.13} parent=0 // pred_fallthru
    _

// kernel: densenet_forward.15
$region0: #{densenet_forward.15}
  #allocation0 [shape = 'u32[]', space=smem, size = 0x4, offset = 0x4, fixed_abs, tag = 'smem constant byte address 0x4 - core index']
  #allocation1 [shape = 'u32[144,128]{1,0:T(1,128)}', space=vmem, size = 0x12000, scoped, tag = 'internal scratch']
  #allocation2 [shape = 'f32[32,128]{1,0:T(8,128)}', space=vmem, size = 0x4000, scoped, tag = 'scratch operand']
  %s0 = inlined_call_operand.vmem [shape: bf16[32,16], index: 0, kind: input, shape index: {}]
  %s1 = inlined_call_operand.vmem [shape: bf16[16,128], index: 1, kind: input, shape index: {}]
  %s2 = inlined_call_operand.vmem [shape: f32[1,16], index: 2, kind: input, shape index: {}]
  %s3 = inlined_call_operand.vmem [shape: f32[1,16], index: 3, kind: input, shape index: {}]
  %s4 = inlined_call_operand.vmem [shape: f32[1,128], index: 4, kind: input, shape index: {}]
  %s5 = inlined_call_operand.vmem [shape: f32[1,128], index: 5, kind: input, shape index: {}]
  %s6 = inlined_call_operand.vmem [shape: bf16[32,128], index: 6, kind: output, shape index: {}]
  %s7 = sld [smem:[#allocation0]]
  $region42: #{densenet_forward.15} parent=0
    _
  %s9 = ssub.s32 1, %s7
  %s10 = scalar_select 0, %s9, %s7
  // Predicated region
  $region2: #{densenet_forward.15} parent=0 // pred_check
    _
  $region3: #{densenet_forward.15} parent=0 // pred_check_branch
    %12 = sbr.rel (0) target = $region5
  $region4: #{densenet_forward.15} parent=0 // pred_region
    _
  $region5: #{densenet_forward.15} parent=0 // pred_fallthru
    _
  // Predicated region
  $region6: #{densenet_forward.15} parent=0 // pred_check
    _
  $region7: #{densenet_forward.15} parent=0 // pred_check_branch
    %14 = sbr.rel (0) target = $region9
  $region8: #{densenet_forward.15} parent=0 // pred_region
    _
  $region9: #{densenet_forward.15} parent=0 // pred_fallthru
    _
  // Predicated region
  $region10: #{densenet_forward.15} parent=0 // pred_check
    _
  $region11: #{densenet_forward.15} parent=0 // pred_check_branch
    %16 = sbr.rel (0) target = $region13
  $region12: #{densenet_forward.15} parent=0 // pred_region
    _
  $region13: #{densenet_forward.15} parent=0 // pred_fallthru
    _
  // Predicated region
  $region14: #{densenet_forward.15} parent=0 // pred_check
    _
  $region15: #{densenet_forward.15} parent=0 // pred_check_branch
    %18 = sbr.rel (0) target = $region17
  $region16: #{densenet_forward.15} parent=0 // pred_region
    _
  $region17: #{densenet_forward.15} parent=0 // pred_fallthru
    _
  // Predicated region
  $region18: #{densenet_forward.15} parent=0 // pred_check
    _
  $region19: #{densenet_forward.15} parent=0 // pred_check_branch
    %20 = sbr.rel (0) target = $region21
  $region20: #{densenet_forward.15} parent=0 // pred_region
    _
  $region21: #{densenet_forward.15} parent=0 // pred_fallthru
    _
  // Predicated region
  $region22: #{densenet_forward.15} parent=0 // pred_check
    _
  $region23: #{densenet_forward.15} parent=0 // pred_check_branch
    %22 = sbr.rel (0) target = $region25
  $region24: #{densenet_forward.15} parent=0 // pred_region
    _
  $region25: #{densenet_forward.15} parent=0 // pred_fallthru
    _
  %p24 = scmp.eq.s32.totalorder 0, 0
  // Predicated region
  $region26: #{densenet_forward.15} parent=0 // pred_check
    %p25 = pneg %p24
  $region27: #{densenet_forward.15} parent=0 // pred_check_branch
    %27 = sbr.rel (%p25) target = $region29
  $region28: #{densenet_forward.15} parent=0 // pred_region
    %28 = vst [vmem:[#allocation2] sm:$0xff] 0.0
    %29 = vst [vmem:[#allocation2 + $0x8] sm:$0xff] 0.0
    %30 = vst [vmem:[#allocation2 + $0x10] sm:$0xff] 0.0
    %31 = vst [vmem:[#allocation2 + $0x18] sm:$0xff] 0.0
  $region29: #{densenet_forward.15} parent=0 // pred_fallthru
    _
  %v32 = vld [vmem:[%s0] sm:$0xf]
  %v33 = vld [vmem:[%s0 + $0x4] sm:$0xf]
  %v34 = vld [vmem:[%s0 + $0x8] sm:$0xf]
  %v35 = vld [vmem:[%s0 + $0xc] sm:$0xf]
  %v36 = vunpack.c.l.bf16 %v32
  %v37 = vunpack.c.l.bf16 %v33
  %v38 = vunpack.c.l.bf16 %v34
  %v39 = vunpack.c.l.bf16 %v35
  %v40 = vld [vmem:[%s2] sm:$0x1]
  %v42 = vlaneseq
  %v43 = vshrl.u32 %v42, 7
  %v44 = vsub.s32 0, %v43
  %v45 = vrot.slane %v40, %v44
  %v47 = vmul.f32 %v36, %v45
  %v48 = vmul.f32 %v37, %v45
  %v49 = vmul.f32 %v38, %v45
  %v50 = vmul.f32 %v39, %v45
  %v51 = vld [vmem:[%s3] sm:$0x1]
  %v53 = vlaneseq
  %v54 = vshrl.u32 %v53, 7
  %v55 = vsub.s32 0, %v54
  %v56 = vrot.slane %v51, %v55
  %v58 = vadd.f32 %v47, %v56
  %v59 = vadd.f32 %v48, %v56
  %v60 = vadd.f32 %v49, %v56
  %v61 = vadd.f32 %v50, %v56
  %v62 = vmax.f32 %v58, 0.0
  %v63 = vmax.f32 %v59, 0.0
  %v64 = vmax.f32 %v60, 0.0
  %v65 = vmax.f32 %v61, 0.0
  %v66 = vpack.c.bf16 %v63, %v62
  %v67 = vpack.c.bf16 %v65, %v64
  %v68 = vld [vmem:[#allocation2] sm:$0xff]
  %v69 = vld [vmem:[#allocation2 + $0x8] sm:$0xff]
  %v70 = vld [vmem:[#allocation2 + $0x10] sm:$0xff]
  %v71 = vld [vmem:[#allocation2 + $0x18] sm:$0xff]
  %v72 = vld [vmem:[%s1] sm:$0xf]
  %v73 = vld [vmem:[%s1 + $0x4] sm:$0xf]
  %v76 = vunpack.c.l.b16 %v72
  %v77 = vunpack.c.l.b16 %v73
  %v78 = vpack.c.b16 %v77, %v76
  %vm80 = vcmask 130048
  %v82 = vsel %vm80, %v66, 0
  %v85 = vsel %vm80, %v67, 0
  %87 = vmatprep.subr.bf16.mxu0 0
  %88 = vmatpush1.bf16.msra.mxu0 %v78
  %89 = vmatprep.subr.bf16.mxu0 0
  %90 = vmatpush1.bf16.msra.mxu0 0
  %91 = vmatprep.subr.bf16.mxu0 0
  %92 = vmatpush1.bf16.msra.mxu0 0
  %93 = vmatprep.subr.bf16.mxu0 0
  %94 = vmatpush1.bf16.msra.mxu0 0
  %95 = vmatprep.subr.bf16.mxu0 0
  %96 = vmatpush1.bf16.msra.mxu0 0
  %97 = vmatprep.subr.bf16.mxu0 0
  %98 = vmatpush1.bf16.msra.mxu0 0
  %99 = vmatprep.subr.bf16.mxu0 0
  %100 = vmatpush1.bf16.msra.mxu0 0
  %101 = vmatprep.subr.bf16.mxu0 0
  %102 = vmatpush1.bf16.msra.mxu0 0
  %103 = vmatprep.subr.bf16.mxu0 0
  %104 = vmatpush1.bf16.msra.mxu0 0
  %105 = vmatprep.subr.bf16.mxu0 0
  %106 = vmatpush1.bf16.msra.mxu0 0
  %107 = vmatprep.subr.bf16.mxu0 0
  %108 = vmatpush1.bf16.msra.mxu0 0
  %109 = vmatprep.subr.bf16.mxu0 0
  %110 = vmatpush1.bf16.msra.mxu0 0
  %111 = vmatprep.subr.bf16.mxu0 0
  %112 = vmatpush1.bf16.msra.mxu0 0
  %113 = vmatprep.subr.bf16.mxu0 0
  %114 = vmatpush1.bf16.msra.mxu0 0
  %115 = vmatprep.subr.bf16.mxu0 0
  %116 = vmatpush1.bf16.msra.mxu0 0
  %117 = vmatprep.subr.bf16.mxu0 0
  %118 = vmatpush1.bf16.msra.mxu0 0
  %119 = vmatprep.mubr.bf16.mxu0 0
  %120 = vmatmul.mubr.bf16.gmra.mrb[0].mxu0 %v82
  %v121 = vpop.f32.mrb[0].mxu0
  %v122 = vadd.f32 0.0, %v121
  %v123 = vpop.f32.mrb[0].mxu0
  %v124 = vpop.f32.mrb[0].mxu0
  %v125 = vadd.f32 0.0, %v124
  %v126 = vpop.f32.mrb[0].mxu0
  %127 = vmatprep.mubr.bf16.mxu0 0
  %128 = vmatmul.mubr.bf16.gmra.mrb[0].mxu0 %v85
  %v129 = vpop.f32.mrb[0].mxu0
  %v130 = vadd.f32 0.0, %v129
  %v131 = vpop.f32.mrb[0].mxu0
  %v132 = vpop.f32.mrb[0].mxu0
  %v133 = vadd.f32 0.0, %v132
  %v134 = vpop.f32.mrb[0].mxu0
  %135 = vdwg.mxu0
  %v136 = vadd.f32 %v68, %v122
  %v137 = vadd.f32 %v69, %v125
  %v138 = vadd.f32 %v70, %v130
  %v139 = vadd.f32 %v71, %v133
  %140 = vst [vmem:[#allocation2] sm:$0xff] %v136
  %141 = vst [vmem:[#allocation2 + $0x8] sm:$0xff] %v137
  %142 = vst [vmem:[#allocation2 + $0x10] sm:$0xff] %v138
  %143 = vst [vmem:[#allocation2 + $0x18] sm:$0xff] %v139
  // Predicated region
  $region30: #{densenet_forward.15} parent=0 // pred_check
    %p144 = pneg %p24
  $region31: #{densenet_forward.15} parent=0 // pred_check_branch
    %146 = sbr.rel (%p144) target = $region33
  $region32: #{densenet_forward.15} parent=0 // pred_region
    %v147 = vld [vmem:[#allocation2] sm:$0xff]
    %v148 = vld [vmem:[#allocation2 + $0x8] sm:$0xff]
    %v149 = vld [vmem:[#allocation2 + $0x10] sm:$0xff]
    %v150 = vld [vmem:[#allocation2 + $0x18] sm:$0xff]
    %v151 = vld [vmem:[%s4] sm:$0x1]
    %v153 = vlaneseq
    %v154 = vshrl.u32 %v153, 7
    %v155 = vsub.s32 0, %v154
    %v156 = vrot.slane %v151, %v155
    %v158 = vmul.f32 %v147, %v156
    %v159 = vmul.f32 %v148, %v156
    %v160 = vmul.f32 %v149, %v156
    %v161 = vmul.f32 %v150, %v156
    %v162 = vld [vmem:[%s5] sm:$0x1]
    %v164 = vlaneseq
    %v165 = vshrl.u32 %v164, 7
    %v166 = vsub.s32 0, %v165
    %v167 = vrot.slane %v162, %v166
    %v169 = vadd.f32 %v158, %v167
    %v170 = vadd.f32 %v159, %v167
    %v171 = vadd.f32 %v160, %v167
    %v172 = vadd.f32 %v161, %v167
    %v173 = vmax.f32 %v169, 0.0
    %v174 = vmax.f32 %v170, 0.0
    %v175 = vmax.f32 %v171, 0.0
    %v176 = vmax.f32 %v172, 0.0
    %v177 = vpack.c.bf16 %v174, %v173
    %v178 = vpack.c.bf16 %v176, %v175
    %v181 = vunpack.c.l.b16 %v177
    %v182 = vunpack.c.h.b16 %v177
    %v183 = vunpack.c.l.b16 %v178
    %v184 = vunpack.c.h.b16 %v178
    %v185 = vpack.c.b16 %v181, %v181
    %v186 = vpack.c.b16 %v182, %v182
    %v187 = vpack.c.b16 %v183, %v183
    %v188 = vpack.c.b16 %v184, %v184
    %193 = vst [vmem:[%s6] sm:$0xf] %v185
    %194 = vst [vmem:[%s6 + $0x4] sm:$0xf] %v186
    %195 = vst [vmem:[%s6 + $0x8] sm:$0xf] %v187
    %196 = vst [vmem:[%s6 + $0xc] sm:$0xf] %v188
  $region33: #{densenet_forward.15} parent=0 // pred_fallthru
    _
  // Predicated region
  $region34: #{densenet_forward.15} parent=0 // pred_check
    _
  $region35: #{densenet_forward.15} parent=0 // pred_check_branch
    %198 = sbr.rel (0) target = $region37
  $region36: #{densenet_forward.15} parent=0 // pred_region
    _
  $region37: #{densenet_forward.15} parent=0 // pred_fallthru
    _
  // Predicated region
  $region38: #{densenet_forward.15} parent=0 // pred_check
    _
  $region39: #{densenet_forward.15} parent=0 // pred_check_branch
    %200 = sbr.rel (0) target = $region41
  $region40: #{densenet_forward.15} parent=0 // pred_region
    _
  $region41: #{densenet_forward.15} parent=0 // pred_fallthru
    _

// kernel: densenet_forward.14
$region0: #{densenet_forward.14}
  #allocation0 [shape = 'u32[]', space=smem, size = 0x4, offset = 0x4, fixed_abs, tag = 'smem constant byte address 0x4 - core index']
  #allocation1 [shape = 'u32[144,128]{1,0:T(1,128)}', space=vmem, size = 0x12000, scoped, tag = 'internal scratch']
  %s0 = inlined_call_operand.vmem [shape: bf16[222,16], index: 0, kind: input, shape index: {}]
  %s1 = inlined_call_operand.vmem [shape: bf16[200,16], index: 1, kind: output, shape index: {}]
  %s2 = sld [smem:[#allocation0]]
  $region14: #{densenet_forward.14} parent=0
    _
  %s4 = ssub.s32 1, %s2
  %s5 = scalar_select 0, %s4, %s2
  // Predicated region
  $region2: #{densenet_forward.14} parent=0 // pred_check
    _
  $region3: #{densenet_forward.14} parent=0 // pred_check_branch
    %7 = sbr.rel (0) target = $region5
  $region4: #{densenet_forward.14} parent=0 // pred_region
    _
  $region5: #{densenet_forward.14} parent=0 // pred_fallthru
    _
  %v8 = vld [vmem:[%s0] sm:$0xf]
  %v9 = vld [vmem:[%s0 + $0x4] sm:$0xf]
  %v10 = vld [vmem:[%s0 + $0x8] sm:$0xf]
  %v11 = vld [vmem:[%s0 + $0xc] sm:$0xf]
  %v12 = vld [vmem:[%s0 + $0x10] sm:$0xf]
  %v13 = vld [vmem:[%s0 + $0x14] sm:$0xf]
  %v14 = vld [vmem:[%s0 + $0x18] sm:$0xf]
  %v15 = vld [vmem:[%s0 + $0x1c] sm:$0xf]
  %v16 = vld [vmem:[%s0 + $0x20] sm:$0xf]
  %v17 = vld [vmem:[%s0 + $0x24] sm:$0xf]
  %v18 = vld [vmem:[%s0 + $0x28] sm:$0xf]
  %v19 = vld [vmem:[%s0 + $0x2c] sm:$0xf]
  %v20 = vld [vmem:[%s0 + $0x30] sm:$0xf]
  %v21 = vld [vmem:[%s0 + $0x34] sm:$0xf]
  %v22 = vld [vmem:[%s0 + $0x38] sm:$0xf]
  %v23 = vld [vmem:[%s0 + $0x3c] sm:$0xf]
  %v24 = vld [vmem:[%s0 + $0x40] sm:$0xf]
  %v25 = vld [vmem:[%s0 + $0x44] sm:$0xf]
  %v26 = vld [vmem:[%s0 + $0x48] sm:$0xf]
  %v27 = vld [vmem:[%s0 + $0x4c] sm:$0xf]
  %v28 = vld [vmem:[%s0 + $0x50] sm:$0xf]
  %v29 = vld [vmem:[%s0 + $0x54] sm:$0xf]
  %v30 = vld [vmem:[%s0 + $0x58] sm:$0xf]
  %v31 = vld [vmem:[%s0 + $0x5c] sm:$0xf]
  %v32 = vld [vmem:[%s0 + $0x60] sm:$0xf]
  %v33 = vld [vmem:[%s0 + $0x64] sm:$0x1]
  %vm34 = vsmask.f32 3328
  %vm35 = vsmask.f32 7440
  %vm36 = vmor %vm34, %vm35
  %v38 = vshrl.u32 %v8, 16
  %v40 = vrot.slane %v38, 4
  %v41 = vshll.u32 %v8, 16
  %v43 = vrot.slane %v41, 5
  %v44 = vor.u32 %v40, %v43
  %v45 = vrot.slane %v44, 4
  %v47 = vshll.u32 %v9, 16
  %v49 = vrot.slane %v47, 5
  %v50 = vsel %vm36, %v45, %v49
  %v51 = vshrl.u32 %v9, 16
  %v53 = vrot.slane %v51, 4
  %v54 = vor.u32 %v53, %v49
  %v55 = vrot.slane %v54, 4
  %v57 = vshll.u32 %v10, 16
  %v59 = vrot.slane %v57, 5
  %v60 = vsel %vm36, %v55, %v59
  %v61 = vshrl.u32 %v10, 16
  %v63 = vrot.slane %v61, 4
  %v64 = vor.u32 %v63, %v59
  %v65 = vrot.slane %v64, 4
  %v67 = vshll.u32 %v11, 16
  %v69 = vrot.slane %v67, 5
  %v70 = vsel %vm36, %v65, %v69
  %v71 = vshrl.u32 %v11, 16
  %v73 = vrot.slane %v71, 4
  %v74 = vor.u32 %v73, %v69
  %v75 = vrot.slane %v74, 4
  %v77 = vshll.u32 %v12, 16
  %v79 = vrot.slane %v77, 5
  %v80 = vsel %vm36, %v75, %v79
  %v81 = vshrl.u32 %v12, 16
  %v83 = vrot.slane %v81, 4
  %v84 = vor.u32 %v83, %v79
  %v85 = vrot.slane %v84, 4
  %v87 = vshll.u32 %v13, 16
  %v89 = vrot.slane %v87, 5
  %v90 = vsel %vm36, %v85, %v89
  %v91 = vshrl.u32 %v13, 16
  %v93 = vrot.slane %v91, 4
  %v94 = vor.u32 %v93, %v89
  %v95 = vrot.slane %v94, 4
  %v97 = vshll.u32 %v14, 16
  %v99 = vrot.slane %v97, 5
  %v100 = vsel %vm36, %v95, %v99
  %v101 = vshrl.u32 %v14, 16
  %v103 = vrot.slane %v101, 4
  %v104 = vor.u32 %v103, %v99
  %v105 = vrot.slane %v104, 4
  %v107 = vshll.u32 %v15, 16
  %v109 = vrot.slane %v107, 5
  %v110 = vsel %vm36, %v105, %v109
  %v111 = vshrl.u32 %v15, 16
  %v113 = vrot.slane %v111, 4
  %v114 = vor.u32 %v113, %v109
  %v115 = vrot.slane %v114, 4
  %v117 = vshll.u32 %v16, 16
  %v119 = vrot.slane %v117, 5
  %v120 = vsel %vm36, %v115, %v119
  %v121 = vshrl.u32 %v16, 16
  %v123 = vrot.slane %v121, 4
  %v124 = vor.u32 %v123, %v119
  %v125 = vrot.slane %v124, 4
  %v127 = vshll.u32 %v17, 16
  %v129 = vrot.slane %v127, 5
  %v130 = vsel %vm36, %v125, %v129
  %v131 = vshrl.u32 %v17, 16
  %v133 = vrot.slane %v131, 4
  %v134 = vor.u32 %v133, %v129
  %v135 = vrot.slane %v134, 4
  %v137 = vshll.u32 %v18, 16
  %v139 = vrot.slane %v137, 5
  %v140 = vsel %vm36, %v135, %v139
  %v141 = vshrl.u32 %v18, 16
  %v143 = vrot.slane %v141, 4
  %v144 = vor.u32 %v143, %v139
  %v145 = vrot.slane %v144, 4
  %v147 = vshll.u32 %v19, 16
  %v149 = vrot.slane %v147, 5
  %v150 = vsel %vm36, %v145, %v149
  %v151 = vshrl.u32 %v19, 16
  %v153 = vrot.slane %v151, 4
  %v154 = vor.u32 %v153, %v149
  %v155 = vrot.slane %v154, 4
  %v157 = vshll.u32 %v20, 16
  %v159 = vrot.slane %v157, 5
  %v160 = vsel %vm36, %v155, %v159
  %v161 = vshrl.u32 %v20, 16
  %v163 = vrot.slane %v161, 4
  %v164 = vor.u32 %v163, %v159
  %v165 = vrot.slane %v164, 4
  %v167 = vshll.u32 %v21, 16
  %v169 = vrot.slane %v167, 5
  %v170 = vsel %vm36, %v165, %v169
  %v171 = vshrl.u32 %v21, 16
  %v173 = vrot.slane %v171, 4
  %v174 = vor.u32 %v173, %v169
  %v175 = vrot.slane %v174, 4
  %v177 = vshll.u32 %v22, 16
  %v179 = vrot.slane %v177, 5
  %v180 = vsel %vm36, %v175, %v179
  %v181 = vshrl.u32 %v22, 16
  %v183 = vrot.slane %v181, 4
  %v184 = vor.u32 %v183, %v179
  %v185 = vrot.slane %v184, 4
  %v187 = vshll.u32 %v23, 16
  %v189 = vrot.slane %v187, 5
  %v190 = vsel %vm36, %v185, %v189
  %v191 = vshrl.u32 %v23, 16
  %v193 = vrot.slane %v191, 4
  %v194 = vor.u32 %v193, %v189
  %v195 = vrot.slane %v194, 4
  %v197 = vshll.u32 %v24, 16
  %v199 = vrot.slane %v197, 5
  %v200 = vsel %vm36, %v195, %v199
  %v201 = vshrl.u32 %v24, 16
  %v203 = vrot.slane %v201, 4
  %v204 = vor.u32 %v203, %v199
  %v205 = vrot.slane %v204, 4
  %v207 = vshll.u32 %v25, 16
  %v209 = vrot.slane %v207, 5
  %v210 = vsel %vm36, %v205, %v209
  %v211 = vshrl.u32 %v25, 16
  %v213 = vrot.slane %v211, 4
  %v214 = vor.u32 %v213, %v209
  %v215 = vrot.slane %v214, 4
  %v217 = vshll.u32 %v26, 16
  %v219 = vrot.slane %v217, 5
  %v220 = vsel %vm36, %v215, %v219
  %v221 = vshrl.u32 %v26, 16
  %v223 = vrot.slane %v221, 4
  %v224 = vor.u32 %v223, %v219
  %v225 = vrot.slane %v224, 4
  %v227 = vshll.u32 %v27, 16
  %v229 = vrot.slane %v227, 5
  %v230 = vsel %vm36, %v225, %v229
  %v231 = vshrl.u32 %v27, 16
  %v233 = vrot.slane %v231, 4
  %v234 = vor.u32 %v233, %v229
  %v235 = vrot.slane %v234, 4
  %v237 = vshll.u32 %v28, 16
  %v239 = vrot.slane %v237, 5
  %v240 = vsel %vm36, %v235, %v239
  %v241 = vshrl.u32 %v28, 16
  %v243 = vrot.slane %v241, 4
  %v244 = vor.u32 %v243, %v239
  %v245 = vrot.slane %v244, 4
  %v247 = vshll.u32 %v29, 16
  %v249 = vrot.slane %v247, 5
  %v250 = vsel %vm36, %v245, %v249
  %v251 = vshrl.u32 %v29, 16
  %v253 = vrot.slane %v251, 4
  %v254 = vor.u32 %v253, %v249
  %v255 = vrot.slane %v254, 4
  %v257 = vshll.u32 %v30, 16
  %v259 = vrot.slane %v257, 5
  %v260 = vsel %vm36, %v255, %v259
  %v261 = vshrl.u32 %v30, 16
  %v263 = vrot.slane %v261, 4
  %v264 = vor.u32 %v263, %v259
  %v265 = vrot.slane %v264, 4
  %v267 = vshll.u32 %v31, 16
  %v269 = vrot.slane %v267, 5
  %v270 = vsel %vm36, %v265, %v269
  %v271 = vshrl.u32 %v31, 16
  %v273 = vrot.slane %v271, 4
  %v274 = vor.u32 %v273, %v269
  %v275 = vrot.slane %v274, 4
  %v277 = vshll.u32 %v32, 16
  %v279 = vrot.slane %v277, 5
  %v280 = vsel %vm36, %v275, %v279
  %v281 = vshrl.u32 %v32, 16
  %v283 = vrot.slane %v281, 4
  %v284 = vor.u32 %v283, %v279
  %v285 = vrot.slane %v284, 4
  %v287 = vshll.u32 %v33, 16
  %v289 = vrot.slane %v287, 5
  %v290 = vsel %vm36, %v285, %v289
  %v316 = vmax.bf16 %v8, %v50
  %v317 = vmax.bf16 %v9, %v60
  %v318 = vmax.bf16 %v10, %v70
  %v319 = vmax.bf16 %v11, %v80
  %v320 = vmax.bf16 %v12, %v90
  %v321 = vmax.bf16 %v13, %v100
  %v322 = vmax.bf16 %v14, %v110
  %v323 = vmax.bf16 %v15, %v120
  %v324 = vmax.bf16 %v16, %v130
  %v325 = vmax.bf16 %v17, %v140
  %v326 = vmax.bf16 %v18, %v150
  %v327 = vmax.bf16 %v19, %v160
  %v328 = vmax.bf16 %v20, %v170
  %v329 = vmax.bf16 %v21, %v180
  %v330 = vmax.bf16 %v22, %v190
  %v331 = vmax.bf16 %v23, %v200
  %v332 = vmax.bf16 %v24, %v210
  %v333 = vmax.bf16 %v25, %v220
  %v334 = vmax.bf16 %v26, %v230
  %v335 = vmax.bf16 %v27, %v240
  %v336 = vmax.bf16 %v28, %v250
  %v337 = vmax.bf16 %v29, %v260
  %v338 = vmax.bf16 %v30, %v270
  %v339 = vmax.bf16 %v31, %v280
  %v340 = vmax.bf16 %v32, %v290
  %v341 = vld [vmem:[%s0] sm:$0xe]
  %vm368 = vcmask 1042432
  %vm369 = vcmask 1046532
  %vm370 = vmor %vm368, %vm369
  %v371 = vrot.slane %v341, 5
  %v372 = vrot.slane %v371, 4
  %v373 = vrot.slane %v9, 5
  %v374 = vsel %vm370, %v372, %v373
  %v375 = vrot.slane %v373, 4
  %v376 = vrot.slane %v10, 5
  %v377 = vsel %vm370, %v375, %v376
  %v378 = vrot.slane %v376, 4
  %v379 = vrot.slane %v11, 5
  %v380 = vsel %vm370, %v378, %v379
  %v381 = vrot.slane %v379, 4
  %v382 = vrot.slane %v12, 5
  %v383 = vsel %vm370, %v381, %v382
  %v384 = vrot.slane %v382, 4
  %v385 = vrot.slane %v13, 5
  %v386 = vsel %vm370, %v384, %v385
  %v387 = vrot.slane %v385, 4
  %v388 = vrot.slane %v14, 5
  %v389 = vsel %vm370, %v387, %v388
  %v390 = vrot.slane %v388, 4
  %v391 = vrot.slane %v15, 5
  %v392 = vsel %vm370, %v390, %v391
  %v393 = vrot.slane %v391, 4
  %v394 = vrot.slane %v16, 5
  %v395 = vsel %vm370, %v393, %v394
  %v396 = vrot.slane %v394, 4
  %v397 = vrot.slane %v17, 5
  %v398 = vsel %vm370, %v396, %v397
  %v399 = vrot.slane %v397, 4
  %v400 = vrot.slane %v18, 5
  %v401 = vsel %vm370, %v399, %v400
  %v402 = vrot.slane %v400, 4
  %v403 = vrot.slane %v19, 5
  %v404 = vsel %vm370, %v402, %v403
  %v405 = vrot.slane %v403, 4
  %v406 = vrot.slane %v20, 5
  %v407 = vsel %vm370, %v405, %v406
  %v408 = vrot.slane %v406, 4
  %v409 = vrot.slane %v21, 5
  %v410 = vsel %vm370, %v408, %v409
  %v411 = vrot.slane %v409, 4
  %v412 = vrot.slane %v22, 5
  %v413 = vsel %vm370, %v411, %v412
  %v414 = vrot.slane %v412, 4
  %v415 = vrot.slane %v23, 5
  %v416 = vsel %vm370, %v414, %v415
  %v417 = vrot.slane %v415, 4
  %v418 = vrot.slane %v24, 5
  %v419 = vsel %vm370, %v417, %v418
  %v420 = vrot.slane %v418, 4
  %v421 = vrot.slane %v25, 5
  %v422 = vsel %vm370, %v420, %v421
  %v423 = vrot.slane %v421, 4
  %v424 = vrot.slane %v26, 5
  %v425 = vsel %vm370, %v423, %v424
  %v426 = vrot.slane %v424, 4
  %v427 = vrot.slane %v27, 5
  %v428 = vsel %vm370, %v426, %v427
  %v429 = vrot.slane %v427, 4
  %v430 = vrot.slane %v28, 5
  %v431 = vsel %vm370, %v429, %v430
  %v432 = vrot.slane %v430, 4
  %v433 = vrot.slane %v29, 5
  %v434 = vsel %vm370, %v432, %v433
  %v435 = vrot.slane %v433, 4
  %v436 = vrot.slane %v30, 5
  %v437 = vsel %vm370, %v435, %v436
  %v438 = vrot.slane %v436, 4
  %v439 = vrot.slane %v31, 5
  %v440 = vsel %vm370, %v438, %v439
  %v441 = vrot.slane %v439, 4
  %v442 = vrot.slane %v32, 5
  %v443 = vsel %vm370, %v441, %v442
  %v444 = vrot.slane %v442, 4
  %v445 = vrot.slane %v33, 5
  %v446 = vsel %vm370, %v444, %v445
  %v472 = vmax.bf16 %v316, %v374
  %v473 = vmax.bf16 %v317, %v377
  %v474 = vmax.bf16 %v318, %v380
  %v475 = vmax.bf16 %v319, %v383
  %v476 = vmax.bf16 %v320, %v386
  %v477 = vmax.bf16 %v321, %v389
  %v478 = vmax.bf16 %v322, %v392
  %v479 = vmax.bf16 %v323, %v395
  %v480 = vmax.bf16 %v324, %v398
  %v481 = vmax.bf16 %v325, %v401
  %v482 = vmax.bf16 %v326, %v404
  %v483 = vmax.bf16 %v327, %v407
  %v484 = vmax.bf16 %v328, %v410
  %v485 = vmax.bf16 %v329, %v413
  %v486 = vmax.bf16 %v330, %v416
  %v487 = vmax.bf16 %v331, %v419
  %v488 = vmax.bf16 %v332, %v422
  %v489 = vmax.bf16 %v333, %v425
  %v490 = vmax.bf16 %v334, %v428
  %v491 = vmax.bf16 %v335, %v431
  %v492 = vmax.bf16 %v336, %v434
  %v493 = vmax.bf16 %v337, %v437
  %v494 = vmax.bf16 %v338, %v440
  %v495 = vmax.bf16 %v339, %v443
  %v496 = vmax.bf16 %v340, %v446
  %v497 = vld [vmem:[%s0 + $0x4] sm:$0xe]
  %v498 = vld [vmem:[%s0 + $0x64] sm:$0xf]
  %v499 = vld [vmem:[%s0 + $0x68] sm:$0x1]
  %v503 = vrot.slane %v497, 5
  %v504 = vrot.slane %v503, 4
  %v505 = vsel %vm370, %v504, %v376
  %v506 = vrot.slane %v498, 5
  %v507 = vsel %vm370, %v444, %v506
  %v508 = vrot.slane %v506, 4
  %v509 = vrot.slane %v499, 5
  %v510 = vsel %vm370, %v508, %v509
  %v514 = vmax.bf16 %v472, %v505
  %v515 = vmax.bf16 %v473, %v380
  %v516 = vmax.bf16 %v474, %v383
  %v517 = vmax.bf16 %v475, %v386
  %v518 = vmax.bf16 %v476, %v389
  %v519 = vmax.bf16 %v477, %v392
  %v520 = vmax.bf16 %v478, %v395
  %v521 = vmax.bf16 %v479, %v398
  %v522 = vmax.bf16 %v480, %v401
  %v523 = vmax.bf16 %v481, %v404
  %v524 = vmax.bf16 %v482, %v407
  %v525 = vmax.bf16 %v483, %v410
  %v526 = vmax.bf16 %v484, %v413
  %v527 = vmax.bf16 %v485, %v416
  %v528 = vmax.bf16 %v486, %v419
  %v529 = vmax.bf16 %v487, %v422
  %v530 = vmax.bf16 %v488, %v425
  %v531 = vmax.bf16 %v489, %v428
  %v532 = vmax.bf16 %v490, %v431
  %v533 = vmax.bf16 %v491, %v434
  %v534 = vmax.bf16 %v492, %v437
  %v535 = vmax.bf16 %v493, %v440
  %v536 = vmax.bf16 %v494, %v443
  %v537 = vmax.bf16 %v495, %v507
  %v538 = vmax.bf16 %v496, %v510
  %v539 = vld [vmem:[%s0 + $0x68] sm:$0x3]
  %vm540 = vsmask.f32 2304
  %vm541 = vsmask.f32 6416
  %vm542 = vmor %vm540, %vm541
  %v544 = vshrl.u32 %v497, 16
  %v546 = vrot.slane %v544, 5
  %v547 = vshll.u32 %v497, 16
  %v549 = vrot.slane %v547, 6
  %v550 = vor.u32 %v546, %v549
  %v551 = vrot.slane %v550, 4
  %v552 = vrot.slane %v61, 5
  %v553 = vrot.slane %v57, 6
  %v554 = vor.u32 %v552, %v553
  %v555 = vsel %vm542, %v551, %v554
  %v556 = vrot.slane %v554, 4
  %v557 = vrot.slane %v71, 5
  %v558 = vrot.slane %v67, 6
  %v559 = vor.u32 %v557, %v558
  %v560 = vsel %vm542, %v556, %v559
  %v561 = vrot.slane %v559, 4
  %v562 = vrot.slane %v81, 5
  %v563 = vrot.slane %v77, 6
  %v564 = vor.u32 %v562, %v563
  %v565 = vsel %vm542, %v561, %v564
  %v566 = vrot.slane %v564, 4
  %v567 = vrot.slane %v91, 5
  %v568 = vrot.slane %v87, 6
  %v569 = vor.u32 %v567, %v568
  %v570 = vsel %vm542, %v566, %v569
  %v571 = vrot.slane %v569, 4
  %v572 = vrot.slane %v101, 5
  %v573 = vrot.slane %v97, 6
  %v574 = vor.u32 %v572, %v573
  %v575 = vsel %vm542, %v571, %v574
  %v576 = vrot.slane %v574, 4
  %v577 = vrot.slane %v111, 5
  %v578 = vrot.slane %v107, 6
  %v579 = vor.u32 %v577, %v578
  %v580 = vsel %vm542, %v576, %v579
  %v581 = vrot.slane %v579, 4
  %v582 = vrot.slane %v121, 5
  %v583 = vrot.slane %v117, 6
  %v584 = vor.u32 %v582, %v583
  %v585 = vsel %vm542, %v581, %v584
  %v586 = vrot.slane %v584, 4
  %v587 = vrot.slane %v131, 5
  %v588 = vrot.slane %v127, 6
  %v589 = vor.u32 %v587, %v588
  %v590 = vsel %vm542, %v586, %v589
  %v591 = vrot.slane %v589, 4
  %v592 = vrot.slane %v141, 5
  %v593 = vrot.slane %v137, 6
  %v594 = vor.u32 %v592, %v593
  %v595 = vsel %vm542, %v591, %v594
  %v596 = vrot.slane %v594, 4
  %v597 = vrot.slane %v151, 5
  %v598 = vrot.slane %v147, 6
  %v599 = vor.u32 %v597, %v598
  %v600 = vsel %vm542, %v596, %v599
  %v601 = vrot.slane %v599, 4
  %v602 = vrot.slane %v161, 5
  %v603 = vrot.slane %v157, 6
  %v604 = vor.u32 %v602, %v603
  %v605 = vsel %vm542, %v601, %v604
  %v606 = vrot.slane %v604, 4
  %v607 = vrot.slane %v171, 5
  %v608 = vrot.slane %v167, 6
  %v609 = vor.u32 %v607, %v608
  %v610 = vsel %vm542, %v606, %v609
  %v611 = vrot.slane %v609, 4
  %v612 = vrot.slane %v181, 5
  %v613 = vrot.slane %v177, 6
  %v614 = vor.u32 %v612, %v613
  %v615 = vsel %vm542, %v611, %v614
  %v616 = vrot.slane %v614, 4
  %v617 = vrot.slane %v191, 5
  %v618 = vrot.slane %v187, 6
  %v619 = vor.u32 %v617, %v618
  %v620 = vsel %vm542, %v616, %v619
  %v621 = vrot.slane %v619, 4
  %v622 = vrot.slane %v201, 5
  %v623 = vrot.slane %v197, 6
  %v624 = vor.u32 %v622, %v623
  %v625 = vsel %vm542, %v621, %v624
  %v626 = vrot.slane %v624, 4
  %v627 = vrot.slane %v211, 5
  %v628 = vrot.slane %v207, 6
  %v629 = vor.u32 %v627, %v628
  %v630 = vsel %vm542, %v626, %v629
  %v631 = vrot.slane %v629, 4
  %v632 = vrot.slane %v221, 5
  %v633 = vrot.slane %v217, 6
  %v634 = vor.u32 %v632, %v633
  %v635 = vsel %vm542, %v631, %v634
  %v636 = vrot.slane %v634, 4
  %v637 = vrot.slane %v231, 5
  %v638 = vrot.slane %v227, 6
  %v639 = vor.u32 %v637, %v638
  %v640 = vsel %vm542, %v636, %v639
  %v641 = vrot.slane %v639, 4
  %v642 = vrot.slane %v241, 5
  %v643 = vrot.slane %v237, 6
  %v644 = vor.u32 %v642, %v643
  %v645 = vsel %vm542, %v641, %v644
  %v646 = vrot.slane %v644, 4
  %v647 = vrot.slane %v251, 5
  %v648 = vrot.slane %v247, 6
  %v649 = vor.u32 %v647, %v648
  %v650 = vsel %vm542, %v646, %v649
  %v651 = vrot.slane %v649, 4
  %v652 = vrot.slane %v261, 5
  %v653 = vrot.slane %v257, 6
  %v654 = vor.u32 %v652, %v653
  %v655 = vsel %vm542, %v651, %v654
  %v656 = vrot.slane %v654, 4
  %v657 = vrot.slane %v271, 5
  %v658 = vrot.slane %v267, 6
  %v659 = vor.u32 %v657, %v658
  %v660 = vsel %vm542, %v656, %v659
  %v661 = vrot.slane %v659, 4
  %v662 = vrot.slane %v281, 5
  %v663 = vrot.slane %v277, 6
  %v664 = vor.u32 %v662, %v663
  %v665 = vsel %vm542, %v661, %v664
  %v666 = vrot.slane %v664, 4
  %v668 = vshrl.u32 %v498, 16
  %v670 = vrot.slane %v668, 5
  %v671 = vshll.u32 %v498, 16
  %v673 = vrot.slane %v671, 6
  %v674 = vor.u32 %v670, %v673
  %v675 = vsel %vm542, %v666, %v674
  %v676 = vrot.slane %v674, 4
  %v678 = vshrl.u32 %v539, 16
  %v680 = vrot.slane %v678, 5
  %v681 = vshll.u32 %v539, 16
  %v683 = vrot.slane %v681, 6
  %v684 = vor.u32 %v680, %v683
  %v685 = vsel %vm542, %v676, %v684
  %v711 = vmax.bf16 %v514, %v555
  %v712 = vmax.bf16 %v515, %v560
  %v713 = vmax.bf16 %v516, %v565
  %v714 = vmax.bf16 %v517, %v570
  %v715 = vmax.bf16 %v518, %v575
  %v716 = vmax.bf16 %v519, %v580
  %v717 = vmax.bf16 %v520, %v585
  %v718 = vmax.bf16 %v521, %v590
  %v719 = vmax.bf16 %v522, %v595
  %v720 = vmax.bf16 %v523, %v600
  %v721 = vmax.bf16 %v524, %v605
  %v722 = vmax.bf16 %v525, %v610
  %v723 = vmax.bf16 %v526, %v615
  %v724 = vmax.bf16 %v527, %v620
  %v725 = vmax.bf16 %v528, %v625
  %v726 = vmax.bf16 %v529, %v630
  %v727 = vmax.bf16 %v530, %v635
  %v728 = vmax.bf16 %v531, %v640
  %v729 = vmax.bf16 %v532, %v645
  %v730 = vmax.bf16 %v533, %v650
  %v731 = vmax.bf16 %v534, %v655
  %v732 = vmax.bf16 %v535, %v660
  %v733 = vmax.bf16 %v536, %v665
  %v734 = vmax.bf16 %v537, %v675
  %v735 = vmax.bf16 %v538, %v685
  %v736 = vld [vmem:[%s0 + $0x4] sm:$0xc]
  %vm739 = vcmask 1041408
  %vm740 = vcmask 1045508
  %vm741 = vmor %vm739, %vm740
  %v742 = vrot.slane %v736, 6
  %v743 = vrot.slane %v742, 4
  %v744 = vrot.slane %v10, 6
  %v745 = vsel %vm741, %v743, %v744
  %v746 = vrot.slane %v744, 4
  %v747 = vrot.slane %v11, 6
  %v748 = vsel %vm741, %v746, %v747
  %v749 = vrot.slane %v747, 4
  %v750 = vrot.slane %v12, 6
  %v751 = vsel %vm741, %v749, %v750
  %v752 = vrot.slane %v750, 4
  %v753 = vrot.slane %v13, 6
  %v754 = vsel %vm741, %v752, %v753
  %v755 = vrot.slane %v753, 4
  %v756 = vrot.slane %v14, 6
  %v757 = vsel %vm741, %v755, %v756
  %v758 = vrot.slane %v756, 4
  %v759 = vrot.slane %v15, 6
  %v760 = vsel %vm741, %v758, %v759
  %v761 = vrot.slane %v759, 4
  %v762 = vrot.slane %v16, 6
  %v763 = vsel %vm741, %v761, %v762
  %v764 = vrot.slane %v762, 4
  %v765 = vrot.slane %v17, 6
  %v766 = vsel %vm741, %v764, %v765
  %v767 = vrot.slane %v765, 4
  %v768 = vrot.slane %v18, 6
  %v769 = vsel %vm741, %v767, %v768
  %v770 = vrot.slane %v768, 4
  %v771 = vrot.slane %v19, 6
  %v772 = vsel %vm741, %v770, %v771
  %v773 = vrot.slane %v771, 4
  %v774 = vrot.slane %v20, 6
  %v775 = vsel %vm741, %v773, %v774
  %v776 = vrot.slane %v774, 4
  %v777 = vrot.slane %v21, 6
  %v778 = vsel %vm741, %v776, %v777
  %v779 = vrot.slane %v777, 4
  %v780 = vrot.slane %v22, 6
  %v781 = vsel %vm741, %v779, %v780
  %v782 = vrot.slane %v780, 4
  %v783 = vrot.slane %v23, 6
  %v784 = vsel %vm741, %v782, %v783
  %v785 = vrot.slane %v783, 4
  %v786 = vrot.slane %v24, 6
  %v787 = vsel %vm741, %v785, %v786
  %v788 = vrot.slane %v786, 4
  %v789 = vrot.slane %v25, 6
  %v790 = vsel %vm741, %v788, %v789
  %v791 = vrot.slane %v789, 4
  %v792 = vrot.slane %v26, 6
  %v793 = vsel %vm741, %v791, %v792
  %v794 = vrot.slane %v792, 4
  %v795 = vrot.slane %v27, 6
  %v796 = vsel %vm741, %v794, %v795
  %v797 = vrot.slane %v795, 4
  %v798 = vrot.slane %v28, 6
  %v799 = vsel %vm741, %v797, %v798
  %v800 = vrot.slane %v798, 4
  %v801 = vrot.slane %v29, 6
  %v802 = vsel %vm741, %v800, %v801
  %v803 = vrot.slane %v801, 4
  %v804 = vrot.slane %v30, 6
  %v805 = vsel %vm741, %v803, %v804
  %v806 = vrot.slane %v804, 4
  %v807 = vrot.slane %v31, 6
  %v808 = vsel %vm741, %v806, %v807
  %v809 = vrot.slane %v807, 4
  %v810 = vrot.slane %v32, 6
  %v811 = vsel %vm741, %v809, %v810
  %v812 = vrot.slane %v810, 4
  %v813 = vrot.slane %v498, 6
  %v814 = vsel %vm741, %v812, %v813
  %v815 = vrot.slane %v813, 4
  %v816 = vrot.slane %v539, 6
  %v817 = vsel %vm741, %v815, %v816
  %v843 = vmax.bf16 %v711, %v745
  %v844 = vmax.bf16 %v712, %v748
  %v845 = vmax.bf16 %v713, %v751
  %v846 = vmax.bf16 %v714, %v754
  %v847 = vmax.bf16 %v715, %v757
  %v848 = vmax.bf16 %v716, %v760
  %v849 = vmax.bf16 %v717, %v763
  %v850 = vmax.bf16 %v718, %v766
  %v851 = vmax.bf16 %v719, %v769
  %v852 = vmax.bf16 %v720, %v772
  %v853 = vmax.bf16 %v721, %v775
  %v854 = vmax.bf16 %v722, %v778
  %v855 = vmax.bf16 %v723, %v781
  %v856 = vmax.bf16 %v724, %v784
  %v857 = vmax.bf16 %v725, %v787
  %v858 = vmax.bf16 %v726, %v790
  %v859 = vmax.bf16 %v727, %v793
  %v860 = vmax.bf16 %v728, %v796
  %v861 = vmax.bf16 %v729, %v799
  %v862 = vmax.bf16 %v730, %v802
  %v863 = vmax.bf16 %v731, %v805
  %v864 = vmax.bf16 %v732, %v808
  %v865 = vmax.bf16 %v733, %v811
  %v866 = vmax.bf16 %v734, %v814
  %v867 = vmax.bf16 %v735, %v817
  %v868 = vld [vmem:[%s0 + $0x8] sm:$0xc]
  %v869 = vld [vmem:[%s0 + $0x68] sm:$0xf]
  %v870 = vld [vmem:[%s0 + $0x6c] sm:$0x3]
  %v874 = vrot.slane %v868, 6
  %v875 = vrot.slane %v874, 4
  %v876 = vsel %vm741, %v875, %v747
  %v877 = vrot.slane %v869, 6
  %v878 = vsel %vm741, %v815, %v877
  %v879 = vrot.slane %v877, 4
  %v880 = vrot.slane %v870, 6
  %v881 = vsel %vm741, %v879, %v880
  %v885 = vmax.bf16 %v843, %v876
  %v886 = vmax.bf16 %v844, %v751
  %v887 = vmax.bf16 %v845, %v754
  %v888 = vmax.bf16 %v846, %v757
  %v889 = vmax.bf16 %v847, %v760
  %v890 = vmax.bf16 %v848, %v763
  %v891 = vmax.bf16 %v849, %v766
  %v892 = vmax.bf16 %v850, %v769
  %v893 = vmax.bf16 %v851, %v772
  %v894 = vmax.bf16 %v852, %v775
  %v895 = vmax.bf16 %v853, %v778
  %v896 = vmax.bf16 %v854, %v781
  %v897 = vmax.bf16 %v855, %v784
  %v898 = vmax.bf16 %v856, %v787
  %v899 = vmax.bf16 %v857, %v790
  %v900 = vmax.bf16 %v858, %v793
  %v901 = vmax.bf16 %v859, %v796
  %v902 = vmax.bf16 %v860, %v799
  %v903 = vmax.bf16 %v861, %v802
  %v904 = vmax.bf16 %v862, %v805
  %v905 = vmax.bf16 %v863, %v808
  %v906 = vmax.bf16 %v864, %v811
  %v907 = vmax.bf16 %v865, %v814
  %v908 = vmax.bf16 %v866, %v878
  %v909 = vmax.bf16 %v867, %v881
  %v910 = vld [vmem:[%s0 + $0x6c] sm:$0x7]
  %vm911 = vsmask.f32 1280
  %vm912 = vsmask.f32 5392
  %vm913 = vmor %vm911, %vm912
  %v915 = vshrl.u32 %v868, 16
  %v917 = vrot.slane %v915, 6
  %v918 = vshll.u32 %v868, 16
  %v920 = vrot.slane %v918, 7
  %v921 = vor.u32 %v917, %v920
  %v922 = vrot.slane %v921, 4
  %v923 = vrot.slane %v71, 6
  %v924 = vrot.slane %v67, 7
  %v925 = vor.u32 %v923, %v924
  %v926 = vsel %vm913, %v922, %v925
  %v927 = vrot.slane %v925, 4
  %v928 = vrot.slane %v81, 6
  %v929 = vrot.slane %v77, 7
  %v930 = vor.u32 %v928, %v929
  %v931 = vsel %vm913, %v927, %v930
  %v932 = vrot.slane %v930, 4
  %v933 = vrot.slane %v91, 6
  %v934 = vrot.slane %v87, 7
  %v935 = vor.u32 %v933, %v934
  %v936 = vsel %vm913, %v932, %v935
  %v937 = vrot.slane %v935, 4
  %v938 = vrot.slane %v101, 6
  %v939 = vrot.slane %v97, 7
  %v940 = vor.u32 %v938, %v939
  %v941 = vsel %vm913, %v937, %v940
  %v942 = vrot.slane %v940, 4
  %v943 = vrot.slane %v111, 6
  %v944 = vrot.slane %v107, 7
  %v945 = vor.u32 %v943, %v944
  %v946 = vsel %vm913, %v942, %v945
  %v947 = vrot.slane %v945, 4
  %v948 = vrot.slane %v121, 6
  %v949 = vrot.slane %v117, 7
  %v950 = vor.u32 %v948, %v949
  %v951 = vsel %vm913, %v947, %v950
  %v952 = vrot.slane %v950, 4
  %v953 = vrot.slane %v131, 6
  %v954 = vrot.slane %v127, 7
  %v955 = vor.u32 %v953, %v954
  %v956 = vsel %vm913, %v952, %v955
  %v957 = vrot.slane %v955, 4
  %v958 = vrot.slane %v141, 6
  %v959 = vrot.slane %v137, 7
  %v960 = vor.u32 %v958, %v959
  %v961 = vsel %vm913, %v957, %v960
  %v962 = vrot.slane %v960, 4
  %v963 = vrot.slane %v151, 6
  %v964 = vrot.slane %v147, 7
  %v965 = vor.u32 %v963, %v964
  %v966 = vsel %vm913, %v962, %v965
  %v967 = vrot.slane %v965, 4
  %v968 = vrot.slane %v161, 6
  %v969 = vrot.slane %v157, 7
  %v970 = vor.u32 %v968, %v969
  %v971 = vsel %vm913, %v967, %v970
  %v972 = vrot.slane %v970, 4
  %v973 = vrot.slane %v171, 6
  %v974 = vrot.slane %v167, 7
  %v975 = vor.u32 %v973, %v974
  %v976 = vsel %vm913, %v972, %v975
  %v977 = vrot.slane %v975, 4
  %v978 = vrot.slane %v181, 6
  %v979 = vrot.slane %v177, 7
  %v980 = vor.u32 %v978, %v979
  %v981 = vsel %vm913, %v977, %v980
  %v982 = vrot.slane %v980, 4
  %v983 = vrot.slane %v191, 6
  %v984 = vrot.slane %v187, 7
  %v985 = vor.u32 %v983, %v984
  %v986 = vsel %vm913, %v982, %v985
  %v987 = vrot.slane %v985, 4
  %v988 = vrot.slane %v201, 6
  %v989 = vrot.slane %v197, 7
  %v990 = vor.u32 %v988, %v989
  %v991 = vsel %vm913, %v987, %v990
  %v992 = vrot.slane %v990, 4
  %v993 = vrot.slane %v211, 6
  %v994 = vrot.slane %v207, 7
  %v995 = vor.u32 %v993, %v994
  %v996 = vsel %vm913, %v992, %v995
  %v997 = vrot.slane %v995, 4
  %v998 = vrot.slane %v221, 6
  %v999 = vrot.slane %v217, 7
  %v1000 = vor.u32 %v998, %v999
  %v1001 = vsel %vm913, %v997, %v1000
  %v1002 = vrot.slane %v1000, 4
  %v1003 = vrot.slane %v231, 6
  %v1004 = vrot.slane %v227, 7
  %v1005 = vor.u32 %v1003, %v1004
  %v1006 = vsel %vm913, %v1002, %v1005
  %v1007 = vrot.slane %v1005, 4
  %v1008 = vrot.slane %v241, 6
  %v1009 = vrot.slane %v237, 7
  %v1010 = vor.u32 %v1008, %v1009
  %v1011 = vsel %vm913, %v1007, %v1010
  %v1012 = vrot.slane %v1010, 4
  %v1013 = vrot.slane %v251, 6
  %v1014 = vrot.slane %v247, 7
  %v1015 = vor.u32 %v1013, %v1014
  %v1016 = vsel %vm913, %v1012, %v1015
  %v1017 = vrot.slane %v1015, 4
  %v1018 = vrot.slane %v261, 6
  %v1019 = vrot.slane %v257, 7
  %v1020 = vor.u32 %v1018, %v1019
  %v1021 = vsel %vm913, %v1017, %v1020
  %v1022 = vrot.slane %v1020, 4
  %v1023 = vrot.slane %v271, 6
  %v1024 = vrot.slane %v267, 7
  %v1025 = vor.u32 %v1023, %v1024
  %v1026 = vsel %vm913, %v1022, %v1025
  %v1027 = vrot.slane %v1025, 4
  %v1028 = vrot.slane %v281, 6
  %v1029 = vrot.slane %v277, 7
  %v1030 = vor.u32 %v1028, %v1029
  %v1031 = vsel %vm913, %v1027, %v1030
  %v1032 = vrot.slane %v1030, 4
  %v1033 = vrot.slane %v668, 6
  %v1034 = vrot.slane %v671, 7
  %v1035 = vor.u32 %v1033, %v1034
  %v1036 = vsel %vm913, %v1032, %v1035
  %v1037 = vrot.slane %v1035, 4
  %v1039 = vshrl.u32 %v869, 16
  %v1041 = vrot.slane %v1039, 6
  %v1042 = vshll.u32 %v869, 16
  %v1044 = vrot.slane %v1042, 7
  %v1045 = vor.u32 %v1041, %v1044
  %v1046 = vsel %vm913, %v1037, %v1045
  %v1047 = vrot.slane %v1045, 4
  %v1049 = vshrl.u32 %v910, 16
  %v1051 = vrot.slane %v1049, 6
  %v1052 = vshll.u32 %v910, 16
  %v1054 = vrot.slane %v1052, 7
  %v1055 = vor.u32 %v1051, %v1054
  %v1056 = vsel %vm913, %v1047, %v1055
  %v1082 = vmax.bf16 %v885, %v926
  %v1083 = vmax.bf16 %v886, %v931
  %v1084 = vmax.bf16 %v887, %v936
  %v1085 = vmax.bf16 %v888, %v941
  %v1086 = vmax.bf16 %v889, %v946
  %v1087 = vmax.bf16 %v890, %v951
  %v1088 = vmax.bf16 %v891, %v956
  %v1089 = vmax.bf16 %v892, %v961
  %v1090 = vmax.bf16 %v893, %v966
  %v1091 = vmax.bf16 %v894, %v971
  %v1092 = vmax.bf16 %v895, %v976
  %v1093 = vmax.bf16 %v896, %v981
  %v1094 = vmax.bf16 %v897, %v986
  %v1095 = vmax.bf16 %v898, %v991
  %v1096 = vmax.bf16 %v899, %v996
  %v1097 = vmax.bf16 %v900, %v1001
  %v1098 = vmax.bf16 %v901, %v1006
  %v1099 = vmax.bf16 %v902, %v1011
  %v1100 = vmax.bf16 %v903, %v1016
  %v1101 = vmax.bf16 %v904, %v1021
  %v1102 = vmax.bf16 %v905, %v1026
  %v1103 = vmax.bf16 %v906, %v1031
  %v1104 = vmax.bf16 %v907, %v1036
  %v1105 = vmax.bf16 %v908, %v1046
  %v1106 = vmax.bf16 %v909, %v1056
  %v1107 = vld [vmem:[%s0 + $0x8] sm:$0x8]
  %vm1110 = vcmask 1040384
  %vm1111 = vcmask 1044484
  %vm1112 = vmor %vm1110, %vm1111
  %v1113 = vrot.slane %v1107, 7
  %v1114 = vrot.slane %v1113, 4
  %v1115 = vrot.slane %v11, 7
  %v1116 = vsel %vm1112, %v1114, %v1115
  %v1117 = vrot.slane %v1115, 4
  %v1118 = vrot.slane %v12, 7
  %v1119 = vsel %vm1112, %v1117, %v1118
  %v1120 = vrot.slane %v1118, 4
  %v1121 = vrot.slane %v13, 7
  %v1122 = vsel %vm1112, %v1120, %v1121
  %v1123 = vrot.slane %v1121, 4
  %v1124 = vrot.slane %v14, 7
  %v1125 = vsel %vm1112, %v1123, %v1124
  %v1126 = vrot.slane %v1124, 4
  %v1127 = vrot.slane %v15, 7
  %v1128 = vsel %vm1112, %v1126, %v1127
  %v1129 = vrot.slane %v1127, 4
  %v1130 = vrot.slane %v16, 7
  %v1131 = vsel %vm1112, %v1129, %v1130
  %v1132 = vrot.slane %v1130, 4
  %v1133 = vrot.slane %v17, 7
  %v1134 = vsel %vm1112, %v1132, %v1133
  %v1135 = vrot.slane %v1133, 4
  %v1136 = vrot.slane %v18, 7
  %v1137 = vsel %vm1112, %v1135, %v1136
  %v1138 = vrot.slane %v1136, 4
  %v1139 = vrot.slane %v19, 7
  %v1140 = vsel %vm1112, %v1138, %v1139
  %v1141 = vrot.slane %v1139, 4
  %v1142 = vrot.slane %v20, 7
  %v1143 = vsel %vm1112, %v1141, %v1142
  %v1144 = vrot.slane %v1142, 4
  %v1145 = vrot.slane %v21, 7
  %v1146 = vsel %vm1112, %v1144, %v1145
  %v1147 = vrot.slane %v1145, 4
  %v1148 = vrot.slane %v22, 7
  %v1149 = vsel %vm1112, %v1147, %v1148
  %v1150 = vrot.slane %v1148, 4
  %v1151 = vrot.slane %v23, 7
  %v1152 = vsel %vm1112, %v1150, %v1151
  %v1153 = vrot.slane %v1151, 4
  %v1154 = vrot.slane %v24, 7
  %v1155 = vsel %vm1112, %v1153, %v1154
  %v1156 = vrot.slane %v1154, 4
  %v1157 = vrot.slane %v25, 7
  %v1158 = vsel %vm1112, %v1156, %v1157
  %v1159 = vrot.slane %v1157, 4
  %v1160 = vrot.slane %v26, 7
  %v1161 = vsel %vm1112, %v1159, %v1160
  %v1162 = vrot.slane %v1160, 4
  %v1163 = vrot.slane %v27, 7
  %v1164 = vsel %vm1112, %v1162, %v1163
  %v1165 = vrot.slane %v1163, 4
  %v1166 = vrot.slane %v28, 7
  %v1167 = vsel %vm1112, %v1165, %v1166
  %v1168 = vrot.slane %v1166, 4
  %v1169 = vrot.slane %v29, 7
  %v1170 = vsel %vm1112, %v1168, %v1169
  %v1171 = vrot.slane %v1169, 4
  %v1172 = vrot.slane %v30, 7
  %v1173 = vsel %vm1112, %v1171, %v1172
  %v1174 = vrot.slane %v1172, 4
  %v1175 = vrot.slane %v31, 7
  %v1176 = vsel %vm1112, %v1174, %v1175
  %v1177 = vrot.slane %v1175, 4
  %v1178 = vrot.slane %v32, 7
  %v1179 = vsel %vm1112, %v1177, %v1178
  %v1180 = vrot.slane %v1178, 4
  %v1181 = vrot.slane %v498, 7
  %v1182 = vsel %vm1112, %v1180, %v1181
  %v1183 = vrot.slane %v1181, 4
  %v1184 = vrot.slane %v869, 7
  %v1185 = vsel %vm1112, %v1183, %v1184
  %v1186 = vrot.slane %v1184, 4
  %v1187 = vrot.slane %v910, 7
  %v1188 = vsel %vm1112, %v1186, %v1187
  %v1214 = vmax.bf16 %v1082, %v1116
  %v1215 = vmax.bf16 %v1083, %v1119
  %v1216 = vmax.bf16 %v1084, %v1122
  %v1217 = vmax.bf16 %v1085, %v1125
  %v1218 = vmax.bf16 %v1086, %v1128
  %v1219 = vmax.bf16 %v1087, %v1131
  %v1220 = vmax.bf16 %v1088, %v1134
  %v1221 = vmax.bf16 %v1089, %v1137
  %v1222 = vmax.bf16 %v1090, %v1140
  %v1223 = vmax.bf16 %v1091, %v1143
  %v1224 = vmax.bf16 %v1092, %v1146
  %v1225 = vmax.bf16 %v1093, %v1149
  %v1226 = vmax.bf16 %v1094, %v1152
  %v1227 = vmax.bf16 %v1095, %v1155
  %v1228 = vmax.bf16 %v1096, %v1158
  %v1229 = vmax.bf16 %v1097, %v1161
  %v1230 = vmax.bf16 %v1098, %v1164
  %v1231 = vmax.bf16 %v1099, %v1167
  %v1232 = vmax.bf16 %v1100, %v1170
  %v1233 = vmax.bf16 %v1101, %v1173
  %v1234 = vmax.bf16 %v1102, %v1176
  %v1235 = vmax.bf16 %v1103, %v1179
  %v1236 = vmax.bf16 %v1104, %v1182
  %v1237 = vmax.bf16 %v1105, %v1185
  %v1238 = vmax.bf16 %v1106, %v1188
  %vm1239 = vcmask 125952
  %1240 = vst.msk [vmem:[%s1] sm:$0xf] %vm1239, %v1214
  %1241 = vst.msk [vmem:[%s1 + $0x4] sm:$0xf] %vm1239, %v1215
  %1242 = vst.msk [vmem:[%s1 + $0x8] sm:$0xf] %vm1239, %v1216
  %1243 = vst.msk [vmem:[%s1 + $0xc] sm:$0xf] %vm1239, %v1217
  %1244 = vst.msk [vmem:[%s1 + $0x10] sm:$0xf] %vm1239, %v1218
  %1245 = vst.msk [vmem:[%s1 + $0x14] sm:$0xf] %vm1239, %v1219
  %1246 = vst.msk [vmem:[%s1 + $0x18] sm:$0xf] %vm1239, %v1220
  %1247 = vst.msk [vmem:[%s1 + $0x1c] sm:$0xf] %vm1239, %v1221
  %1248 = vst.msk [vmem:[%s1 + $0x20] sm:$0xf] %vm1239, %v1222
  %1249 = vst.msk [vmem:[%s1 + $0x24] sm:$0xf] %vm1239, %v1223
  %1250 = vst.msk [vmem:[%s1 + $0x28] sm:$0xf] %vm1239, %v1224
  %1251 = vst.msk [vmem:[%s1 + $0x2c] sm:$0xf] %vm1239, %v1225
  %1252 = vst.msk [vmem:[%s1 + $0x30] sm:$0xf] %vm1239, %v1226
  %1253 = vst.msk [vmem:[%s1 + $0x34] sm:$0xf] %vm1239, %v1227
  %1254 = vst.msk [vmem:[%s1 + $0x38] sm:$0xf] %vm1239, %v1228
  %1255 = vst.msk [vmem:[%s1 + $0x3c] sm:$0xf] %vm1239, %v1229
  %1256 = vst.msk [vmem:[%s1 + $0x40] sm:$0xf] %vm1239, %v1230
  %1257 = vst.msk [vmem:[%s1 + $0x44] sm:$0xf] %vm1239, %v1231
  %1258 = vst.msk [vmem:[%s1 + $0x48] sm:$0xf] %vm1239, %v1232
  %1259 = vst.msk [vmem:[%s1 + $0x4c] sm:$0xf] %vm1239, %v1233
  %1260 = vst.msk [vmem:[%s1 + $0x50] sm:$0xf] %vm1239, %v1234
  %1261 = vst.msk [vmem:[%s1 + $0x54] sm:$0xf] %vm1239, %v1235
  %1262 = vst.msk [vmem:[%s1 + $0x58] sm:$0xf] %vm1239, %v1236
  %1263 = vst.msk [vmem:[%s1 + $0x5c] sm:$0xf] %vm1239, %v1237
  %1264 = vst.msk [vmem:[%s1 + $0x60] sm:$0xf] %vm1239, %v1238
  // Predicated region
  $region6: #{densenet_forward.14} parent=0 // pred_check
    _
  $region7: #{densenet_forward.14} parent=0 // pred_check_branch
    %1266 = sbr.rel (0) target = $region9
  $region8: #{densenet_forward.14} parent=0 // pred_region
    _
  $region9: #{densenet_forward.14} parent=0 // pred_fallthru
    _
  // Predicated region
  $region10: #{densenet_forward.14} parent=0 // pred_check
    _
  $region11: #{densenet_forward.14} parent=0 // pred_check_branch
    %1268 = sbr.rel (0) target = $region13
  $region12: #{densenet_forward.14} parent=0 // pred_region
    _
  $region13: #{densenet_forward.14} parent=0 // pred_fallthru
    _

// kernel: densenet_forward.17
$region0: #{densenet_forward.17}
  #allocation0 [shape = 'u32[]', space=smem, size = 0x4, offset = 0x4, fixed_abs, tag = 'smem constant byte address 0x4 - core index']
  #allocation1 [shape = 'u32[144,128]{1,0:T(1,128)}', space=vmem, size = 0x12000, scoped, tag = 'internal scratch']
  #allocation2 [shape = 'f32[32,128]{1,0:T(8,128)}', space=vmem, size = 0x4000, scoped, tag = 'scratch operand']
  %s0 = inlined_call_operand.vmem [shape: bf16[32,24], index: 0, kind: input, shape index: {}]
  %s1 = inlined_call_operand.vmem [shape: bf16[24,128], index: 1, kind: input, shape index: {}]
  %s2 = inlined_call_operand.vmem [shape: f32[1,24], index: 2, kind: input, shape index: {}]
  %s3 = inlined_call_operand.vmem [shape: f32[1,24], index: 3, kind: input, shape index: {}]
  %s4 = inlined_call_operand.vmem [shape: f32[1,128], index: 4, kind: input, shape index: {}]
  %s5 = inlined_call_operand.vmem [shape: f32[1,128], index: 5, kind: input, shape index: {}]
  %s6 = inlined_call_operand.vmem [shape: bf16[32,128], index: 6, kind: output, shape index: {}]
  %s7 = sld [smem:[#allocation0]]
  $region42: #{densenet_forward.17} parent=0
    _
  %s9 = ssub.s32 1, %s7
  %s10 = scalar_select 0, %s9, %s7
  // Predicated region
  $region2: #{densenet_forward.17} parent=0 // pred_check
    _
  $region3: #{densenet_forward.17} parent=0 // pred_check_branch
    %12 = sbr.rel (0) target = $region5
  $region4: #{densenet_forward.17} parent=0 // pred_region
    _
  $region5: #{densenet_forward.17} parent=0 // pred_fallthru
    _
  // Predicated region
  $region6: #{densenet_forward.17} parent=0 // pred_check
    _
  $region7: #{densenet_forward.17} parent=0 // pred_check_branch
    %14 = sbr.rel (0) target = $region9
  $region8: #{densenet_forward.17} parent=0 // pred_region
    _
  $region9: #{densenet_forward.17} parent=0 // pred_fallthru
    _
  // Predicated region
  $region10: #{densenet_forward.17} parent=0 // pred_check
    _
  $region11: #{densenet_forward.17} parent=0 // pred_check_branch
    %16 = sbr.rel (0) target = $region13
  $region12: #{densenet_forward.17} parent=0 // pred_region
    _
  $region13: #{densenet_forward.17} parent=0 // pred_fallthru
    _
  // Predicated region
  $region14: #{densenet_forward.17} parent=0 // pred_check
    _
  $region15: #{densenet_forward.17} parent=0 // pred_check_branch
    %18 = sbr.rel (0) target = $region17
  $region16: #{densenet_forward.17} parent=0 // pred_region
    _
  $region17: #{densenet_forward.17} parent=0 // pred_fallthru
    _
  // Predicated region
  $region18: #{densenet_forward.17} parent=0 // pred_check
    _
  $region19: #{densenet_forward.17} parent=0 // pred_check_branch
    %20 = sbr.rel (0) target = $region21
  $region20: #{densenet_forward.17} parent=0 // pred_region
    _
  $region21: #{densenet_forward.17} parent=0 // pred_fallthru
    _
  // Predicated region
  $region22: #{densenet_forward.17} parent=0 // pred_check
    _
  $region23: #{densenet_forward.17} parent=0 // pred_check_branch
    %22 = sbr.rel (0) target = $region25
  $region24: #{densenet_forward.17} parent=0 // pred_region
    _
  $region25: #{densenet_forward.17} parent=0 // pred_fallthru
    _
  %p24 = scmp.eq.s32.totalorder 0, 0
  // Predicated region
  $region26: #{densenet_forward.17} parent=0 // pred_check
    %p25 = pneg %p24
  $region27: #{densenet_forward.17} parent=0 // pred_check_branch
    %27 = sbr.rel (%p25) target = $region29
  $region28: #{densenet_forward.17} parent=0 // pred_region
    %28 = vst [vmem:[#allocation2] sm:$0xff] 0.0
    %29 = vst [vmem:[#allocation2 + $0x8] sm:$0xff] 0.0
    %30 = vst [vmem:[#allocation2 + $0x10] sm:$0xff] 0.0
    %31 = vst [vmem:[#allocation2 + $0x18] sm:$0xff] 0.0
  $region29: #{densenet_forward.17} parent=0 // pred_fallthru
    _
  %v32 = vld [vmem:[%s0] sm:$0xf]
  %v33 = vld [vmem:[%s0 + $0x4] sm:$0xf]
  %v34 = vld [vmem:[%s0 + $0x8] sm:$0xf]
  %v35 = vld [vmem:[%s0 + $0xc] sm:$0xf]
  %v36 = vunpack.c.l.bf16 %v32
  %v37 = vunpack.c.l.bf16 %v33
  %v38 = vunpack.c.l.bf16 %v34
  %v39 = vunpack.c.l.bf16 %v35
  %v40 = vld [vmem:[%s2] sm:$0x1]
  %v42 = vlaneseq
  %v43 = vshrl.u32 %v42, 7
  %v44 = vsub.s32 0, %v43
  %v45 = vrot.slane %v40, %v44
  %v47 = vmul.f32 %v36, %v45
  %v48 = vmul.f32 %v37, %v45
  %v49 = vmul.f32 %v38, %v45
  %v50 = vmul.f32 %v39, %v45
  %v51 = vld [vmem:[%s3] sm:$0x1]
  %v53 = vlaneseq
  %v54 = vshrl.u32 %v53, 7
  %v55 = vsub.s32 0, %v54
  %v56 = vrot.slane %v51, %v55
  %v58 = vadd.f32 %v47, %v56
  %v59 = vadd.f32 %v48, %v56
  %v60 = vadd.f32 %v49, %v56
  %v61 = vadd.f32 %v50, %v56
  %v62 = vmax.f32 %v58, 0.0
  %v63 = vmax.f32 %v59, 0.0
  %v64 = vmax.f32 %v60, 0.0
  %v65 = vmax.f32 %v61, 0.0
  %v66 = vpack.c.bf16 %v63, %v62
  %v67 = vpack.c.bf16 %v65, %v64
  %v68 = vld [vmem:[#allocation2] sm:$0xff]
  %v69 = vld [vmem:[#allocation2 + $0x8] sm:$0xff]
  %v70 = vld [vmem:[#allocation2 + $0x10] sm:$0xff]
  %v71 = vld [vmem:[#allocation2 + $0x18] sm:$0xff]
  %v72 = vld [vmem:[%s1] sm:$0xf]
  %v73 = vld [vmem:[%s1 + $0x4] sm:$0xf]
  %v74 = vld [vmem:[%s1 + $0x8] sm:$0xf]
  %v78 = vunpack.c.l.b16 %v72
  %v79 = vunpack.c.l.b16 %v73
  %v80 = vunpack.c.l.b16 %v74
  %v81 = vpack.c.b16 %v79, %v78
  %v82 = vpack.c.b16 %v80, %v80
  %vm84 = vcmask 195584
  %v86 = vsel %vm84, %v66, 0
  %v89 = vsel %vm84, %v67, 0
  %vm91 = vcmask 1043456
  %v93 = vsel %vm91, %v82, 0
  %95 = vmatprep.subr.bf16.mxu0 0
  %96 = vmatpush1.bf16.msra.mxu0 %v81
  %97 = vmatprep.subr.bf16.mxu0 0
  %98 = vmatpush1.bf16.msra.mxu0 %v93
  %99 = vmatprep.subr.bf16.mxu0 0
  %100 = vmatpush1.bf16.msra.mxu0 0
  %101 = vmatprep.subr.bf16.mxu0 0
  %102 = vmatpush1.bf16.msra.mxu0 0
  %103 = vmatprep.subr.bf16.mxu0 0
  %104 = vmatpush1.bf16.msra.mxu0 0
  %105 = vmatprep.subr.bf16.mxu0 0
  %106 = vmatpush1.bf16.msra.mxu0 0
  %107 = vmatprep.subr.bf16.mxu0 0
  %108 = vmatpush1.bf16.msra.mxu0 0
  %109 = vmatprep.subr.bf16.mxu0 0
  %110 = vmatpush1.bf16.msra.mxu0 0
  %111 = vmatprep.subr.bf16.mxu0 0
  %112 = vmatpush1.bf16.msra.mxu0 0
  %113 = vmatprep.subr.bf16.mxu0 0
  %114 = vmatpush1.bf16.msra.mxu0 0
  %115 = vmatprep.subr.bf16.mxu0 0
  %116 = vmatpush1.bf16.msra.mxu0 0
  %117 = vmatprep.subr.bf16.mxu0 0
  %118 = vmatpush1.bf16.msra.mxu0 0
  %119 = vmatprep.subr.bf16.mxu0 0
  %120 = vmatpush1.bf16.msra.mxu0 0
  %121 = vmatprep.subr.bf16.mxu0 0
  %122 = vmatpush1.bf16.msra.mxu0 0
  %123 = vmatprep.subr.bf16.mxu0 0
  %124 = vmatpush1.bf16.msra.mxu0 0
  %125 = vmatprep.subr.bf16.mxu0 0
  %126 = vmatpush1.bf16.msra.mxu0 0
  %127 = vmatprep.mubr.bf16.mxu0 0
  %128 = vmatmul.mubr.bf16.gmra.mrb[0].mxu0 %v86
  %v129 = vpop.f32.mrb[0].mxu0
  %v130 = vadd.f32 0.0, %v129
  %v131 = vpop.f32.mrb[0].mxu0
  %v132 = vpop.f32.mrb[0].mxu0
  %v133 = vadd.f32 0.0, %v132
  %v134 = vpop.f32.mrb[0].mxu0
  %135 = vmatprep.mubr.bf16.mxu0 0
  %136 = vmatmul.mubr.bf16.gmra.mrb[0].mxu0 %v89
  %v137 = vpop.f32.mrb[0].mxu0
  %v138 = vadd.f32 0.0, %v137
  %v139 = vpop.f32.mrb[0].mxu0
  %v140 = vpop.f32.mrb[0].mxu0
  %v141 = vadd.f32 0.0, %v140
  %v142 = vpop.f32.mrb[0].mxu0
  %143 = vdwg.mxu0
  %v144 = vadd.f32 %v68, %v130
  %v145 = vadd.f32 %v69, %v133
  %v146 = vadd.f32 %v70, %v138
  %v147 = vadd.f32 %v71, %v141
  %148 = vst [vmem:[#allocation2] sm:$0xff] %v144
  %149 = vst [vmem:[#allocation2 + $0x8] sm:$0xff] %v145
  %150 = vst [vmem:[#allocation2 + $0x10] sm:$0xff] %v146
  %151 = vst [vmem:[#allocation2 + $0x18] sm:$0xff] %v147
  // Predicated region
  $region30: #{densenet_forward.17} parent=0 // pred_check
    %p152 = pneg %p24
  $region31: #{densenet_forward.17} parent=0 // pred_check_branch
    %154 = sbr.rel (%p152) target = $region33
  $region32: #{densenet_forward.17} parent=0 // pred_region
    %v155 = vld [vmem:[#allocation2] sm:$0xff]
    %v156 = vld [vmem:[#allocation2 + $0x8] sm:$0xff]
    %v157 = vld [vmem:[#allocation2 + $0x10] sm:$0xff]
    %v158 = vld [vmem:[#allocation2 + $0x18] sm:$0xff]
    %v159 = vld [vmem:[%s4] sm:$0x1]
    %v161 = vlaneseq
    %v162 = vshrl.u32 %v161, 7
    %v163 = vsub.s32 0, %v162
    %v164 = vrot.slane %v159, %v163
    %v166 = vmul.f32 %v155, %v164
    %v167 = vmul.f32 %v156, %v164
    %v168 = vmul.f32 %v157, %v164
    %v169 = vmul.f32 %v158, %v164
    %v170 = vld [vmem:[%s5] sm:$0x1]
    %v172 = vlaneseq
    %v173 = vshrl.u32 %v172, 7
    %v174 = vsub.s32 0, %v173
    %v175 = vrot.slane %v170, %v174
    %v177 = vadd.f32 %v166, %v175
    %v178 = vadd.f32 %v167, %v175
    %v179 = vadd.f32 %v168, %v175
    %v180 = vadd.f32 %v169, %v175
    %v181 = vmax.f32 %v177, 0.0
    %v182 = vmax.f32 %v178, 0.0
    %v183 = vmax.f32 %v179, 0.0
    %v184 = vmax.f32 %v180, 0.0
    %v185 = vpack.c.bf16 %v182, %v181
    %v186 = vpack.c.bf16 %v184, %v183
    %v189 = vunpack.c.l.b16 %v185
    %v190 = vunpack.c.h.b16 %v185
    %v191 = vunpack.c.l.b16 %v186
    %v192 = vunpack.c.h.b16 %v186
    %v193 = vpack.c.b16 %v189, %v189
    %v194 = vpack.c.b16 %v190, %v190
    %v195 = vpack.c.b16 %v191, %v191
    %v196 = vpack.c.b16 %v192, %v192
    %201 = vst [vmem:[%s6] sm:$0xf] %v193
    %202 = vst [vmem:[%s6 + $0x4] sm:$0xf] %v194
    %203 = vst [vmem:[%s6 + $0x8] sm:$0xf] %v195
    %204 = vst [vmem:[%s6 + $0xc] sm:$0xf] %v196
  $region33: #{densenet_forward.17} parent=0 // pred_fallthru
    _
  // Predicated region
  $region34: #{densenet_forward.17} parent=0 // pred_check
    _
  $region35: #{densenet_forward.17} parent=0 // pred_check_branch
    %206 = sbr.rel (0) target = $region37
  $region36: #{densenet_forward.17} parent=0 // pred_region
    _
  $region37: #{densenet_forward.17} parent=0 // pred_fallthru
    _
  // Predicated region
  $region38: #{densenet_forward.17} parent=0 // pred_check
    _
  $region39: #{densenet_forward.17} parent=0 // pred_check_branch
    %208 = sbr.rel (0) target = $region41
  $region40: #{densenet_forward.17} parent=0 // pred_region
    _
  $region41: #{densenet_forward.17} parent=0 // pred_fallthru
    _

// kernel: densenet_forward.16
$region0: #{densenet_forward.16}
  #allocation0 [shape = 'u32[]', space=smem, size = 0x4, offset = 0x4, fixed_abs, tag = 'smem constant byte address 0x4 - core index']
  #allocation1 [shape = 'u32[144,128]{1,0:T(1,128)}', space=vmem, size = 0x12000, scoped, tag = 'internal scratch']
  %s0 = inlined_call_operand.vmem [shape: bf16[86,32], index: 0, kind: input, shape index: {}]
  %s1 = inlined_call_operand.vmem [shape: bf16[9,32,128], index: 1, kind: input, shape index: {}]
  %s2 = inlined_call_operand.vmem [shape: bf16[72,128], index: 2, kind: output, shape index: {}]
  %s3 = sld [smem:[#allocation0]]
  $region18: #{densenet_forward.16} parent=0
    _
  %s5 = ssub.s32 1, %s3
  %s6 = scalar_select 0, %s5, %s3
  // Predicated region
  $region2: #{densenet_forward.16} parent=0 // pred_check
    _
  $region3: #{densenet_forward.16} parent=0 // pred_check_branch
    %8 = sbr.rel (0) target = $region5
  $region4: #{densenet_forward.16} parent=0 // pred_region
    _
  $region5: #{densenet_forward.16} parent=0 // pred_fallthru
    _
  // Predicated region
  $region6: #{densenet_forward.16} parent=0 // pred_check
    _
  $region7: #{densenet_forward.16} parent=0 // pred_check_branch
    %10 = sbr.rel (0) target = $region9
  $region8: #{densenet_forward.16} parent=0 // pred_region
    _
  $region9: #{densenet_forward.16} parent=0 // pred_fallthru
    _
  %v12 = vld [vmem:[%s0] sm:$0xf]
  %v13 = vld [vmem:[%s0 + $0x4] sm:$0xf]
  %v14 = vld [vmem:[%s0 + $0x8] sm:$0xf]
  %v15 = vld [vmem:[%s0 + $0xc] sm:$0xf]
  %v16 = vld [vmem:[%s0 + $0x10] sm:$0xf]
  %v17 = vld [vmem:[%s0 + $0x14] sm:$0xf]
  %v18 = vld [vmem:[%s0 + $0x18] sm:$0xf]
  %v19 = vld [vmem:[%s0 + $0x1c] sm:$0xf]
  %v20 = vld [vmem:[%s0 + $0x20] sm:$0xf]
  %v21 = vld [vmem:[%s1] sm:$0xf]
  %v22 = vld [vmem:[%s1 + $0x4] sm:$0xf]
  %v23 = vld [vmem:[%s1 + $0x8] sm:$0xf]
  %v24 = vld [vmem:[%s1 + $0xc] sm:$0xf]
  %v25 = vld [vmem:[%s0 + $0x24] sm:$0x1]
  %s26 = scalar_lea.vmem %s1, 16
  %v27 = vld [vmem:[%s26] sm:$0xf]
  %v28 = vld [vmem:[%s26 + $0x4] sm:$0xf]
  %v29 = vld [vmem:[%s26 + $0x8] sm:$0xf]
  %v30 = vld [vmem:[%s26 + $0xc] sm:$0xf]
  %v41 = vunpack.c.l.b16 %v12
  %v42 = vunpack.c.l.b16 %v13
  %v43 = vunpack.c.l.b16 %v14
  %v44 = vunpack.c.l.b16 %v15
  %v45 = vunpack.c.l.b16 %v16
  %v46 = vunpack.c.l.b16 %v17
  %v47 = vunpack.c.l.b16 %v18
  %v48 = vunpack.c.l.b16 %v19
  %v49 = vunpack.c.l.b16 %v20
  %v50 = vunpack.c.l.b16 %v25
  %v51 = vpack.c.b16 %v42, %v41
  %v52 = vpack.c.b16 %v44, %v43
  %v53 = vpack.c.b16 %v46, %v45
  %v54 = vpack.c.b16 %v48, %v47
  %v55 = vpack.c.b16 %v50, %v49
  %vm56 = vsmask.f32 7424
  %v58 = vshrl.u32 %v51, 16
  %v60 = vshll.u32 %v51, 16
  %v62 = vrot.slane %v60, 1
  %v63 = vor.u32 %v58, %v62
  %v65 = vshll.u32 %v52, 16
  %v67 = vrot.slane %v65, 1
  %v68 = vsel %vm56, %v63, %v67
  %v69 = vshrl.u32 %v52, 16
  %v71 = vor.u32 %v69, %v67
  %v73 = vshll.u32 %v53, 16
  %v75 = vrot.slane %v73, 1
  %v76 = vsel %vm56, %v71, %v75
  %v77 = vshrl.u32 %v53, 16
  %v79 = vor.u32 %v77, %v75
  %v81 = vshll.u32 %v54, 16
  %v83 = vrot.slane %v81, 1
  %v84 = vsel %vm56, %v79, %v83
  %v85 = vshrl.u32 %v54, 16
  %v87 = vor.u32 %v85, %v83
  %v89 = vshll.u32 %v55, 16
  %v91 = vrot.slane %v89, 1
  %v92 = vsel %vm56, %v87, %v91
  %v93 = vshrl.u32 %v55, 16
  %v95 = vor.u32 %v93, %v91
  %v100 = vunpack.c.l.b16 %v27
  %v101 = vunpack.c.l.b16 %v28
  %v102 = vunpack.c.l.b16 %v29
  %v103 = vunpack.c.l.b16 %v30
  %v104 = vpack.c.b16 %v101, %v100
  %v105 = vpack.c.b16 %v103, %v102
  %vm108 = vcmask 261120
  %v110 = vsel %vm108, %v68, 0
  %v113 = vsel %vm108, %v76, 0
  %v116 = vsel %vm108, %v84, 0
  %v119 = vsel %vm108, %v92, 0
  %v122 = vsel %vm108, %v95, 0
  %124 = vmatprep.subr.bf16.mxu0 0
  %125 = vmatpush1.bf16.msra.mxu0 %v104
  %126 = vmatprep.subr.bf16.mxu0 0
  %127 = vmatpush1.bf16.msra.mxu0 %v105
  %128 = vmatprep.subr.bf16.mxu0 0
  %129 = vmatpush1.bf16.msra.mxu0 0
  %130 = vmatprep.subr.bf16.mxu0 0
  %131 = vmatpush1.bf16.msra.mxu0 0
  %132 = vmatprep.subr.bf16.mxu0 0
  %133 = vmatpush1.bf16.msra.mxu0 0
  %134 = vmatprep.subr.bf16.mxu0 0
  %135 = vmatpush1.bf16.msra.mxu0 0
  %136 = vmatprep.subr.bf16.mxu0 0
  %137 = vmatpush1.bf16.msra.mxu0 0
  %138 = vmatprep.subr.bf16.mxu0 0
  %139 = vmatpush1.bf16.msra.mxu0 0
  %140 = vmatprep.subr.bf16.mxu0 0
  %141 = vmatpush1.bf16.msra.mxu0 0
  %142 = vmatprep.subr.bf16.mxu0 0
  %143 = vmatpush1.bf16.msra.mxu0 0
  %144 = vmatprep.subr.bf16.mxu0 0
  %145 = vmatpush1.bf16.msra.mxu0 0
  %146 = vmatprep.subr.bf16.mxu0 0
  %147 = vmatpush1.bf16.msra.mxu0 0
  %148 = vmatprep.subr.bf16.mxu0 0
  %149 = vmatpush1.bf16.msra.mxu0 0
  %150 = vmatprep.subr.bf16.mxu0 0
  %151 = vmatpush1.bf16.msra.mxu0 0
  %152 = vmatprep.subr.bf16.mxu0 0
  %153 = vmatpush1.bf16.msra.mxu0 0
  %154 = vmatprep.subr.bf16.mxu0 0
  %155 = vmatpush1.bf16.msra.mxu0 0
  %156 = vmatprep.mubr.bf16.mxu0 0
  %157 = vmatmul.mubr.bf16.gmra.mrb[0].mxu0 %v110
  %v158 = vpop.f32.mrb[0].mxu0
  %v159 = vadd.f32 0.0, %v158
  %v160 = vpop.f32.mrb[0].mxu0
  %v161 = vpop.f32.mrb[0].mxu0
  %v162 = vadd.f32 0.0, %v161
  %v163 = vpop.f32.mrb[0].mxu0
  %164 = vmatprep.mubr.bf16.mxu0 0
  %165 = vmatmul.mubr.bf16.gmra.mrb[0].mxu0 %v113
  %v166 = vpop.f32.mrb[0].mxu0
  %v167 = vadd.f32 0.0, %v166
  %v168 = vpop.f32.mrb[0].mxu0
  %v169 = vpop.f32.mrb[0].mxu0
  %v170 = vadd.f32 0.0, %v169
  %v171 = vpop.f32.mrb[0].mxu0
  %172 = vmatprep.mubr.bf16.mxu0 0
  %173 = vmatmul.mubr.bf16.gmra.mrb[0].mxu0 %v116
  %v174 = vpop.f32.mrb[0].mxu0
  %v175 = vadd.f32 0.0, %v174
  %v176 = vpop.f32.mrb[0].mxu0
  %v177 = vpop.f32.mrb[0].mxu0
  %v178 = vadd.f32 0.0, %v177
  %v179 = vpop.f32.mrb[0].mxu0
  %180 = vmatprep.mubr.bf16.mxu0 0
  %181 = vmatmul.mubr.bf16.gmra.mrb[0].mxu0 %v119
  %v182 = vpop.f32.mrb[0].mxu0
  %v183 = vadd.f32 0.0, %v182
  %v184 = vpop.f32.mrb[0].mxu0
  %v185 = vpop.f32.mrb[0].mxu0
  %v186 = vadd.f32 0.0, %v185
  %v187 = vpop.f32.mrb[0].mxu0
  %188 = vmatprep.mubr.bf16.mxu0 0
  %189 = vmatmul.mubr.bf16.gmra.mrb[0].mxu0 %v122
  %v190 = vpop.f32.mrb[0].mxu0
  %v191 = vadd.f32 0.0, %v190
  %v192 = vpop.f32.mrb[0].mxu0
  %v193 = vpop.f32.mrb[0].mxu0
  %v194 = vpop.f32.mrb[0].mxu0
  %195 = vdwg.mxu0
  %v196 = vpack.c.b16 %v49, %v49
  %v201 = vunpack.c.l.b16 %v21
  %v202 = vunpack.c.l.b16 %v22
  %v203 = vunpack.c.l.b16 %v23
  %v204 = vunpack.c.l.b16 %v24
  %v205 = vpack.c.b16 %v202, %v201
  %v206 = vpack.c.b16 %v204, %v203
  %v209 = vsel %vm108, %v51, 0
  %v211 = vsel %vm108, %v52, 0
  %v213 = vsel %vm108, %v53, 0
  %v215 = vsel %vm108, %v54, 0
  %v218 = vsel %vm108, %v196, 0
  %220 = vmatprep.subr.bf16.mxu0 0
  %221 = vmatpush1.bf16.msra.mxu0 %v205
  %222 = vmatprep.subr.bf16.mxu0 0
  %223 = vmatpush1.bf16.msra.mxu0 %v206
  %224 = vmatprep.subr.bf16.mxu0 0
  %225 = vmatpush1.bf16.msra.mxu0 0
  %226 = vmatprep.subr.bf16.mxu0 0
  %227 = vmatpush1.bf16.msra.mxu0 0
  %228 = vmatprep.subr.bf16.mxu0 0
  %229 = vmatpush1.bf16.msra.mxu0 0
  %230 = vmatprep.subr.bf16.mxu0 0
  %231 = vmatpush1.bf16.msra.mxu0 0
  %232 = vmatprep.subr.bf16.mxu0 0
  %233 = vmatpush1.bf16.msra.mxu0 0
  %234 = vmatprep.subr.bf16.mxu0 0
  %235 = vmatpush1.bf16.msra.mxu0 0
  %236 = vmatprep.subr.bf16.mxu0 0
  %237 = vmatpush1.bf16.msra.mxu0 0
  %238 = vmatprep.subr.bf16.mxu0 0
  %239 = vmatpush1.bf16.msra.mxu0 0
  %240 = vmatprep.subr.bf16.mxu0 0
  %241 = vmatpush1.bf16.msra.mxu0 0
  %242 = vmatprep.subr.bf16.mxu0 0
  %243 = vmatpush1.bf16.msra.mxu0 0
  %244 = vmatprep.subr.bf16.mxu0 0
  %245 = vmatpush1.bf16.msra.mxu0 0
  %246 = vmatprep.subr.bf16.mxu0 0
  %247 = vmatpush1.bf16.msra.mxu0 0
  %248 = vmatprep.subr.bf16.mxu0 0
  %249 = vmatpush1.bf16.msra.mxu0 0
  %250 = vmatprep.subr.bf16.mxu0 0
  %251 = vmatpush1.bf16.msra.mxu0 0
  %252 = vmatprep.mubr.bf16.mxu0 0
  %253 = vmatmul.mubr.bf16.gmra.mrb[0].mxu0 %v209
  %v254 = vpop.f32.mrb[0].mxu0
  %v255 = vadd.f32 %v159, %v254
  %v256 = vpop.f32.mrb[0].mxu0
  %v257 = vpop.f32.mrb[0].mxu0
  %v258 = vadd.f32 %v162, %v257
  %v259 = vpop.f32.mrb[0].mxu0
  %260 = vmatprep.mubr.bf16.mxu0 0
  %261 = vmatmul.mubr.bf16.gmra.mrb[0].mxu0 %v211
  %v262 = vpop.f32.mrb[0].mxu0
  %v263 = vadd.f32 %v167, %v262
  %v264 = vpop.f32.mrb[0].mxu0
  %v265 = vpop.f32.mrb[0].mxu0
  %v266 = vadd.f32 %v170, %v265
  %v267 = vpop.f32.mrb[0].mxu0
  %268 = vmatprep.mubr.bf16.mxu0 0
  %269 = vmatmul.mubr.bf16.gmra.mrb[0].mxu0 %v213
  %v270 = vpop.f32.mrb[0].mxu0
  %v271 = vadd.f32 %v175, %v270
  %v272 = vpop.f32.mrb[0].mxu0
  %v273 = vpop.f32.mrb[0].mxu0
  %v274 = vadd.f32 %v178, %v273
  %v275 = vpop.f32.mrb[0].mxu0
  %276 = vmatprep.mubr.bf16.mxu0 0
  %277 = vmatmul.mubr.bf16.gmra.mrb[0].mxu0 %v215
  %v278 = vpop.f32.mrb[0].mxu0
  %v279 = vadd.f32 %v183, %v278
  %v280 = vpop.f32.mrb[0].mxu0
  %v281 = vpop.f32.mrb[0].mxu0
  %v282 = vadd.f32 %v186, %v281
  %v283 = vpop.f32.mrb[0].mxu0
  %284 = vmatprep.mubr.bf16.mxu0 0
  %285 = vmatmul.mubr.bf16.gmra.mrb[0].mxu0 %v218
  %v286 = vpop.f32.mrb[0].mxu0
  %v287 = vadd.f32 %v191, %v286
  %v288 = vpop.f32.mrb[0].mxu0
  %v289 = vpop.f32.mrb[0].mxu0
  %v290 = vpop.f32.mrb[0].mxu0
  %291 = vdwg.mxu0
  %v292 = vld [vmem:[%s0] sm:$0xe]
  %s293 = scalar_lea.vmem %s1, 32
  %v294 = vld [vmem:[%s293] sm:$0xf]
  %v295 = vld [vmem:[%s293 + $0x4] sm:$0xf]
  %v296 = vld [vmem:[%s293 + $0x8] sm:$0xf]
  %v297 = vld [vmem:[%s293 + $0xc] sm:$0xf]
  %v299 = vunpack.c.l.b16 %v292
  %v300 = vpack.c.b16 %v42, %v299
  %vm301 = vcmask 1046528
  %v302 = vrot.slane %v300, 1
  %v303 = vrot.slane %v52, 1
  %v304 = vsel %vm301, %v302, %v303
  %v305 = vrot.slane %v53, 1
  %v306 = vsel %vm301, %v303, %v305
  %v307 = vrot.slane %v54, 1
  %v308 = vsel %vm301, %v305, %v307
  %v309 = vrot.slane %v55, 1
  %v310 = vsel %vm301, %v307, %v309
  %v315 = vunpack.c.l.b16 %v294
  %v316 = vunpack.c.l.b16 %v295
  %v317 = vunpack.c.l.b16 %v296
  %v318 = vunpack.c.l.b16 %v297
  %v319 = vpack.c.b16 %v316, %v315
  %v320 = vpack.c.b16 %v318, %v317
  %v324 = vsel %vm108, %v304, 0
  %v327 = vsel %vm108, %v306, 0
  %v330 = vsel %vm108, %v308, 0
  %v333 = vsel %vm108, %v310, 0
  %v336 = vsel %vm108, %v309, 0
  %338 = vmatprep.subr.bf16.mxu0 0
  %339 = vmatpush1.bf16.msra.mxu0 %v319
  %340 = vmatprep.subr.bf16.mxu0 0
  %341 = vmatpush1.bf16.msra.mxu0 %v320
  %342 = vmatprep.subr.bf16.mxu0 0
  %343 = vmatpush1.bf16.msra.mxu0 0
  %344 = vmatprep.subr.bf16.mxu0 0
  %345 = vmatpush1.bf16.msra.mxu0 0
  %346 = vmatprep.subr.bf16.mxu0 0
  %347 = vmatpush1.bf16.msra.mxu0 0
  %348 = vmatprep.subr.bf16.mxu0 0
  %349 = vmatpush1.bf16.msra.mxu0 0
  %350 = vmatprep.subr.bf16.mxu0 0
  %351 = vmatpush1.bf16.msra.mxu0 0
  %352 = vmatprep.subr.bf16.mxu0 0
  %353 = vmatpush1.bf16.msra.mxu0 0
  %354 = vmatprep.subr.bf16.mxu0 0
  %355 = vmatpush1.bf16.msra.mxu0 0
  %356 = vmatprep.subr.bf16.mxu0 0
  %357 = vmatpush1.bf16.msra.mxu0 0
  %358 = vmatprep.subr.bf16.mxu0 0
  %359 = vmatpush1.bf16.msra.mxu0 0
  %360 = vmatprep.subr.bf16.mxu0 0
  %361 = vmatpush1.bf16.msra.mxu0 0
  %362 = vmatprep.subr.bf16.mxu0 0
  %363 = vmatpush1.bf16.msra.mxu0 0
  %364 = vmatprep.subr.bf16.mxu0 0
  %365 = vmatpush1.bf16.msra.mxu0 0
  %366 = vmatprep.subr.bf16.mxu0 0
  %367 = vmatpush1.bf16.msra.mxu0 0
  %368 = vmatprep.subr.bf16.mxu0 0
  %369 = vmatpush1.bf16.msra.mxu0 0
  %370 = vmatprep.mubr.bf16.mxu0 0
  %371 = vmatmul.mubr.bf16.gmra.mrb[0].mxu0 %v324
  %v372 = vpop.f32.mrb[0].mxu0
  %v373 = vadd.f32 0.0, %v372
  %v374 = vpop.f32.mrb[0].mxu0
  %v375 = vpop.f32.mrb[0].mxu0
  %v376 = vadd.f32 0.0, %v375
  %v377 = vpop.f32.mrb[0].mxu0
  %378 = vmatprep.mubr.bf16.mxu0 0
  %379 = vmatmul.mubr.bf16.gmra.mrb[0].mxu0 %v327
  %v380 = vpop.f32.mrb[0].mxu0
  %v381 = vadd.f32 0.0, %v380
  %v382 = vpop.f32.mrb[0].mxu0
  %v383 = vpop.f32.mrb[0].mxu0
  %v384 = vadd.f32 0.0, %v383
  %v385 = vpop.f32.mrb[0].mxu0
  %386 = vmatprep.mubr.bf16.mxu0 0
  %387 = vmatmul.mubr.bf16.gmra.mrb[0].mxu0 %v330
  %v388 = vpop.f32.mrb[0].mxu0
  %v389 = vadd.f32 0.0, %v388
  %v390 = vpop.f32.mrb[0].mxu0
  %v391 = vpop.f32.mrb[0].mxu0
  %v392 = vadd.f32 0.0, %v391
  %v393 = vpop.f32.mrb[0].mxu0
  %394 = vmatprep.mubr.bf16.mxu0 0
  %395 = vmatmul.mubr.bf16.gmra.mrb[0].mxu0 %v333
  %v396 = vpop.f32.mrb[0].mxu0
  %v397 = vadd.f32 0.0, %v396
  %v398 = vpop.f32.mrb[0].mxu0
  %v399 = vpop.f32.mrb[0].mxu0
  %v400 = vadd.f32 0.0, %v399
  %v401 = vpop.f32.mrb[0].mxu0
  %402 = vmatprep.mubr.bf16.mxu0 0
  %403 = vmatmul.mubr.bf16.gmra.mrb[0].mxu0 %v336
  %v404 = vpop.f32.mrb[0].mxu0
  %v405 = vadd.f32 0.0, %v404
  %v406 = vpop.f32.mrb[0].mxu0
  %v407 = vpop.f32.mrb[0].mxu0
  %v408 = vpop.f32.mrb[0].mxu0
  %409 = vdwg.mxu0
  %v410 = vadd.f32 %v255, %v373
  %v411 = vadd.f32 %v258, %v376
  %v412 = vadd.f32 %v263, %v381
  %v413 = vadd.f32 %v266, %v384
  %v414 = vadd.f32 %v271, %v389
  %v415 = vadd.f32 %v274, %v392
  %v416 = vadd.f32 %v279, %v397
  %v417 = vadd.f32 %v282, %v400
  %v418 = vadd.f32 %v287, %v405
  %v419 = vld [vmem:[%s0] sm:$0x8]
  %v420 = vld [vmem:[%s0 + $0x24] sm:$0x7]
  %s421 = scalar_lea.vmem %s1, 48
  %v422 = vld [vmem:[%s421] sm:$0xf]
  %v423 = vld [vmem:[%s421 + $0x4] sm:$0xf]
  %v424 = vld [vmem:[%s421 + $0x8] sm:$0xf]
  %v425 = vld [vmem:[%s421 + $0xc] sm:$0xf]
  %v428 = vunpack.c.l.b16 %v419
  %v429 = vunpack.c.l.b16 %v420
  %v430 = vpack.c.b16 %v42, %v428
  %v431 = vpack.c.b16 %v429, %v49
  %vm432 = vcmask 1044480
  %v433 = vrot.slane %v430, 3
  %v434 = vrot.slane %v52, 3
  %v435 = vsel %vm432, %v433, %v434
  %v436 = vrot.slane %v53, 3
  %v437 = vsel %vm432, %v434, %v436
  %v438 = vrot.slane %v54, 3
  %v439 = vsel %vm432, %v436, %v438
  %v440 = vrot.slane %v431, 3
  %v441 = vsel %vm432, %v438, %v440
  %v446 = vunpack.c.l.b16 %v422
  %v447 = vunpack.c.l.b16 %v423
  %v448 = vunpack.c.l.b16 %v424
  %v449 = vunpack.c.l.b16 %v425
  %v450 = vpack.c.b16 %v447, %v446
  %v451 = vpack.c.b16 %v449, %v448
  %v455 = vsel %vm108, %v435, 0
  %v458 = vsel %vm108, %v437, 0
  %v461 = vsel %vm108, %v439, 0
  %v464 = vsel %vm108, %v441, 0
  %v467 = vsel %vm108, %v440, 0
  %469 = vmatprep.subr.bf16.mxu0 0
  %470 = vmatpush1.bf16.msra.mxu0 %v450
  %471 = vmatprep.subr.bf16.mxu0 0
  %472 = vmatpush1.bf16.msra.mxu0 %v451
  %473 = vmatprep.subr.bf16.mxu0 0
  %474 = vmatpush1.bf16.msra.mxu0 0
  %475 = vmatprep.subr.bf16.mxu0 0
  %476 = vmatpush1.bf16.msra.mxu0 0
  %477 = vmatprep.subr.bf16.mxu0 0
  %478 = vmatpush1.bf16.msra.mxu0 0
  %479 = vmatprep.subr.bf16.mxu0 0
  %480 = vmatpush1.bf16.msra.mxu0 0
  %481 = vmatprep.subr.bf16.mxu0 0
  %482 = vmatpush1.bf16.msra.mxu0 0
  %483 = vmatprep.subr.bf16.mxu0 0
  %484 = vmatpush1.bf16.msra.mxu0 0
  %485 = vmatprep.subr.bf16.mxu0 0
  %486 = vmatpush1.bf16.msra.mxu0 0
  %487 = vmatprep.subr.bf16.mxu0 0
  %488 = vmatpush1.bf16.msra.mxu0 0
  %489 = vmatprep.subr.bf16.mxu0 0
  %490 = vmatpush1.bf16.msra.mxu0 0
  %491 = vmatprep.subr.bf16.mxu0 0
  %492 = vmatpush1.bf16.msra.mxu0 0
  %493 = vmatprep.subr.bf16.mxu0 0
  %494 = vmatpush1.bf16.msra.mxu0 0
  %495 = vmatprep.subr.bf16.mxu0 0
  %496 = vmatpush1.bf16.msra.mxu0 0
  %497 = vmatprep.subr.bf16.mxu0 0
  %498 = vmatpush1.bf16.msra.mxu0 0
  %499 = vmatprep.subr.bf16.mxu0 0
  %500 = vmatpush1.bf16.msra.mxu0 0
  %501 = vmatprep.mubr.bf16.mxu0 0
  %502 = vmatmul.mubr.bf16.gmra.mrb[0].mxu0 %v455
  %v503 = vpop.f32.mrb[0].mxu0
  %v504 = vadd.f32 0.0, %v503
  %v505 = vpop.f32.mrb[0].mxu0
  %v506 = vpop.f32.mrb[0].mxu0
  %v507 = vadd.f32 0.0, %v506
  %v508 = vpop.f32.mrb[0].mxu0
  %509 = vmatprep.mubr.bf16.mxu0 0
  %510 = vmatmul.mubr.bf16.gmra.mrb[0].mxu0 %v458
  %v511 = vpop.f32.mrb[0].mxu0
  %v512 = vadd.f32 0.0, %v511
  %v513 = vpop.f32.mrb[0].mxu0
  %v514 = vpop.f32.mrb[0].mxu0
  %v515 = vadd.f32 0.0, %v514
  %v516 = vpop.f32.mrb[0].mxu0
  %517 = vmatprep.mubr.bf16.mxu0 0
  %518 = vmatmul.mubr.bf16.gmra.mrb[0].mxu0 %v461
  %v519 = vpop.f32.mrb[0].mxu0
  %v520 = vadd.f32 0.0, %v519
  %v521 = vpop.f32.mrb[0].mxu0
  %v522 = vpop.f32.mrb[0].mxu0
  %v523 = vadd.f32 0.0, %v522
  %v524 = vpop.f32.mrb[0].mxu0
  %525 = vmatprep.mubr.bf16.mxu0 0
  %526 = vmatmul.mubr.bf16.gmra.mrb[0].mxu0 %v464
  %v527 = vpop.f32.mrb[0].mxu0
  %v528 = vadd.f32 0.0, %v527
  %v529 = vpop.f32.mrb[0].mxu0
  %v530 = vpop.f32.mrb[0].mxu0
  %v531 = vadd.f32 0.0, %v530
  %v532 = vpop.f32.mrb[0].mxu0
  %533 = vmatprep.mubr.bf16.mxu0 0
  %534 = vmatmul.mubr.bf16.gmra.mrb[0].mxu0 %v467
  %v535 = vpop.f32.mrb[0].mxu0
  %v536 = vadd.f32 0.0, %v535
  %v537 = vpop.f32.mrb[0].mxu0
  %v538 = vpop.f32.mrb[0].mxu0
  %v539 = vpop.f32.mrb[0].mxu0
  %540 = vdwg.mxu0
  %v541 = vadd.f32 %v410, %v504
  %v542 = vadd.f32 %v411, %v507
  %v543 = vadd.f32 %v412, %v512
  %v544 = vadd.f32 %v413, %v515
  %v545 = vadd.f32 %v414, %v520
  %v546 = vadd.f32 %v415, %v523
  %v547 = vadd.f32 %v416, %v528
  %v548 = vadd.f32 %v417, %v531
  %v549 = vadd.f32 %v418, %v536
  %v550 = vld [vmem:[%s0 + $0x24] sm:$0xf]
  %s551 = scalar_lea.vmem %s1, 64
  %v552 = vld [vmem:[%s551] sm:$0xf]
  %v553 = vld [vmem:[%s551 + $0x4] sm:$0xf]
  %v554 = vld [vmem:[%s551 + $0x8] sm:$0xf]
  %v555 = vld [vmem:[%s551 + $0xc] sm:$0xf]
  %v557 = vunpack.c.l.b16 %v550
  %v558 = vpack.c.b16 %v557, %v49
  %vm559 = vsmask.f32 4352
  %v561 = vshrl.u32 %v430, 16
  %v563 = vrot.slane %v561, 3
  %v564 = vshll.u32 %v430, 16
  %v566 = vrot.slane %v564, 4
  %v567 = vor.u32 %v563, %v566
  %v568 = vrot.slane %v69, 3
  %v569 = vrot.slane %v65, 4
  %v570 = vor.u32 %v568, %v569
  %v571 = vsel %vm559, %v567, %v570
  %v572 = vrot.slane %v77, 3
  %v573 = vrot.slane %v73, 4
  %v574 = vor.u32 %v572, %v573
  %v575 = vsel %vm559, %v570, %v574
  %v576 = vrot.slane %v85, 3
  %v577 = vrot.slane %v81, 4
  %v578 = vor.u32 %v576, %v577
  %v579 = vsel %vm559, %v574, %v578
  %v581 = vshrl.u32 %v558, 16
  %v583 = vrot.slane %v581, 3
  %v584 = vshll.u32 %v558, 16
  %v586 = vrot.slane %v584, 4
  %v587 = vor.u32 %v583, %v586
  %v588 = vsel %vm559, %v578, %v587
  %v593 = vunpack.c.l.b16 %v552
  %v594 = vunpack.c.l.b16 %v553
  %v595 = vunpack.c.l.b16 %v554
  %v596 = vunpack.c.l.b16 %v555
  %v597 = vpack.c.b16 %v594, %v593
  %v598 = vpack.c.b16 %v596, %v595
  %v602 = vsel %vm108, %v571, 0
  %v605 = vsel %vm108, %v575, 0
  %v608 = vsel %vm108, %v579, 0
  %v611 = vsel %vm108, %v588, 0
  %v614 = vsel %vm108, %v587, 0
  %616 = vmatprep.subr.bf16.mxu0 0
  %617 = vmatpush1.bf16.msra.mxu0 %v597
  %618 = vmatprep.subr.bf16.mxu0 0
  %619 = vmatpush1.bf16.msra.mxu0 %v598
  %620 = vmatprep.subr.bf16.mxu0 0
  %621 = vmatpush1.bf16.msra.mxu0 0
  %622 = vmatprep.subr.bf16.mxu0 0
  %623 = vmatpush1.bf16.msra.mxu0 0
  %624 = vmatprep.subr.bf16.mxu0 0
  %625 = vmatpush1.bf16.msra.mxu0 0
  %626 = vmatprep.subr.bf16.mxu0 0
  %627 = vmatpush1.bf16.msra.mxu0 0
  %628 = vmatprep.subr.bf16.mxu0 0
  %629 = vmatpush1.bf16.msra.mxu0 0
  %630 = vmatprep.subr.bf16.mxu0 0
  %631 = vmatpush1.bf16.msra.mxu0 0
  %632 = vmatprep.subr.bf16.mxu0 0
  %633 = vmatpush1.bf16.msra.mxu0 0
  %634 = vmatprep.subr.bf16.mxu0 0
  %635 = vmatpush1.bf16.msra.mxu0 0
  %636 = vmatprep.subr.bf16.mxu0 0
  %637 = vmatpush1.bf16.msra.mxu0 0
  %638 = vmatprep.subr.bf16.mxu0 0
  %639 = vmatpush1.bf16.msra.mxu0 0
  %640 = vmatprep.subr.bf16.mxu0 0
  %641 = vmatpush1.bf16.msra.mxu0 0
  %642 = vmatprep.subr.bf16.mxu0 0
  %643 = vmatpush1.bf16.msra.mxu0 0
  %644 = vmatprep.subr.bf16.mxu0 0
  %645 = vmatpush1.bf16.msra.mxu0 0
  %646 = vmatprep.subr.bf16.mxu0 0
  %647 = vmatpush1.bf16.msra.mxu0 0
  %648 = vmatprep.mubr.bf16.mxu0 0
  %649 = vmatmul.mubr.bf16.gmra.mrb[0].mxu0 %v602
  %v650 = vpop.f32.mrb[0].mxu0
  %v651 = vadd.f32 0.0, %v650
  %v652 = vpop.f32.mrb[0].mxu0
  %v653 = vpop.f32.mrb[0].mxu0
  %v654 = vadd.f32 0.0, %v653
  %v655 = vpop.f32.mrb[0].mxu0
  %656 = vmatprep.mubr.bf16.mxu0 0
  %657 = vmatmul.mubr.bf16.gmra.mrb[0].mxu0 %v605
  %v658 = vpop.f32.mrb[0].mxu0
  %v659 = vadd.f32 0.0, %v658
  %v660 = vpop.f32.mrb[0].mxu0
  %v661 = vpop.f32.mrb[0].mxu0
  %v662 = vadd.f32 0.0, %v661
  %v663 = vpop.f32.mrb[0].mxu0
  %664 = vmatprep.mubr.bf16.mxu0 0
  %665 = vmatmul.mubr.bf16.gmra.mrb[0].mxu0 %v608
  %v666 = vpop.f32.mrb[0].mxu0
  %v667 = vadd.f32 0.0, %v666
  %v668 = vpop.f32.mrb[0].mxu0
  %v669 = vpop.f32.mrb[0].mxu0
  %v670 = vadd.f32 0.0, %v669
  %v671 = vpop.f32.mrb[0].mxu0
  %672 = vmatprep.mubr.bf16.mxu0 0
  %673 = vmatmul.mubr.bf16.gmra.mrb[0].mxu0 %v611
  %v674 = vpop.f32.mrb[0].mxu0
  %v675 = vadd.f32 0.0, %v674
  %v676 = vpop.f32.mrb[0].mxu0
  %v677 = vpop.f32.mrb[0].mxu0
  %v678 = vadd.f32 0.0, %v677
  %v679 = vpop.f32.mrb[0].mxu0
  %680 = vmatprep.mubr.bf16.mxu0 0
  %681 = vmatmul.mubr.bf16.gmra.mrb[0].mxu0 %v614
  %v682 = vpop.f32.mrb[0].mxu0
  %v683 = vadd.f32 0.0, %v682
  %v684 = vpop.f32.mrb[0].mxu0
  %v685 = vpop.f32.mrb[0].mxu0
  %v686 = vpop.f32.mrb[0].mxu0
  %687 = vdwg.mxu0
  %v688 = vadd.f32 %v541, %v651
  %v689 = vadd.f32 %v542, %v654
  %v690 = vadd.f32 %v543, %v659
  %v691 = vadd.f32 %v544, %v662
  %v692 = vadd.f32 %v545, %v667
  %v693 = vadd.f32 %v546, %v670
  %v694 = vadd.f32 %v547, %v675
  %v695 = vadd.f32 %v548, %v678
  %v696 = vadd.f32 %v549, %v683
  %s697 = scalar_lea.vmem %s1, 80
  %v698 = vld [vmem:[%s697] sm:$0xf]
  %v699 = vld [vmem:[%s697 + $0x4] sm:$0xf]
  %v700 = vld [vmem:[%s697 + $0x8] sm:$0xf]
  %v701 = vld [vmem:[%s697 + $0xc] sm:$0xf]
  %v702 = vpack.c.b16 %v43, %v42
  %v703 = vpack.c.b16 %v45, %v44
  %v704 = vpack.c.b16 %v47, %v46
  %v705 = vpack.c.b16 %v49, %v48
  %v706 = vpack.c.b16 %v557, %v557
  %v711 = vunpack.c.l.b16 %v698
  %v712 = vunpack.c.l.b16 %v699
  %v713 = vunpack.c.l.b16 %v700
  %v714 = vunpack.c.l.b16 %v701
  %v715 = vpack.c.b16 %v712, %v711
  %v716 = vpack.c.b16 %v714, %v713
  %v720 = vsel %vm108, %v702, 0
  %v723 = vsel %vm108, %v703, 0
  %v726 = vsel %vm108, %v704, 0
  %v729 = vsel %vm108, %v705, 0
  %v732 = vsel %vm108, %v706, 0
  %734 = vmatprep.subr.bf16.mxu0 0
  %735 = vmatpush1.bf16.msra.mxu0 %v715
  %736 = vmatprep.subr.bf16.mxu0 0
  %737 = vmatpush1.bf16.msra.mxu0 %v716
  %738 = vmatprep.subr.bf16.mxu0 0
  %739 = vmatpush1.bf16.msra.mxu0 0
  %740 = vmatprep.subr.bf16.mxu0 0
  %741 = vmatpush1.bf16.msra.mxu0 0
  %742 = vmatprep.subr.bf16.mxu0 0
  %743 = vmatpush1.bf16.msra.mxu0 0
  %744 = vmatprep.subr.bf16.mxu0 0
  %745 = vmatpush1.bf16.msra.mxu0 0
  %746 = vmatprep.subr.bf16.mxu0 0
  %747 = vmatpush1.bf16.msra.mxu0 0
  %748 = vmatprep.subr.bf16.mxu0 0
  %749 = vmatpush1.bf16.msra.mxu0 0
  %750 = vmatprep.subr.bf16.mxu0 0
  %751 = vmatpush1.bf16.msra.mxu0 0
  %752 = vmatprep.subr.bf16.mxu0 0
  %753 = vmatpush1.bf16.msra.mxu0 0
  %754 = vmatprep.subr.bf16.mxu0 0
  %755 = vmatpush1.bf16.msra.mxu0 0
  %756 = vmatprep.subr.bf16.mxu0 0
  %757 = vmatpush1.bf16.msra.mxu0 0
  %758 = vmatprep.subr.bf16.mxu0 0
  %759 = vmatpush1.bf16.msra.mxu0 0
  %760 = vmatprep.subr.bf16.mxu0 0
  %761 = vmatpush1.bf16.msra.mxu0 0
  %762 = vmatprep.subr.bf16.mxu0 0
  %763 = vmatpush1.bf16.msra.mxu0 0
  %764 = vmatprep.subr.bf16.mxu0 0
  %765 = vmatpush1.bf16.msra.mxu0 0
  %766 = vmatprep.mubr.bf16.mxu0 0
  %767 = vmatmul.mubr.bf16.gmra.mrb[0].mxu0 %v720
  %v768 = vpop.f32.mrb[0].mxu0
  %v769 = vadd.f32 0.0, %v768
  %v770 = vpop.f32.mrb[0].mxu0
  %v771 = vpop.f32.mrb[0].mxu0
  %v772 = vadd.f32 0.0, %v771
  %v773 = vpop.f32.mrb[0].mxu0
  %774 = vmatprep.mubr.bf16.mxu0 0
  %775 = vmatmul.mubr.bf16.gmra.mrb[0].mxu0 %v723
  %v776 = vpop.f32.mrb[0].mxu0
  %v777 = vadd.f32 0.0, %v776
  %v778 = vpop.f32.mrb[0].mxu0
  %v779 = vpop.f32.mrb[0].mxu0
  %v780 = vadd.f32 0.0, %v779
  %v781 = vpop.f32.mrb[0].mxu0
  %782 = vmatprep.mubr.bf16.mxu0 0
  %783 = vmatmul.mubr.bf16.gmra.mrb[0].mxu0 %v726
  %v784 = vpop.f32.mrb[0].mxu0
  %v785 = vadd.f32 0.0, %v784
  %v786 = vpop.f32.mrb[0].mxu0
  %v787 = vpop.f32.mrb[0].mxu0
  %v788 = vadd.f32 0.0, %v787
  %v789 = vpop.f32.mrb[0].mxu0
  %790 = vmatprep.mubr.bf16.mxu0 0
  %791 = vmatmul.mubr.bf16.gmra.mrb[0].mxu0 %v729
  %v792 = vpop.f32.mrb[0].mxu0
  %v793 = vadd.f32 0.0, %v792
  %v794 = vpop.f32.mrb[0].mxu0
  %v795 = vpop.f32.mrb[0].mxu0
  %v796 = vadd.f32 0.0, %v795
  %v797 = vpop.f32.mrb[0].mxu0
  %798 = vmatprep.mubr.bf16.mxu0 0
  %799 = vmatmul.mubr.bf16.gmra.mrb[0].mxu0 %v732
  %v800 = vpop.f32.mrb[0].mxu0
  %v801 = vadd.f32 0.0, %v800
  %v802 = vpop.f32.mrb[0].mxu0
  %v803 = vpop.f32.mrb[0].mxu0
  %v804 = vpop.f32.mrb[0].mxu0
  %805 = vdwg.mxu0
  %v806 = vadd.f32 %v688, %v769
  %v807 = vadd.f32 %v689, %v772
  %v808 = vadd.f32 %v690, %v777
  %v809 = vadd.f32 %v691, %v780
  %v810 = vadd.f32 %v692, %v785
  %v811 = vadd.f32 %v693, %v788
  %v812 = vadd.f32 %v694, %v793
  %v813 = vadd.f32 %v695, %v796
  %v814 = vadd.f32 %v696, %v801
  %v815 = vld [vmem:[%s0 + $0x4] sm:$0xc]
  %v816 = vld [vmem:[%s0 + $0x8] sm:$0xf]
  %v817 = vld [vmem:[%s0 + $0xc] sm:$0xf]
  %v818 = vld [vmem:[%s0 + $0x10] sm:$0xf]
  %v819 = vld [vmem:[%s0 + $0x14] sm:$0xf]
  %v820 = vld [vmem:[%s0 + $0x18] sm:$0xf]
  %v821 = vld [vmem:[%s0 + $0x1c] sm:$0xf]
  %v822 = vld [vmem:[%s0 + $0x20] sm:$0xf]
  %v823 = vld [vmem:[%s0 + $0x24] sm:$0xf]
  %v824 = vld [vmem:[%s0 + $0x28] sm:$0x3]
  %s825 = scalar_lea.vmem %s1, 96
  %v826 = vld [vmem:[%s825] sm:$0xf]
  %v827 = vld [vmem:[%s825 + $0x4] sm:$0xf]
  %v828 = vld [vmem:[%s825 + $0x8] sm:$0xf]
  %v829 = vld [vmem:[%s825 + $0xc] sm:$0xf]
  %v840 = vunpack.c.l.b16 %v815
  %v841 = vunpack.c.l.b16 %v816
  %v842 = vunpack.c.l.b16 %v817
  %v843 = vunpack.c.l.b16 %v818
  %v844 = vunpack.c.l.b16 %v819
  %v845 = vunpack.c.l.b16 %v820
  %v846 = vunpack.c.l.b16 %v821
  %v847 = vunpack.c.l.b16 %v822
  %v848 = vunpack.c.l.b16 %v823
  %v849 = vunpack.c.l.b16 %v824
  %v850 = vpack.c.b16 %v841, %v840
  %v851 = vpack.c.b16 %v843, %v842
  %v852 = vpack.c.b16 %v845, %v844
  %v853 = vpack.c.b16 %v847, %v846
  %v854 = vpack.c.b16 %v849, %v848
  %vm855 = vcmask 1045504
  %v856 = vrot.slane %v850, 2
  %v857 = vrot.slane %v851, 2
  %v858 = vsel %vm855, %v856, %v857
  %v859 = vrot.slane %v852, 2
  %v860 = vsel %vm855, %v857, %v859
  %v861 = vrot.slane %v853, 2
  %v862 = vsel %vm855, %v859, %v861
  %v863 = vrot.slane %v854, 2
  %v864 = vsel %vm855, %v861, %v863
  %v869 = vunpack.c.l.b16 %v826
  %v870 = vunpack.c.l.b16 %v827
  %v871 = vunpack.c.l.b16 %v828
  %v872 = vunpack.c.l.b16 %v829
  %v873 = vpack.c.b16 %v870, %v869
  %v874 = vpack.c.b16 %v872, %v871
  %v878 = vsel %vm108, %v858, 0
  %v881 = vsel %vm108, %v860, 0
  %v884 = vsel %vm108, %v862, 0
  %v887 = vsel %vm108, %v864, 0
  %v890 = vsel %vm108, %v863, 0
  %892 = vmatprep.subr.bf16.mxu0 0
  %893 = vmatpush1.bf16.msra.mxu0 %v873
  %894 = vmatprep.subr.bf16.mxu0 0
  %895 = vmatpush1.bf16.msra.mxu0 %v874
  %896 = vmatprep.subr.bf16.mxu0 0
  %897 = vmatpush1.bf16.msra.mxu0 0
  %898 = vmatprep.subr.bf16.mxu0 0
  %899 = vmatpush1.bf16.msra.mxu0 0
  %900 = vmatprep.subr.bf16.mxu0 0
  %901 = vmatpush1.bf16.msra.mxu0 0
  %902 = vmatprep.subr.bf16.mxu0 0
  %903 = vmatpush1.bf16.msra.mxu0 0
  %904 = vmatprep.subr.bf16.mxu0 0
  %905 = vmatpush1.bf16.msra.mxu0 0
  %906 = vmatprep.subr.bf16.mxu0 0
  %907 = vmatpush1.bf16.msra.mxu0 0
  %908 = vmatprep.subr.bf16.mxu0 0
  %909 = vmatpush1.bf16.msra.mxu0 0
  %910 = vmatprep.subr.bf16.mxu0 0
  %911 = vmatpush1.bf16.msra.mxu0 0
  %912 = vmatprep.subr.bf16.mxu0 0
  %913 = vmatpush1.bf16.msra.mxu0 0
  %914 = vmatprep.subr.bf16.mxu0 0
  %915 = vmatpush1.bf16.msra.mxu0 0
  %916 = vmatprep.subr.bf16.mxu0 0
  %917 = vmatpush1.bf16.msra.mxu0 0
  %918 = vmatprep.subr.bf16.mxu0 0
  %919 = vmatpush1.bf16.msra.mxu0 0
  %920 = vmatprep.subr.bf16.mxu0 0
  %921 = vmatpush1.bf16.msra.mxu0 0
  %922 = vmatprep.subr.bf16.mxu0 0
  %923 = vmatpush1.bf16.msra.mxu0 0
  %924 = vmatprep.mubr.bf16.mxu0 0
  %925 = vmatmul.mubr.bf16.gmra.mrb[0].mxu0 %v878
  %v926 = vpop.f32.mrb[0].mxu0
  %v927 = vadd.f32 0.0, %v926
  %v928 = vpop.f32.mrb[0].mxu0
  %v929 = vpop.f32.mrb[0].mxu0
  %v930 = vadd.f32 0.0, %v929
  %v931 = vpop.f32.mrb[0].mxu0
  %932 = vmatprep.mubr.bf16.mxu0 0
  %933 = vmatmul.mubr.bf16.gmra.mrb[0].mxu0 %v881
  %v934 = vpop.f32.mrb[0].mxu0
  %v935 = vadd.f32 0.0, %v934
  %v936 = vpop.f32.mrb[0].mxu0
  %v937 = vpop.f32.mrb[0].mxu0
  %v938 = vadd.f32 0.0, %v937
  %v939 = vpop.f32.mrb[0].mxu0
  %940 = vmatprep.mubr.bf16.mxu0 0
  %941 = vmatmul.mubr.bf16.gmra.mrb[0].mxu0 %v884
  %v942 = vpop.f32.mrb[0].mxu0
  %v943 = vadd.f32 0.0, %v942
  %v944 = vpop.f32.mrb[0].mxu0
  %v945 = vpop.f32.mrb[0].mxu0
  %v946 = vadd.f32 0.0, %v945
  %v947 = vpop.f32.mrb[0].mxu0
  %948 = vmatprep.mubr.bf16.mxu0 0
  %949 = vmatmul.mubr.bf16.gmra.mrb[0].mxu0 %v887
  %v950 = vpop.f32.mrb[0].mxu0
  %v951 = vadd.f32 0.0, %v950
  %v952 = vpop.f32.mrb[0].mxu0
  %v953 = vpop.f32.mrb[0].mxu0
  %v954 = vadd.f32 0.0, %v953
  %v955 = vpop.f32.mrb[0].mxu0
  %956 = vmatprep.mubr.bf16.mxu0 0
  %957 = vmatmul.mubr.bf16.gmra.mrb[0].mxu0 %v890
  %v958 = vpop.f32.mrb[0].mxu0
  %v959 = vadd.f32 0.0, %v958
  %v960 = vpop.f32.mrb[0].mxu0
  %v961 = vpop.f32.mrb[0].mxu0
  %v962 = vpop.f32.mrb[0].mxu0
  %963 = vdwg.mxu0
  %v964 = vadd.f32 %v806, %v927
  %v965 = vadd.f32 %v807, %v930
  %v966 = vadd.f32 %v808, %v935
  %v967 = vadd.f32 %v809, %v938
  %v968 = vadd.f32 %v810, %v943
  %v969 = vadd.f32 %v811, %v946
  %v970 = vadd.f32 %v812, %v951
  %v971 = vadd.f32 %v813, %v954
  %v972 = vadd.f32 %v814, %v959
  %v973 = vld [vmem:[%s0 + $0x28] sm:$0x7]
  %s974 = scalar_lea.vmem %s1, 112
  %v975 = vld [vmem:[%s974] sm:$0xf]
  %v976 = vld [vmem:[%s974 + $0x4] sm:$0xf]
  %v977 = vld [vmem:[%s974 + $0x8] sm:$0xf]
  %v978 = vld [vmem:[%s974 + $0xc] sm:$0xf]
  %v980 = vunpack.c.l.b16 %v973
  %v981 = vpack.c.b16 %v980, %v848
  %vm982 = vsmask.f32 5376
  %v984 = vshrl.u32 %v850, 16
  %v986 = vrot.slane %v984, 2
  %v987 = vshll.u32 %v850, 16
  %v989 = vrot.slane %v987, 3
  %v990 = vor.u32 %v986, %v989
  %v992 = vshrl.u32 %v851, 16
  %v994 = vrot.slane %v992, 2
  %v995 = vshll.u32 %v851, 16
  %v997 = vrot.slane %v995, 3
  %v998 = vor.u32 %v994, %v997
  %v999 = vsel %vm982, %v990, %v998
  %v1001 = vshrl.u32 %v852, 16
  %v1003 = vrot.slane %v1001, 2
  %v1004 = vshll.u32 %v852, 16
  %v1006 = vrot.slane %v1004, 3
  %v1007 = vor.u32 %v1003, %v1006
  %v1008 = vsel %vm982, %v998, %v1007
  %v1010 = vshrl.u32 %v853, 16
  %v1012 = vrot.slane %v1010, 2
  %v1013 = vshll.u32 %v853, 16
  %v1015 = vrot.slane %v1013, 3
  %v1016 = vor.u32 %v1012, %v1015
  %v1017 = vsel %vm982, %v1007, %v1016
  %v1019 = vshrl.u32 %v981, 16
  %v1021 = vrot.slane %v1019, 2
  %v1022 = vshll.u32 %v981, 16
  %v1024 = vrot.slane %v1022, 3
  %v1025 = vor.u32 %v1021, %v1024
  %v1026 = vsel %vm982, %v1016, %v1025
  %v1031 = vunpack.c.l.b16 %v975
  %v1032 = vunpack.c.l.b16 %v976
  %v1033 = vunpack.c.l.b16 %v977
  %v1034 = vunpack.c.l.b16 %v978
  %v1035 = vpack.c.b16 %v1032, %v1031
  %v1036 = vpack.c.b16 %v1034, %v1033
  %v1040 = vsel %vm108, %v999, 0
  %v1043 = vsel %vm108, %v1008, 0
  %v1046 = vsel %vm108, %v1017, 0
  %v1049 = vsel %vm108, %v1026, 0
  %v1052 = vsel %vm108, %v1025, 0
  %1054 = vmatprep.subr.bf16.mxu0 0
  %1055 = vmatpush1.bf16.msra.mxu0 %v1035
  %1056 = vmatprep.subr.bf16.mxu0 0
  %1057 = vmatpush1.bf16.msra.mxu0 %v1036
  %1058 = vmatprep.subr.bf16.mxu0 0
  %1059 = vmatpush1.bf16.msra.mxu0 0
  %1060 = vmatprep.subr.bf16.mxu0 0
  %1061 = vmatpush1.bf16.msra.mxu0 0
  %1062 = vmatprep.subr.bf16.mxu0 0
  %1063 = vmatpush1.bf16.msra.mxu0 0
  %1064 = vmatprep.subr.bf16.mxu0 0
  %1065 = vmatpush1.bf16.msra.mxu0 0
  %1066 = vmatprep.subr.bf16.mxu0 0
  %1067 = vmatpush1.bf16.msra.mxu0 0
  %1068 = vmatprep.subr.bf16.mxu0 0
  %1069 = vmatpush1.bf16.msra.mxu0 0
  %1070 = vmatprep.subr.bf16.mxu0 0
  %1071 = vmatpush1.bf16.msra.mxu0 0
  %1072 = vmatprep.subr.bf16.mxu0 0
  %1073 = vmatpush1.bf16.msra.mxu0 0
  %1074 = vmatprep.subr.bf16.mxu0 0
  %1075 = vmatpush1.bf16.msra.mxu0 0
  %1076 = vmatprep.subr.bf16.mxu0 0
  %1077 = vmatpush1.bf16.msra.mxu0 0
  %1078 = vmatprep.subr.bf16.mxu0 0
  %1079 = vmatpush1.bf16.msra.mxu0 0
  %1080 = vmatprep.subr.bf16.mxu0 0
  %1081 = vmatpush1.bf16.msra.mxu0 0
  %1082 = vmatprep.subr.bf16.mxu0 0
  %1083 = vmatpush1.bf16.msra.mxu0 0
  %1084 = vmatprep.subr.bf16.mxu0 0
  %1085 = vmatpush1.bf16.msra.mxu0 0
  %1086 = vmatprep.mubr.bf16.mxu0 0
  %1087 = vmatmul.mubr.bf16.gmra.mrb[0].mxu0 %v1040
  %v1088 = vpop.f32.mrb[0].mxu0
  %v1089 = vadd.f32 0.0, %v1088
  %v1090 = vpop.f32.mrb[0].mxu0
  %v1091 = vpop.f32.mrb[0].mxu0
  %v1092 = vadd.f32 0.0, %v1091
  %v1093 = vpop.f32.mrb[0].mxu0
  %1094 = vmatprep.mubr.bf16.mxu0 0
  %1095 = vmatmul.mubr.bf16.gmra.mrb[0].mxu0 %v1043
  %v1096 = vpop.f32.mrb[0].mxu0
  %v1097 = vadd.f32 0.0, %v1096
  %v1098 = vpop.f32.mrb[0].mxu0
  %v1099 = vpop.f32.mrb[0].mxu0
  %v1100 = vadd.f32 0.0, %v1099
  %v1101 = vpop.f32.mrb[0].mxu0
  %1102 = vmatprep.mubr.bf16.mxu0 0
  %1103 = vmatmul.mubr.bf16.gmra.mrb[0].mxu0 %v1046
  %v1104 = vpop.f32.mrb[0].mxu0
  %v1105 = vadd.f32 0.0, %v1104
  %v1106 = vpop.f32.mrb[0].mxu0
  %v1107 = vpop.f32.mrb[0].mxu0
  %v1108 = vadd.f32 0.0, %v1107
  %v1109 = vpop.f32.mrb[0].mxu0
  %1110 = vmatprep.mubr.bf16.mxu0 0
  %1111 = vmatmul.mubr.bf16.gmra.mrb[0].mxu0 %v1049
  %v1112 = vpop.f32.mrb[0].mxu0
  %v1113 = vadd.f32 0.0, %v1112
  %v1114 = vpop.f32.mrb[0].mxu0
  %v1115 = vpop.f32.mrb[0].mxu0
  %v1116 = vadd.f32 0.0, %v1115
  %v1117 = vpop.f32.mrb[0].mxu0
  %1118 = vmatprep.mubr.bf16.mxu0 0
  %1119 = vmatmul.mubr.bf16.gmra.mrb[0].mxu0 %v1052
  %v1120 = vpop.f32.mrb[0].mxu0
  %v1121 = vadd.f32 0.0, %v1120
  %v1122 = vpop.f32.mrb[0].mxu0
  %v1123 = vpop.f32.mrb[0].mxu0
  %v1124 = vpop.f32.mrb[0].mxu0
  %1125 = vdwg.mxu0
  %v1126 = vadd.f32 %v964, %v1089
  %v1127 = vadd.f32 %v965, %v1092
  %v1128 = vadd.f32 %v966, %v1097
  %v1129 = vadd.f32 %v967, %v1100
  %v1130 = vadd.f32 %v968, %v1105
  %v1131 = vadd.f32 %v969, %v1108
  %v1132 = vadd.f32 %v970, %v1113
  %v1133 = vadd.f32 %v971, %v1116
  %v1134 = vadd.f32 %v972, %v1121
  %v1135 = vld [vmem:[%s0 + $0x4] sm:$0x8]
  %s1136 = scalar_lea.vmem %s1, 128
  %v1137 = vld [vmem:[%s1136] sm:$0xf]
  %v1138 = vld [vmem:[%s1136 + $0x4] sm:$0xf]
  %v1139 = vld [vmem:[%s1136 + $0x8] sm:$0xf]
  %v1140 = vld [vmem:[%s1136 + $0xc] sm:$0xf]
  %v1142 = vunpack.c.l.b16 %v1135
  %v1143 = vpack.c.b16 %v841, %v1142
  %v1144 = vrot.slane %v1143, 3
  %v1145 = vrot.slane %v851, 3
  %v1146 = vsel %vm432, %v1144, %v1145
  %v1147 = vrot.slane %v852, 3
  %v1148 = vsel %vm432, %v1145, %v1147
  %v1149 = vrot.slane %v853, 3
  %v1150 = vsel %vm432, %v1147, %v1149
  %v1151 = vrot.slane %v981, 3
  %v1152 = vsel %vm432, %v1149, %v1151
  %v1157 = vunpack.c.l.b16 %v1137
  %v1158 = vunpack.c.l.b16 %v1138
  %v1159 = vunpack.c.l.b16 %v1139
  %v1160 = vunpack.c.l.b16 %v1140
  %v1161 = vpack.c.b16 %v1158, %v1157
  %v1162 = vpack.c.b16 %v1160, %v1159
  %v1166 = vsel %vm108, %v1146, 0
  %v1169 = vsel %vm108, %v1148, 0
  %v1172 = vsel %vm108, %v1150, 0
  %v1175 = vsel %vm108, %v1152, 0
  %v1178 = vsel %vm108, %v1151, 0
  %1180 = vmatprep.subr.bf16.mxu0 0
  %1181 = vmatpush1.bf16.msra.mxu0 %v1161
  %1182 = vmatprep.subr.bf16.mxu0 0
  %1183 = vmatpush1.bf16.msra.mxu0 %v1162
  %1184 = vmatprep.subr.bf16.mxu0 0
  %1185 = vmatpush1.bf16.msra.mxu0 0
  %1186 = vmatprep.subr.bf16.mxu0 0
  %1187 = vmatpush1.bf16.msra.mxu0 0
  %1188 = vmatprep.subr.bf16.mxu0 0
  %1189 = vmatpush1.bf16.msra.mxu0 0
  %1190 = vmatprep.subr.bf16.mxu0 0
  %1191 = vmatpush1.bf16.msra.mxu0 0
  %1192 = vmatprep.subr.bf16.mxu0 0
  %1193 = vmatpush1.bf16.msra.mxu0 0
  %1194 = vmatprep.subr.bf16.mxu0 0
  %1195 = vmatpush1.bf16.msra.mxu0 0
  %1196 = vmatprep.subr.bf16.mxu0 0
  %1197 = vmatpush1.bf16.msra.mxu0 0
  %1198 = vmatprep.subr.bf16.mxu0 0
  %1199 = vmatpush1.bf16.msra.mxu0 0
  %1200 = vmatprep.subr.bf16.mxu0 0
  %1201 = vmatpush1.bf16.msra.mxu0 0
  %1202 = vmatprep.subr.bf16.mxu0 0
  %1203 = vmatpush1.bf16.msra.mxu0 0
  %1204 = vmatprep.subr.bf16.mxu0 0
  %1205 = vmatpush1.bf16.msra.mxu0 0
  %1206 = vmatprep.subr.bf16.mxu0 0
  %1207 = vmatpush1.bf16.msra.mxu0 0
  %1208 = vmatprep.subr.bf16.mxu0 0
  %1209 = vmatpush1.bf16.msra.mxu0 0
  %1210 = vmatprep.subr.bf16.mxu0 0
  %1211 = vmatpush1.bf16.msra.mxu0 0
  %1212 = vmatprep.mubr.bf16.mxu0 0
  %1213 = vmatmul.mubr.bf16.gmra.mrb[0].mxu0 %v1166
  %v1214 = vpop.f32.mrb[0].mxu0
  %v1215 = vadd.f32 0.0, %v1214
  %v1216 = vpop.f32.mrb[0].mxu0
  %v1217 = vpop.f32.mrb[0].mxu0
  %v1218 = vadd.f32 0.0, %v1217
  %v1219 = vpop.f32.mrb[0].mxu0
  %1220 = vmatprep.mubr.bf16.mxu0 0
  %1221 = vmatmul.mubr.bf16.gmra.mrb[0].mxu0 %v1169
  %v1222 = vpop.f32.mrb[0].mxu0
  %v1223 = vadd.f32 0.0, %v1222
  %v1224 = vpop.f32.mrb[0].mxu0
  %v1225 = vpop.f32.mrb[0].mxu0
  %v1226 = vadd.f32 0.0, %v1225
  %v1227 = vpop.f32.mrb[0].mxu0
  %1228 = vmatprep.mubr.bf16.mxu0 0
  %1229 = vmatmul.mubr.bf16.gmra.mrb[0].mxu0 %v1172
  %v1230 = vpop.f32.mrb[0].mxu0
  %v1231 = vadd.f32 0.0, %v1230
  %v1232 = vpop.f32.mrb[0].mxu0
  %v1233 = vpop.f32.mrb[0].mxu0
  %v1234 = vadd.f32 0.0, %v1233
  %v1235 = vpop.f32.mrb[0].mxu0
  %1236 = vmatprep.mubr.bf16.mxu0 0
  %1237 = vmatmul.mubr.bf16.gmra.mrb[0].mxu0 %v1175
  %v1238 = vpop.f32.mrb[0].mxu0
  %v1239 = vadd.f32 0.0, %v1238
  %v1240 = vpop.f32.mrb[0].mxu0
  %v1241 = vpop.f32.mrb[0].mxu0
  %v1242 = vadd.f32 0.0, %v1241
  %v1243 = vpop.f32.mrb[0].mxu0
  %1244 = vmatprep.mubr.bf16.mxu0 0
  %1245 = vmatmul.mubr.bf16.gmra.mrb[0].mxu0 %v1178
  %v1246 = vpop.f32.mrb[0].mxu0
  %v1247 = vadd.f32 0.0, %v1246
  %v1248 = vpop.f32.mrb[0].mxu0
  %v1249 = vpop.f32.mrb[0].mxu0
  %v1250 = vpop.f32.mrb[0].mxu0
  %1251 = vdwg.mxu0
  %v1252 = vadd.f32 %v1126, %v1215
  %v1253 = vadd.f32 %v1127, %v1218
  %v1254 = vadd.f32 %v1128, %v1223
  %v1255 = vadd.f32 %v1129, %v1226
  %v1256 = vadd.f32 %v1130, %v1231
  %v1257 = vadd.f32 %v1131, %v1234
  %v1258 = vadd.f32 %v1132, %v1239
  %v1259 = vadd.f32 %v1133, %v1242
  %v1260 = vadd.f32 %v1134, %v1247
  %v1261 = vpack.c.bf16 %v1253, %v1252
  %v1262 = vpack.c.bf16 %v1255, %v1254
  %v1263 = vpack.c.bf16 %v1257, %v1256
  %v1264 = vpack.c.bf16 %v1259, %v1258
  %v1265 = vpack.c.bf16 %v1260, %v1260
  %v1271 = vunpack.c.l.b16 %v1261
  %v1272 = vunpack.c.h.b16 %v1261
  %v1273 = vunpack.c.l.b16 %v1262
  %v1274 = vunpack.c.h.b16 %v1262
  %v1275 = vunpack.c.l.b16 %v1263
  %v1276 = vunpack.c.h.b16 %v1263
  %v1277 = vunpack.c.l.b16 %v1264
  %v1278 = vunpack.c.h.b16 %v1264
  %v1279 = vunpack.c.l.b16 %v1265
  %v1280 = vpack.c.b16 %v1271, %v1271
  %v1281 = vpack.c.b16 %v1272, %v1272
  %v1282 = vpack.c.b16 %v1273, %v1273
  %v1283 = vpack.c.b16 %v1274, %v1274
  %v1284 = vpack.c.b16 %v1275, %v1275
  %v1285 = vpack.c.b16 %v1276, %v1276
  %v1286 = vpack.c.b16 %v1277, %v1277
  %v1287 = vpack.c.b16 %v1278, %v1278
  %v1288 = vpack.c.b16 %v1279, %v1279
  %1298 = vst [vmem:[%s2] sm:$0xf] %v1280
  %1299 = vst [vmem:[%s2 + $0x4] sm:$0xf] %v1281
  %1300 = vst [vmem:[%s2 + $0x8] sm:$0xf] %v1282
  %1301 = vst [vmem:[%s2 + $0xc] sm:$0xf] %v1283
  %1302 = vst [vmem:[%s2 + $0x10] sm:$0xf] %v1284
  %1303 = vst [vmem:[%s2 + $0x14] sm:$0xf] %v1285
  %1304 = vst [vmem:[%s2 + $0x18] sm:$0xf] %v1286
  %1305 = vst [vmem:[%s2 + $0x1c] sm:$0xf] %v1287
  %1306 = vst [vmem:[%s2 + $0x20] sm:$0xf] %v1288
  // Predicated region
  $region10: #{densenet_forward.16} parent=0 // pred_check
    _
  $region11: #{densenet_forward.16} parent=0 // pred_check_branch
    %1308 = sbr.rel (0) target = $region13
  $region12: #{densenet_forward.16} parent=0 // pred_region
    _
  $region13: #{densenet_forward.16} parent=0 // pred_fallthru
    _
  // Predicated region
  $region14: #{densenet_forward.16} parent=0 // pred_check
    _
  $region15: #{densenet_forward.16} parent=0 // pred_check_branch
    %1310 = sbr.rel (0) target = $region17
  $region16: #{densenet_forward.16} parent=0 // pred_region
    _
  $region17: #{densenet_forward.16} parent=0 // pred_fallthru
    _

// kernel: densenet_forward.20
$region0: #{densenet_forward.20}
  #allocation0 [shape = 'u32[]', space=smem, size = 0x4, offset = 0x4, fixed_abs, tag = 'smem constant byte address 0x4 - core index']
  #allocation1 [shape = 'u32[144,128]{1,0:T(1,128)}', space=vmem, size = 0x12000, scoped, tag = 'internal scratch']
  %s0 = inlined_call_operand.vmem [shape: bf16[37,16], index: 0, kind: input, shape index: {}]
  %s1 = inlined_call_operand.vmem [shape: bf16[32,16], index: 1, kind: output, shape index: {}]
  %s2 = sld [smem:[#allocation0]]
  $region14: #{densenet_forward.20} parent=0
    _
  %s4 = ssub.s32 1, %s2
  %s5 = scalar_select 0, %s4, %s2
  // Predicated region
  $region2: #{densenet_forward.20} parent=0 // pred_check
    _
  $region3: #{densenet_forward.20} parent=0 // pred_check_branch
    %7 = sbr.rel (0) target = $region5
  $region4: #{densenet_forward.20} parent=0 // pred_region
    _
  $region5: #{densenet_forward.20} parent=0 // pred_fallthru
    _
  %v8 = vld [vmem:[%s0] sm:$0xf]
  %v9 = vld [vmem:[%s0 + $0x4] sm:$0xf]
  %v10 = vld [vmem:[%s0 + $0x8] sm:$0xf]
  %v11 = vld [vmem:[%s0 + $0xc] sm:$0xf]
  %v12 = vunpack.c.l.bf16 %v8
  %v13 = vunpack.c.l.bf16 %v9
  %v14 = vunpack.c.l.bf16 %v10
  %v15 = vunpack.c.l.bf16 %v11
  %v16 = vld [vmem:[%s0 + $0x10] sm:$0x1]
  %v17 = vunpack.c.l.bf16 %v16
  %vm23 = vcmask 1046528
  %v24 = vrot.slane %v12, 1
  %v25 = vrot.slane %v13, 1
  %v26 = vsel %vm23, %v24, %v25
  %v27 = vrot.slane %v14, 1
  %v28 = vsel %vm23, %v25, %v27
  %v29 = vrot.slane %v15, 1
  %v30 = vsel %vm23, %v27, %v29
  %v31 = vrot.slane %v17, 1
  %v32 = vsel %vm23, %v29, %v31
  %v37 = vadd.f32 %v12, %v26
  %v38 = vadd.f32 %v13, %v28
  %v39 = vadd.f32 %v14, %v30
  %v40 = vadd.f32 %v15, %v32
  %v41 = vld [vmem:[%s0] sm:$0xc]
  %v42 = vld [vmem:[%s0 + $0x10] sm:$0x3]
  %v43 = vunpack.c.l.bf16 %v41
  %v44 = vunpack.c.l.bf16 %v42
  %vm47 = vcmask 1043456
  %v48 = vrot.slane %v43, 4
  %v49 = vrot.slane %v13, 4
  %v50 = vsel %vm47, %v48, %v49
  %v51 = vrot.slane %v14, 4
  %v52 = vsel %vm47, %v49, %v51
  %v53 = vrot.slane %v15, 4
  %v54 = vsel %vm47, %v51, %v53
  %v55 = vrot.slane %v44, 4
  %v56 = vsel %vm47, %v53, %v55
  %v61 = vadd.f32 %v37, %v50
  %v62 = vadd.f32 %v38, %v52
  %v63 = vadd.f32 %v39, %v54
  %v64 = vadd.f32 %v40, %v56
  %v65 = vld [vmem:[%s0 + $0x10] sm:$0x7]
  %v66 = vunpack.c.l.bf16 %v65
  %vm68 = vcmask 1042432
  %v69 = vrot.slane %v43, 5
  %v70 = vrot.slane %v13, 5
  %v71 = vsel %vm68, %v69, %v70
  %v72 = vrot.slane %v14, 5
  %v73 = vsel %vm68, %v70, %v72
  %v74 = vrot.slane %v15, 5
  %v75 = vsel %vm68, %v72, %v74
  %v76 = vrot.slane %v66, 5
  %v77 = vsel %vm68, %v74, %v76
  %v82 = vadd.f32 %v61, %v71
  %v83 = vadd.f32 %v62, %v73
  %v84 = vadd.f32 %v63, %v75
  %v85 = vadd.f32 %v64, %v77
  %v86 = vmul.f32 %v82, 0.25
  %v87 = vmul.f32 %v83, 0.25
  %v88 = vmul.f32 %v84, 0.25
  %v89 = vmul.f32 %v85, 0.25
  %v90 = vpack.c.bf16 %v87, %v86
  %v91 = vpack.c.bf16 %v89, %v88
  %v94 = vunpack.c.l.b16 %v90
  %v95 = vunpack.c.h.b16 %v90
  %v96 = vunpack.c.l.b16 %v91
  %v97 = vunpack.c.h.b16 %v91
  %v98 = vpack.c.b16 %v94, %v94
  %v99 = vpack.c.b16 %v95, %v95
  %v100 = vpack.c.b16 %v96, %v96
  %v101 = vpack.c.b16 %v97, %v97
  %vm106 = vcmask 125952
  %107 = vst.msk [vmem:[%s1] sm:$0xf] %vm106, %v98
  %108 = vst.msk [vmem:[%s1 + $0x4] sm:$0xf] %vm106, %v99
  %109 = vst.msk [vmem:[%s1 + $0x8] sm:$0xf] %vm106, %v100
  %110 = vst.msk [vmem:[%s1 + $0xc] sm:$0xf] %vm106, %v101
  // Predicated region
  $region6: #{densenet_forward.20} parent=0 // pred_check
    _
  $region7: #{densenet_forward.20} parent=0 // pred_check_branch
    %112 = sbr.rel (0) target = $region9
  $region8: #{densenet_forward.20} parent=0 // pred_region
    _
  $region9: #{densenet_forward.20} parent=0 // pred_fallthru
    _
  // Predicated region
  $region10: #{densenet_forward.20} parent=0 // pred_check
    _
  $region11: #{densenet_forward.20} parent=0 // pred_check_branch
    %114 = sbr.rel (0) target = $region13
  $region12: #{densenet_forward.20} parent=0 // pred_region
    _
  $region13: #{densenet_forward.20} parent=0 // pred_fallthru
    _

// kernel: densenet_forward.19
$region0: #{densenet_forward.19}
  #allocation0 [shape = 'u32[]', space=smem, size = 0x4, offset = 0x4, fixed_abs, tag = 'smem constant byte address 0x4 - core index']
  #allocation1 [shape = 'u32[144,128]{1,0:T(1,128)}', space=vmem, size = 0x12000, scoped, tag = 'internal scratch']
  #allocation2 [shape = 'f32[32,128]{1,0:T(8,128)}', space=vmem, size = 0x4000, scoped, tag = 'scratch operand']
  %s0 = inlined_call_operand.vmem [shape: bf16[32,32], index: 0, kind: input, shape index: {}]
  %s1 = inlined_call_operand.vmem [shape: bf16[32,128], index: 1, kind: input, shape index: {}]
  %s2 = inlined_call_operand.vmem [shape: f32[1,32], index: 2, kind: input, shape index: {}]
  %s3 = inlined_call_operand.vmem [shape: f32[1,32], index: 3, kind: input, shape index: {}]
  %s4 = inlined_call_operand.vmem [shape: bf16[32,128], index: 4, kind: output, shape index: {}]
  %s5 = sld [smem:[#allocation0]]
  $region34: #{densenet_forward.19} parent=0
    _
  %s7 = ssub.s32 1, %s5
  %s8 = scalar_select 0, %s7, %s5
  // Predicated region
  $region2: #{densenet_forward.19} parent=0 // pred_check
    _
  $region3: #{densenet_forward.19} parent=0 // pred_check_branch
    %10 = sbr.rel (0) target = $region5
  $region4: #{densenet_forward.19} parent=0 // pred_region
    _
  $region5: #{densenet_forward.19} parent=0 // pred_fallthru
    _
  // Predicated region
  $region6: #{densenet_forward.19} parent=0 // pred_check
    _
  $region7: #{densenet_forward.19} parent=0 // pred_check_branch
    %12 = sbr.rel (0) target = $region9
  $region8: #{densenet_forward.19} parent=0 // pred_region
    _
  $region9: #{densenet_forward.19} parent=0 // pred_fallthru
    _
  // Predicated region
  $region10: #{densenet_forward.19} parent=0 // pred_check
    _
  $region11: #{densenet_forward.19} parent=0 // pred_check_branch
    %14 = sbr.rel (0) target = $region13
  $region12: #{densenet_forward.19} parent=0 // pred_region
    _
  $region13: #{densenet_forward.19} parent=0 // pred_fallthru
    _
  // Predicated region
  $region14: #{densenet_forward.19} parent=0 // pred_check
    _
  $region15: #{densenet_forward.19} parent=0 // pred_check_branch
    %16 = sbr.rel (0) target = $region17
  $region16: #{densenet_forward.19} parent=0 // pred_region
    _
  $region17: #{densenet_forward.19} parent=0 // pred_fallthru
    _
  %p18 = scmp.eq.s32.totalorder 0, 0
  // Predicated region
  $region18: #{densenet_forward.19} parent=0 // pred_check
    %p19 = pneg %p18
  $region19: #{densenet_forward.19} parent=0 // pred_check_branch
    %21 = sbr.rel (%p19) target = $region21
  $region20: #{densenet_forward.19} parent=0 // pred_region
    %22 = vst [vmem:[#allocation2] sm:$0xff] 0.0
    %23 = vst [vmem:[#allocation2 + $0x8] sm:$0xff] 0.0
    %24 = vst [vmem:[#allocation2 + $0x10] sm:$0xff] 0.0
    %25 = vst [vmem:[#allocation2 + $0x18] sm:$0xff] 0.0
  $region21: #{densenet_forward.19} parent=0 // pred_fallthru
    _
  %v26 = vld [vmem:[%s0] sm:$0xf]
  %v27 = vld [vmem:[%s0 + $0x4] sm:$0xf]
  %v28 = vld [vmem:[%s0 + $0x8] sm:$0xf]
  %v29 = vld [vmem:[%s0 + $0xc] sm:$0xf]
  %v30 = vunpack.c.l.bf16 %v26
  %v31 = vunpack.c.l.bf16 %v27
  %v32 = vunpack.c.l.bf16 %v28
  %v33 = vunpack.c.l.bf16 %v29
  %v34 = vld [vmem:[%s2] sm:$0x1]
  %v36 = vlaneseq
  %v37 = vshrl.u32 %v36, 7
  %v38 = vsub.s32 0, %v37
  %v39 = vrot.slane %v34, %v38
  %v41 = vmul.f32 %v30, %v39
  %v42 = vmul.f32 %v31, %v39
  %v43 = vmul.f32 %v32, %v39
  %v44 = vmul.f32 %v33, %v39
  %v45 = vld [vmem:[%s3] sm:$0x1]
  %v47 = vlaneseq
  %v48 = vshrl.u32 %v47, 7
  %v49 = vsub.s32 0, %v48
  %v50 = vrot.slane %v45, %v49
  %v52 = vadd.f32 %v41, %v50
  %v53 = vadd.f32 %v42, %v50
  %v54 = vadd.f32 %v43, %v50
  %v55 = vadd.f32 %v44, %v50
  %v56 = vmax.f32 %v52, 0.0
  %v57 = vmax.f32 %v53, 0.0
  %v58 = vmax.f32 %v54, 0.0
  %v59 = vmax.f32 %v55, 0.0
  %v60 = vpack.c.bf16 %v57, %v56
  %v61 = vpack.c.bf16 %v59, %v58
  %v62 = vld [vmem:[#allocation2] sm:$0xff]
  %v63 = vld [vmem:[#allocation2 + $0x8] sm:$0xff]
  %v64 = vld [vmem:[#allocation2 + $0x10] sm:$0xff]
  %v65 = vld [vmem:[#allocation2 + $0x18] sm:$0xff]
  %v66 = vld [vmem:[%s1] sm:$0xf]
  %v67 = vld [vmem:[%s1 + $0x4] sm:$0xf]
  %v68 = vld [vmem:[%s1 + $0x8] sm:$0xf]
  %v69 = vld [vmem:[%s1 + $0xc] sm:$0xf]
  %v74 = vunpack.c.l.b16 %v66
  %v75 = vunpack.c.l.b16 %v67
  %v76 = vunpack.c.l.b16 %v68
  %v77 = vunpack.c.l.b16 %v69
  %v78 = vpack.c.b16 %v75, %v74
  %v79 = vpack.c.b16 %v77, %v76
  %vm82 = vcmask 261120
  %v84 = vsel %vm82, %v60, 0
  %v87 = vsel %vm82, %v61, 0
  %89 = vmatprep.subr.bf16.mxu0 0
  %90 = vmatpush1.bf16.msra.mxu0 %v78
  %91 = vmatprep.subr.bf16.mxu0 0
  %92 = vmatpush1.bf16.msra.mxu0 %v79
  %93 = vmatprep.subr.bf16.mxu0 0
  %94 = vmatpush1.bf16.msra.mxu0 0
  %95 = vmatprep.subr.bf16.mxu0 0
  %96 = vmatpush1.bf16.msra.mxu0 0
  %97 = vmatprep.subr.bf16.mxu0 0
  %98 = vmatpush1.bf16.msra.mxu0 0
  %99 = vmatprep.subr.bf16.mxu0 0
  %100 = vmatpush1.bf16.msra.mxu0 0
  %101 = vmatprep.subr.bf16.mxu0 0
  %102 = vmatpush1.bf16.msra.mxu0 0
  %103 = vmatprep.subr.bf16.mxu0 0
  %104 = vmatpush1.bf16.msra.mxu0 0
  %105 = vmatprep.subr.bf16.mxu0 0
  %106 = vmatpush1.bf16.msra.mxu0 0
  %107 = vmatprep.subr.bf16.mxu0 0
  %108 = vmatpush1.bf16.msra.mxu0 0
  %109 = vmatprep.subr.bf16.mxu0 0
  %110 = vmatpush1.bf16.msra.mxu0 0
  %111 = vmatprep.subr.bf16.mxu0 0
  %112 = vmatpush1.bf16.msra.mxu0 0
  %113 = vmatprep.subr.bf16.mxu0 0
  %114 = vmatpush1.bf16.msra.mxu0 0
  %115 = vmatprep.subr.bf16.mxu0 0
  %116 = vmatpush1.bf16.msra.mxu0 0
  %117 = vmatprep.subr.bf16.mxu0 0
  %118 = vmatpush1.bf16.msra.mxu0 0
  %119 = vmatprep.subr.bf16.mxu0 0
  %120 = vmatpush1.bf16.msra.mxu0 0
  %121 = vmatprep.mubr.bf16.mxu0 0
  %122 = vmatmul.mubr.bf16.gmra.mrb[0].mxu0 %v84
  %v123 = vpop.f32.mrb[0].mxu0
  %v124 = vadd.f32 0.0, %v123
  %v125 = vpop.f32.mrb[0].mxu0
  %v126 = vpop.f32.mrb[0].mxu0
  %v127 = vadd.f32 0.0, %v126
  %v128 = vpop.f32.mrb[0].mxu0
  %129 = vmatprep.mubr.bf16.mxu0 0
  %130 = vmatmul.mubr.bf16.gmra.mrb[0].mxu0 %v87
  %v131 = vpop.f32.mrb[0].mxu0
  %v132 = vadd.f32 0.0, %v131
  %v133 = vpop.f32.mrb[0].mxu0
  %v134 = vpop.f32.mrb[0].mxu0
  %v135 = vadd.f32 0.0, %v134
  %v136 = vpop.f32.mrb[0].mxu0
  %137 = vdwg.mxu0
  %v138 = vadd.f32 %v62, %v124
  %v139 = vadd.f32 %v63, %v127
  %v140 = vadd.f32 %v64, %v132
  %v141 = vadd.f32 %v65, %v135
  %142 = vst [vmem:[#allocation2] sm:$0xff] %v138
  %143 = vst [vmem:[#allocation2 + $0x8] sm:$0xff] %v139
  %144 = vst [vmem:[#allocation2 + $0x10] sm:$0xff] %v140
  %145 = vst [vmem:[#allocation2 + $0x18] sm:$0xff] %v141
  // Predicated region
  $region22: #{densenet_forward.19} parent=0 // pred_check
    %p146 = pneg %p18
  $region23: #{densenet_forward.19} parent=0 // pred_check_branch
    %148 = sbr.rel (%p146) target = $region25
  $region24: #{densenet_forward.19} parent=0 // pred_region
    %v149 = vld [vmem:[#allocation2] sm:$0xff]
    %v150 = vld [vmem:[#allocation2 + $0x8] sm:$0xff]
    %v151 = vld [vmem:[#allocation2 + $0x10] sm:$0xff]
    %v152 = vld [vmem:[#allocation2 + $0x18] sm:$0xff]
    %v153 = vpack.c.bf16 %v150, %v149
    %v154 = vpack.c.bf16 %v152, %v151
    %v157 = vunpack.c.l.b16 %v153
    %v158 = vunpack.c.h.b16 %v153
    %v159 = vunpack.c.l.b16 %v154
    %v160 = vunpack.c.h.b16 %v154
    %v161 = vpack.c.b16 %v157, %v157
    %v162 = vpack.c.b16 %v158, %v158
    %v163 = vpack.c.b16 %v159, %v159
    %v164 = vpack.c.b16 %v160, %v160
    %169 = vst [vmem:[%s4] sm:$0xf] %v161
    %170 = vst [vmem:[%s4 + $0x4] sm:$0xf] %v162
    %171 = vst [vmem:[%s4 + $0x8] sm:$0xf] %v163
    %172 = vst [vmem:[%s4 + $0xc] sm:$0xf] %v164
  $region25: #{densenet_forward.19} parent=0 // pred_fallthru
    _
  // Predicated region
  $region26: #{densenet_forward.19} parent=0 // pred_check
    _
  $region27: #{densenet_forward.19} parent=0 // pred_check_branch
    %174 = sbr.rel (0) target = $region29
  $region28: #{densenet_forward.19} parent=0 // pred_region
    _
  $region29: #{densenet_forward.19} parent=0 // pred_fallthru
    _
  // Predicated region
  $region30: #{densenet_forward.19} parent=0 // pred_check
    _
  $region31: #{densenet_forward.19} parent=0 // pred_check_branch
    %176 = sbr.rel (0) target = $region33
  $region32: #{densenet_forward.19} parent=0 // pred_region
    _
  $region33: #{densenet_forward.19} parent=0 // pred_fallthru
    _

// kernel: densenet_forward.21
$region0: #{densenet_forward.21}
  #allocation0 [shape = 'u32[]', space=smem, size = 0x4, offset = 0x4, fixed_abs, tag = 'smem constant byte address 0x4 - core index']
  #allocation1 [shape = 'u32[144,128]{1,0:T(1,128)}', space=vmem, size = 0x12000, scoped, tag = 'internal scratch']
  #allocation2 [shape = 'f32[8,128]{1,0:T(8,128)}', space=vmem, size = 0x1000, scoped, tag = 'scratch operand']
  %s0 = inlined_call_operand.vmem [shape: bf16[8,16], index: 0, kind: input, shape index: {}]
  %s1 = inlined_call_operand.vmem [shape: bf16[16,128], index: 1, kind: input, shape index: {}]
  %s2 = inlined_call_operand.vmem [shape: f32[1,16], index: 2, kind: input, shape index: {}]
  %s3 = inlined_call_operand.vmem [shape: f32[1,16], index: 3, kind: input, shape index: {}]
  %s4 = inlined_call_operand.vmem [shape: f32[1,128], index: 4, kind: input, shape index: {}]
  %s5 = inlined_call_operand.vmem [shape: f32[1,128], index: 5, kind: input, shape index: {}]
  %s6 = inlined_call_operand.vmem [shape: bf16[8,128], index: 6, kind: output, shape index: {}]
  %s7 = sld [smem:[#allocation0]]
  $region42: #{densenet_forward.21} parent=0
    _
  %s9 = ssub.s32 1, %s7
  %s10 = scalar_select 0, %s9, %s7
  // Predicated region
  $region2: #{densenet_forward.21} parent=0 // pred_check
    _
  $region3: #{densenet_forward.21} parent=0 // pred_check_branch
    %12 = sbr.rel (0) target = $region5
  $region4: #{densenet_forward.21} parent=0 // pred_region
    _
  $region5: #{densenet_forward.21} parent=0 // pred_fallthru
    _
  // Predicated region
  $region6: #{densenet_forward.21} parent=0 // pred_check
    _
  $region7: #{densenet_forward.21} parent=0 // pred_check_branch
    %14 = sbr.rel (0) target = $region9
  $region8: #{densenet_forward.21} parent=0 // pred_region
    _
  $region9: #{densenet_forward.21} parent=0 // pred_fallthru
    _
  // Predicated region
  $region10: #{densenet_forward.21} parent=0 // pred_check
    _
  $region11: #{densenet_forward.21} parent=0 // pred_check_branch
    %16 = sbr.rel (0) target = $region13
  $region12: #{densenet_forward.21} parent=0 // pred_region
    _
  $region13: #{densenet_forward.21} parent=0 // pred_fallthru
    _
  // Predicated region
  $region14: #{densenet_forward.21} parent=0 // pred_check
    _
  $region15: #{densenet_forward.21} parent=0 // pred_check_branch
    %18 = sbr.rel (0) target = $region17
  $region16: #{densenet_forward.21} parent=0 // pred_region
    _
  $region17: #{densenet_forward.21} parent=0 // pred_fallthru
    _
  // Predicated region
  $region18: #{densenet_forward.21} parent=0 // pred_check
    _
  $region19: #{densenet_forward.21} parent=0 // pred_check_branch
    %20 = sbr.rel (0) target = $region21
  $region20: #{densenet_forward.21} parent=0 // pred_region
    _
  $region21: #{densenet_forward.21} parent=0 // pred_fallthru
    _
  // Predicated region
  $region22: #{densenet_forward.21} parent=0 // pred_check
    _
  $region23: #{densenet_forward.21} parent=0 // pred_check_branch
    %22 = sbr.rel (0) target = $region25
  $region24: #{densenet_forward.21} parent=0 // pred_region
    _
  $region25: #{densenet_forward.21} parent=0 // pred_fallthru
    _
  %p24 = scmp.eq.s32.totalorder 0, 0
  // Predicated region
  $region26: #{densenet_forward.21} parent=0 // pred_check
    %p25 = pneg %p24
  $region27: #{densenet_forward.21} parent=0 // pred_check_branch
    %27 = sbr.rel (%p25) target = $region29
  $region28: #{densenet_forward.21} parent=0 // pred_region
    %28 = vst [vmem:[#allocation2] sm:$0xff] 0.0
  $region29: #{densenet_forward.21} parent=0 // pred_fallthru
    _
  %v29 = vld [vmem:[%s0] sm:$0xf]
  %v30 = vunpack.c.l.bf16 %v29
  %v31 = vld [vmem:[%s2] sm:$0x1]
  %v33 = vlaneseq
  %v34 = vshrl.u32 %v33, 7
  %v35 = vsub.s32 0, %v34
  %v36 = vrot.slane %v31, %v35
  %v38 = vmul.f32 %v30, %v36
  %v39 = vld [vmem:[%s3] sm:$0x1]
  %v41 = vlaneseq
  %v42 = vshrl.u32 %v41, 7
  %v43 = vsub.s32 0, %v42
  %v44 = vrot.slane %v39, %v43
  %v46 = vadd.f32 %v38, %v44
  %v47 = vmax.f32 %v46, 0.0
  %v48 = vpack.c.bf16 %v47, %v47
  %v49 = vld [vmem:[#allocation2] sm:$0xff]
  %v50 = vld [vmem:[%s1] sm:$0xf]
  %v51 = vld [vmem:[%s1 + $0x4] sm:$0xf]
  %v54 = vunpack.c.l.b16 %v50
  %v55 = vunpack.c.l.b16 %v51
  %v56 = vpack.c.b16 %v55, %v54
  %vm58 = vcmask 130048
  %v60 = vsel %vm58, %v48, 0
  %62 = vmatprep.subr.bf16.mxu0 0
  %63 = vmatpush1.bf16.msra.mxu0 %v56
  %64 = vmatprep.subr.bf16.mxu0 0
  %65 = vmatpush1.bf16.msra.mxu0 0
  %66 = vmatprep.subr.bf16.mxu0 0
  %67 = vmatpush1.bf16.msra.mxu0 0
  %68 = vmatprep.subr.bf16.mxu0 0
  %69 = vmatpush1.bf16.msra.mxu0 0
  %70 = vmatprep.subr.bf16.mxu0 0
  %71 = vmatpush1.bf16.msra.mxu0 0
  %72 = vmatprep.subr.bf16.mxu0 0
  %73 = vmatpush1.bf16.msra.mxu0 0
  %74 = vmatprep.subr.bf16.mxu0 0
  %75 = vmatpush1.bf16.msra.mxu0 0
  %76 = vmatprep.subr.bf16.mxu0 0
  %77 = vmatpush1.bf16.msra.mxu0 0
  %78 = vmatprep.subr.bf16.mxu0 0
  %79 = vmatpush1.bf16.msra.mxu0 0
  %80 = vmatprep.subr.bf16.mxu0 0
  %81 = vmatpush1.bf16.msra.mxu0 0
  %82 = vmatprep.subr.bf16.mxu0 0
  %83 = vmatpush1.bf16.msra.mxu0 0
  %84 = vmatprep.subr.bf16.mxu0 0
  %85 = vmatpush1.bf16.msra.mxu0 0
  %86 = vmatprep.subr.bf16.mxu0 0
  %87 = vmatpush1.bf16.msra.mxu0 0
  %88 = vmatprep.subr.bf16.mxu0 0
  %89 = vmatpush1.bf16.msra.mxu0 0
  %90 = vmatprep.subr.bf16.mxu0 0
  %91 = vmatpush1.bf16.msra.mxu0 0
  %92 = vmatprep.subr.bf16.mxu0 0
  %93 = vmatpush1.bf16.msra.mxu0 0
  %94 = vmatprep.mubr.bf16.mxu0 0
  %95 = vmatmul.mubr.bf16.gmra.mrb[0].mxu0 %v60
  %v96 = vpop.f32.mrb[0].mxu0
  %v97 = vadd.f32 0.0, %v96
  %v98 = vpop.f32.mrb[0].mxu0
  %v99 = vpop.f32.mrb[0].mxu0
  %v100 = vpop.f32.mrb[0].mxu0
  %101 = vdwg.mxu0
  %v102 = vadd.f32 %v49, %v97
  %103 = vst [vmem:[#allocation2] sm:$0xff] %v102
  // Predicated region
  $region30: #{densenet_forward.21} parent=0 // pred_check
    %p104 = pneg %p24
  $region31: #{densenet_forward.21} parent=0 // pred_check_branch
    %106 = sbr.rel (%p104) target = $region33
  $region32: #{densenet_forward.21} parent=0 // pred_region
    %v107 = vld [vmem:[#allocation2] sm:$0xff]
    %v108 = vld [vmem:[%s4] sm:$0x1]
    %v110 = vlaneseq
    %v111 = vshrl.u32 %v110, 7
    %v112 = vsub.s32 0, %v111
    %v113 = vrot.slane %v108, %v112
    %v115 = vmul.f32 %v107, %v113
    %v116 = vld [vmem:[%s5] sm:$0x1]
    %v118 = vlaneseq
    %v119 = vshrl.u32 %v118, 7
    %v120 = vsub.s32 0, %v119
    %v121 = vrot.slane %v116, %v120
    %v123 = vadd.f32 %v115, %v121
    %v124 = vmax.f32 %v123, 0.0
    %v125 = vpack.c.bf16 %v124, %v124
    %126 = vst [vmem:[%s6] sm:$0xf] %v125
  $region33: #{densenet_forward.21} parent=0 // pred_fallthru
    _
  // Predicated region
  $region34: #{densenet_forward.21} parent=0 // pred_check
    _
  $region35: #{densenet_forward.21} parent=0 // pred_check_branch
    %128 = sbr.rel (0) target = $region37
  $region36: #{densenet_forward.21} parent=0 // pred_region
    _
  $region37: #{densenet_forward.21} parent=0 // pred_fallthru
    _
  // Predicated region
  $region38: #{densenet_forward.21} parent=0 // pred_check
    _
  $region39: #{densenet_forward.21} parent=0 // pred_check_branch
    %130 = sbr.rel (0) target = $region41
  $region40: #{densenet_forward.21} parent=0 // pred_region
    _
  $region41: #{densenet_forward.21} parent=0 // pred_fallthru
    _

// kernel: densenet_forward.23
$region0: #{densenet_forward.23}
  #allocation0 [shape = 'u32[]', space=smem, size = 0x4, offset = 0x4, fixed_abs, tag = 'smem constant byte address 0x4 - core index']
  #allocation1 [shape = 'u32[144,128]{1,0:T(1,128)}', space=vmem, size = 0x12000, scoped, tag = 'internal scratch']
  #allocation2 [shape = 'f32[8,128]{1,0:T(8,128)}', space=vmem, size = 0x1000, scoped, tag = 'scratch operand']
  %s0 = inlined_call_operand.vmem [shape: bf16[8,24], index: 0, kind: input, shape index: {}]
  %s1 = inlined_call_operand.vmem [shape: bf16[24,128], index: 1, kind: input, shape index: {}]
  %s2 = inlined_call_operand.vmem [shape: f32[1,24], index: 2, kind: input, shape index: {}]
  %s3 = inlined_call_operand.vmem [shape: f32[1,24], index: 3, kind: input, shape index: {}]
  %s4 = inlined_call_operand.vmem [shape: f32[1,128], index: 4, kind: input, shape index: {}]
  %s5 = inlined_call_operand.vmem [shape: f32[1,128], index: 5, kind: input, shape index: {}]
  %s6 = inlined_call_operand.vmem [shape: bf16[8,128], index: 6, kind: output, shape index: {}]
  %s7 = sld [smem:[#allocation0]]
  $region42: #{densenet_forward.23} parent=0
    _
  %s9 = ssub.s32 1, %s7
  %s10 = scalar_select 0, %s9, %s7
  // Predicated region
  $region2: #{densenet_forward.23} parent=0 // pred_check
    _
  $region3: #{densenet_forward.23} parent=0 // pred_check_branch
    %12 = sbr.rel (0) target = $region5
  $region4: #{densenet_forward.23} parent=0 // pred_region
    _
  $region5: #{densenet_forward.23} parent=0 // pred_fallthru
    _
  // Predicated region
  $region6: #{densenet_forward.23} parent=0 // pred_check
    _
  $region7: #{densenet_forward.23} parent=0 // pred_check_branch
    %14 = sbr.rel (0) target = $region9
  $region8: #{densenet_forward.23} parent=0 // pred_region
    _
  $region9: #{densenet_forward.23} parent=0 // pred_fallthru
    _
  // Predicated region
  $region10: #{densenet_forward.23} parent=0 // pred_check
    _
  $region11: #{densenet_forward.23} parent=0 // pred_check_branch
    %16 = sbr.rel (0) target = $region13
  $region12: #{densenet_forward.23} parent=0 // pred_region
    _
  $region13: #{densenet_forward.23} parent=0 // pred_fallthru
    _
  // Predicated region
  $region14: #{densenet_forward.23} parent=0 // pred_check
    _
  $region15: #{densenet_forward.23} parent=0 // pred_check_branch
    %18 = sbr.rel (0) target = $region17
  $region16: #{densenet_forward.23} parent=0 // pred_region
    _
  $region17: #{densenet_forward.23} parent=0 // pred_fallthru
    _
  // Predicated region
  $region18: #{densenet_forward.23} parent=0 // pred_check
    _
  $region19: #{densenet_forward.23} parent=0 // pred_check_branch
    %20 = sbr.rel (0) target = $region21
  $region20: #{densenet_forward.23} parent=0 // pred_region
    _
  $region21: #{densenet_forward.23} parent=0 // pred_fallthru
    _
  // Predicated region
  $region22: #{densenet_forward.23} parent=0 // pred_check
    _
  $region23: #{densenet_forward.23} parent=0 // pred_check_branch
    %22 = sbr.rel (0) target = $region25
  $region24: #{densenet_forward.23} parent=0 // pred_region
    _
  $region25: #{densenet_forward.23} parent=0 // pred_fallthru
    _
  %p24 = scmp.eq.s32.totalorder 0, 0
  // Predicated region
  $region26: #{densenet_forward.23} parent=0 // pred_check
    %p25 = pneg %p24
  $region27: #{densenet_forward.23} parent=0 // pred_check_branch
    %27 = sbr.rel (%p25) target = $region29
  $region28: #{densenet_forward.23} parent=0 // pred_region
    %28 = vst [vmem:[#allocation2] sm:$0xff] 0.0
  $region29: #{densenet_forward.23} parent=0 // pred_fallthru
    _
  %v29 = vld [vmem:[%s0] sm:$0xf]
  %v30 = vunpack.c.l.bf16 %v29
  %v31 = vld [vmem:[%s2] sm:$0x1]
  %v33 = vlaneseq
  %v34 = vshrl.u32 %v33, 7
  %v35 = vsub.s32 0, %v34
  %v36 = vrot.slane %v31, %v35
  %v38 = vmul.f32 %v30, %v36
  %v39 = vld [vmem:[%s3] sm:$0x1]
  %v41 = vlaneseq
  %v42 = vshrl.u32 %v41, 7
  %v43 = vsub.s32 0, %v42
  %v44 = vrot.slane %v39, %v43
  %v46 = vadd.f32 %v38, %v44
  %v47 = vmax.f32 %v46, 0.0
  %v48 = vpack.c.bf16 %v47, %v47
  %v49 = vld [vmem:[#allocation2] sm:$0xff]
  %v50 = vld [vmem:[%s1] sm:$0xf]
  %v51 = vld [vmem:[%s1 + $0x4] sm:$0xf]
  %v52 = vld [vmem:[%s1 + $0x8] sm:$0xf]
  %v56 = vunpack.c.l.b16 %v50
  %v57 = vunpack.c.l.b16 %v51
  %v58 = vunpack.c.l.b16 %v52
  %v59 = vpack.c.b16 %v57, %v56
  %v60 = vpack.c.b16 %v58, %v58
  %vm62 = vcmask 195584
  %v64 = vsel %vm62, %v48, 0
  %vm66 = vcmask 1043456
  %v68 = vsel %vm66, %v60, 0
  %70 = vmatprep.subr.bf16.mxu0 0
  %71 = vmatpush1.bf16.msra.mxu0 %v59
  %72 = vmatprep.subr.bf16.mxu0 0
  %73 = vmatpush1.bf16.msra.mxu0 %v68
  %74 = vmatprep.subr.bf16.mxu0 0
  %75 = vmatpush1.bf16.msra.mxu0 0
  %76 = vmatprep.subr.bf16.mxu0 0
  %77 = vmatpush1.bf16.msra.mxu0 0
  %78 = vmatprep.subr.bf16.mxu0 0
  %79 = vmatpush1.bf16.msra.mxu0 0
  %80 = vmatprep.subr.bf16.mxu0 0
  %81 = vmatpush1.bf16.msra.mxu0 0
  %82 = vmatprep.subr.bf16.mxu0 0
  %83 = vmatpush1.bf16.msra.mxu0 0
  %84 = vmatprep.subr.bf16.mxu0 0
  %85 = vmatpush1.bf16.msra.mxu0 0
  %86 = vmatprep.subr.bf16.mxu0 0
  %87 = vmatpush1.bf16.msra.mxu0 0
  %88 = vmatprep.subr.bf16.mxu0 0
  %89 = vmatpush1.bf16.msra.mxu0 0
  %90 = vmatprep.subr.bf16.mxu0 0
  %91 = vmatpush1.bf16.msra.mxu0 0
  %92 = vmatprep.subr.bf16.mxu0 0
  %93 = vmatpush1.bf16.msra.mxu0 0
  %94 = vmatprep.subr.bf16.mxu0 0
  %95 = vmatpush1.bf16.msra.mxu0 0
  %96 = vmatprep.subr.bf16.mxu0 0
  %97 = vmatpush1.bf16.msra.mxu0 0
  %98 = vmatprep.subr.bf16.mxu0 0
  %99 = vmatpush1.bf16.msra.mxu0 0
  %100 = vmatprep.subr.bf16.mxu0 0
  %101 = vmatpush1.bf16.msra.mxu0 0
  %102 = vmatprep.mubr.bf16.mxu0 0
  %103 = vmatmul.mubr.bf16.gmra.mrb[0].mxu0 %v64
  %v104 = vpop.f32.mrb[0].mxu0
  %v105 = vadd.f32 0.0, %v104
  %v106 = vpop.f32.mrb[0].mxu0
  %v107 = vpop.f32.mrb[0].mxu0
  %v108 = vpop.f32.mrb[0].mxu0
  %109 = vdwg.mxu0
  %v110 = vadd.f32 %v49, %v105
  %111 = vst [vmem:[#allocation2] sm:$0xff] %v110
  // Predicated region
  $region30: #{densenet_forward.23} parent=0 // pred_check
    %p112 = pneg %p24
  $region31: #{densenet_forward.23} parent=0 // pred_check_branch
    %114 = sbr.rel (%p112) target = $region33
  $region32: #{densenet_forward.23} parent=0 // pred_region
    %v115 = vld [vmem:[#allocation2] sm:$0xff]
    %v116 = vld [vmem:[%s4] sm:$0x1]
    %v118 = vlaneseq
    %v119 = vshrl.u32 %v118, 7
    %v120 = vsub.s32 0, %v119
    %v121 = vrot.slane %v116, %v120
    %v123 = vmul.f32 %v115, %v121
    %v124 = vld [vmem:[%s5] sm:$0x1]
    %v126 = vlaneseq
    %v127 = vshrl.u32 %v126, 7
    %v128 = vsub.s32 0, %v127
    %v129 = vrot.slane %v124, %v128
    %v131 = vadd.f32 %v123, %v129
    %v132 = vmax.f32 %v131, 0.0
    %v133 = vpack.c.bf16 %v132, %v132
    %134 = vst [vmem:[%s6] sm:$0xf] %v133
  $region33: #{densenet_forward.23} parent=0 // pred_fallthru
    _
  // Predicated region
  $region34: #{densenet_forward.23} parent=0 // pred_check
    _
  $region35: #{densenet_forward.23} parent=0 // pred_check_branch
    %136 = sbr.rel (0) target = $region37
  $region36: #{densenet_forward.23} parent=0 // pred_region
    _
  $region37: #{densenet_forward.23} parent=0 // pred_fallthru
    _
  // Predicated region
  $region38: #{densenet_forward.23} parent=0 // pred_check
    _
  $region39: #{densenet_forward.23} parent=0 // pred_check_branch
    %138 = sbr.rel (0) target = $region41
  $region40: #{densenet_forward.23} parent=0 // pred_region
    _
  $region41: #{densenet_forward.23} parent=0 // pred_fallthru
    _

// kernel: densenet_forward.22
$region0: #{densenet_forward.22}
  #allocation0 [shape = 'u32[]', space=smem, size = 0x4, offset = 0x4, fixed_abs, tag = 'smem constant byte address 0x4 - core index']
  #allocation1 [shape = 'u32[144,128]{1,0:T(1,128)}', space=vmem, size = 0x12000, scoped, tag = 'internal scratch']
  %s0 = inlined_call_operand.vmem [shape: bf16[42,32], index: 0, kind: input, shape index: {}]
  %s1 = inlined_call_operand.vmem [shape: bf16[9,32,128], index: 1, kind: input, shape index: {}]
  %s2 = inlined_call_operand.vmem [shape: bf16[32,128], index: 2, kind: output, shape index: {}]
  %s3 = sld [smem:[#allocation0]]
  $region18: #{densenet_forward.22} parent=0
    _
  %s5 = ssub.s32 1, %s3
  %s6 = scalar_select 0, %s5, %s3
  // Predicated region
  $region2: #{densenet_forward.22} parent=0 // pred_check
    _
  $region3: #{densenet_forward.22} parent=0 // pred_check_branch
    %8 = sbr.rel (0) target = $region5
  $region4: #{densenet_forward.22} parent=0 // pred_region
    _
  $region5: #{densenet_forward.22} parent=0 // pred_fallthru
    _
  // Predicated region
  $region6: #{densenet_forward.22} parent=0 // pred_check
    _
  $region7: #{densenet_forward.22} parent=0 // pred_check_branch
    %10 = sbr.rel (0) target = $region9
  $region8: #{densenet_forward.22} parent=0 // pred_region
    _
  $region9: #{densenet_forward.22} parent=0 // pred_fallthru
    _
  %v12 = vld [vmem:[%s0] sm:$0xf]
  %v13 = vld [vmem:[%s0 + $0x4] sm:$0xf]
  %v14 = vld [vmem:[%s0 + $0x8] sm:$0xf]
  %v15 = vld [vmem:[%s0 + $0xc] sm:$0xf]
  %v16 = vld [vmem:[%s1] sm:$0xf]
  %v17 = vld [vmem:[%s1 + $0x4] sm:$0xf]
  %v18 = vld [vmem:[%s1 + $0x8] sm:$0xf]
  %v19 = vld [vmem:[%s1 + $0xc] sm:$0xf]
  %v20 = vld [vmem:[%s0 + $0x10] sm:$0x1]
  %s21 = scalar_lea.vmem %s1, 16
  %v22 = vld [vmem:[%s21] sm:$0xf]
  %v23 = vld [vmem:[%s21 + $0x4] sm:$0xf]
  %v24 = vld [vmem:[%s21 + $0x8] sm:$0xf]
  %v25 = vld [vmem:[%s21 + $0xc] sm:$0xf]
  %v31 = vunpack.c.l.b16 %v12
  %v32 = vunpack.c.l.b16 %v13
  %v33 = vunpack.c.l.b16 %v14
  %v34 = vunpack.c.l.b16 %v15
  %v35 = vunpack.c.l.b16 %v20
  %v36 = vpack.c.b16 %v32, %v31
  %v37 = vpack.c.b16 %v34, %v33
  %v38 = vpack.c.b16 %v35, %v35
  %vm39 = vsmask.f32 7424
  %v41 = vshrl.u32 %v36, 16
  %v43 = vshll.u32 %v36, 16
  %v45 = vrot.slane %v43, 1
  %v46 = vor.u32 %v41, %v45
  %v48 = vshll.u32 %v37, 16
  %v50 = vrot.slane %v48, 1
  %v51 = vsel %vm39, %v46, %v50
  %v52 = vshrl.u32 %v37, 16
  %v54 = vor.u32 %v52, %v50
  %v56 = vshll.u32 %v38, 16
  %v58 = vrot.slane %v56, 1
  %v59 = vsel %vm39, %v54, %v58
  %v64 = vunpack.c.l.b16 %v22
  %v65 = vunpack.c.l.b16 %v23
  %v66 = vunpack.c.l.b16 %v24
  %v67 = vunpack.c.l.b16 %v25
  %v68 = vpack.c.b16 %v65, %v64
  %v69 = vpack.c.b16 %v67, %v66
  %vm72 = vcmask 261120
  %v74 = vsel %vm72, %v51, 0
  %v77 = vsel %vm72, %v59, 0
  %79 = vmatprep.subr.bf16.mxu0 0
  %80 = vmatpush1.bf16.msra.mxu0 %v68
  %81 = vmatprep.subr.bf16.mxu0 0
  %82 = vmatpush1.bf16.msra.mxu0 %v69
  %83 = vmatprep.subr.bf16.mxu0 0
  %84 = vmatpush1.bf16.msra.mxu0 0
  %85 = vmatprep.subr.bf16.mxu0 0
  %86 = vmatpush1.bf16.msra.mxu0 0
  %87 = vmatprep.subr.bf16.mxu0 0
  %88 = vmatpush1.bf16.msra.mxu0 0
  %89 = vmatprep.subr.bf16.mxu0 0
  %90 = vmatpush1.bf16.msra.mxu0 0
  %91 = vmatprep.subr.bf16.mxu0 0
  %92 = vmatpush1.bf16.msra.mxu0 0
  %93 = vmatprep.subr.bf16.mxu0 0
  %94 = vmatpush1.bf16.msra.mxu0 0
  %95 = vmatprep.subr.bf16.mxu0 0
  %96 = vmatpush1.bf16.msra.mxu0 0
  %97 = vmatprep.subr.bf16.mxu0 0
  %98 = vmatpush1.bf16.msra.mxu0 0
  %99 = vmatprep.subr.bf16.mxu0 0
  %100 = vmatpush1.bf16.msra.mxu0 0
  %101 = vmatprep.subr.bf16.mxu0 0
  %102 = vmatpush1.bf16.msra.mxu0 0
  %103 = vmatprep.subr.bf16.mxu0 0
  %104 = vmatpush1.bf16.msra.mxu0 0
  %105 = vmatprep.subr.bf16.mxu0 0
  %106 = vmatpush1.bf16.msra.mxu0 0
  %107 = vmatprep.subr.bf16.mxu0 0
  %108 = vmatpush1.bf16.msra.mxu0 0
  %109 = vmatprep.subr.bf16.mxu0 0
  %110 = vmatpush1.bf16.msra.mxu0 0
  %111 = vmatprep.mubr.bf16.mxu0 0
  %112 = vmatmul.mubr.bf16.gmra.mrb[0].mxu0 %v74
  %v113 = vpop.f32.mrb[0].mxu0
  %v114 = vadd.f32 0.0, %v113
  %v115 = vpop.f32.mrb[0].mxu0
  %v116 = vpop.f32.mrb[0].mxu0
  %v117 = vadd.f32 0.0, %v116
  %v118 = vpop.f32.mrb[0].mxu0
  %119 = vmatprep.mubr.bf16.mxu0 0
  %120 = vmatmul.mubr.bf16.gmra.mrb[0].mxu0 %v77
  %v121 = vpop.f32.mrb[0].mxu0
  %v122 = vadd.f32 0.0, %v121
  %v123 = vpop.f32.mrb[0].mxu0
  %v124 = vpop.f32.mrb[0].mxu0
  %v125 = vadd.f32 0.0, %v124
  %v126 = vpop.f32.mrb[0].mxu0
  %127 = vdwg.mxu0
  %v132 = vunpack.c.l.b16 %v16
  %v133 = vunpack.c.l.b16 %v17
  %v134 = vunpack.c.l.b16 %v18
  %v135 = vunpack.c.l.b16 %v19
  %v136 = vpack.c.b16 %v133, %v132
  %v137 = vpack.c.b16 %v135, %v134
  %v140 = vsel %vm72, %v36, 0
  %v142 = vsel %vm72, %v37, 0
  %144 = vmatprep.subr.bf16.mxu0 0
  %145 = vmatpush1.bf16.msra.mxu0 %v136
  %146 = vmatprep.subr.bf16.mxu0 0
  %147 = vmatpush1.bf16.msra.mxu0 %v137
  %148 = vmatprep.subr.bf16.mxu0 0
  %149 = vmatpush1.bf16.msra.mxu0 0
  %150 = vmatprep.subr.bf16.mxu0 0
  %151 = vmatpush1.bf16.msra.mxu0 0
  %152 = vmatprep.subr.bf16.mxu0 0
  %153 = vmatpush1.bf16.msra.mxu0 0
  %154 = vmatprep.subr.bf16.mxu0 0
  %155 = vmatpush1.bf16.msra.mxu0 0
  %156 = vmatprep.subr.bf16.mxu0 0
  %157 = vmatpush1.bf16.msra.mxu0 0
  %158 = vmatprep.subr.bf16.mxu0 0
  %159 = vmatpush1.bf16.msra.mxu0 0
  %160 = vmatprep.subr.bf16.mxu0 0
  %161 = vmatpush1.bf16.msra.mxu0 0
  %162 = vmatprep.subr.bf16.mxu0 0
  %163 = vmatpush1.bf16.msra.mxu0 0
  %164 = vmatprep.subr.bf16.mxu0 0
  %165 = vmatpush1.bf16.msra.mxu0 0
  %166 = vmatprep.subr.bf16.mxu0 0
  %167 = vmatpush1.bf16.msra.mxu0 0
  %168 = vmatprep.subr.bf16.mxu0 0
  %169 = vmatpush1.bf16.msra.mxu0 0
  %170 = vmatprep.subr.bf16.mxu0 0
  %171 = vmatpush1.bf16.msra.mxu0 0
  %172 = vmatprep.subr.bf16.mxu0 0
  %173 = vmatpush1.bf16.msra.mxu0 0
  %174 = vmatprep.subr.bf16.mxu0 0
  %175 = vmatpush1.bf16.msra.mxu0 0
  %176 = vmatprep.mubr.bf16.mxu0 0
  %177 = vmatmul.mubr.bf16.gmra.mrb[0].mxu0 %v140
  %v178 = vpop.f32.mrb[0].mxu0
  %v179 = vadd.f32 %v114, %v178
  %v180 = vpop.f32.mrb[0].mxu0
  %v181 = vpop.f32.mrb[0].mxu0
  %v182 = vadd.f32 %v117, %v181
  %v183 = vpop.f32.mrb[0].mxu0
  %184 = vmatprep.mubr.bf16.mxu0 0
  %185 = vmatmul.mubr.bf16.gmra.mrb[0].mxu0 %v142
  %v186 = vpop.f32.mrb[0].mxu0
  %v187 = vadd.f32 %v122, %v186
  %v188 = vpop.f32.mrb[0].mxu0
  %v189 = vpop.f32.mrb[0].mxu0
  %v190 = vadd.f32 %v125, %v189
  %v191 = vpop.f32.mrb[0].mxu0
  %192 = vdwg.mxu0
  %v193 = vld [vmem:[%s0] sm:$0xe]
  %s194 = scalar_lea.vmem %s1, 32
  %v195 = vld [vmem:[%s194] sm:$0xf]
  %v196 = vld [vmem:[%s194 + $0x4] sm:$0xf]
  %v197 = vld [vmem:[%s194 + $0x8] sm:$0xf]
  %v198 = vld [vmem:[%s194 + $0xc] sm:$0xf]
  %v200 = vunpack.c.l.b16 %v193
  %v201 = vpack.c.b16 %v32, %v200
  %vm202 = vcmask 1046528
  %v203 = vrot.slane %v201, 1
  %v204 = vrot.slane %v37, 1
  %v205 = vsel %vm202, %v203, %v204
  %v206 = vrot.slane %v38, 1
  %v207 = vsel %vm202, %v204, %v206
  %v212 = vunpack.c.l.b16 %v195
  %v213 = vunpack.c.l.b16 %v196
  %v214 = vunpack.c.l.b16 %v197
  %v215 = vunpack.c.l.b16 %v198
  %v216 = vpack.c.b16 %v213, %v212
  %v217 = vpack.c.b16 %v215, %v214
  %v221 = vsel %vm72, %v205, 0
  %v224 = vsel %vm72, %v207, 0
  %226 = vmatprep.subr.bf16.mxu0 0
  %227 = vmatpush1.bf16.msra.mxu0 %v216
  %228 = vmatprep.subr.bf16.mxu0 0
  %229 = vmatpush1.bf16.msra.mxu0 %v217
  %230 = vmatprep.subr.bf16.mxu0 0
  %231 = vmatpush1.bf16.msra.mxu0 0
  %232 = vmatprep.subr.bf16.mxu0 0
  %233 = vmatpush1.bf16.msra.mxu0 0
  %234 = vmatprep.subr.bf16.mxu0 0
  %235 = vmatpush1.bf16.msra.mxu0 0
  %236 = vmatprep.subr.bf16.mxu0 0
  %237 = vmatpush1.bf16.msra.mxu0 0
  %238 = vmatprep.subr.bf16.mxu0 0
  %239 = vmatpush1.bf16.msra.mxu0 0
  %240 = vmatprep.subr.bf16.mxu0 0
  %241 = vmatpush1.bf16.msra.mxu0 0
  %242 = vmatprep.subr.bf16.mxu0 0
  %243 = vmatpush1.bf16.msra.mxu0 0
  %244 = vmatprep.subr.bf16.mxu0 0
  %245 = vmatpush1.bf16.msra.mxu0 0
  %246 = vmatprep.subr.bf16.mxu0 0
  %247 = vmatpush1.bf16.msra.mxu0 0
  %248 = vmatprep.subr.bf16.mxu0 0
  %249 = vmatpush1.bf16.msra.mxu0 0
  %250 = vmatprep.subr.bf16.mxu0 0
  %251 = vmatpush1.bf16.msra.mxu0 0
  %252 = vmatprep.subr.bf16.mxu0 0
  %253 = vmatpush1.bf16.msra.mxu0 0
  %254 = vmatprep.subr.bf16.mxu0 0
  %255 = vmatpush1.bf16.msra.mxu0 0
  %256 = vmatprep.subr.bf16.mxu0 0
  %257 = vmatpush1.bf16.msra.mxu0 0
  %258 = vmatprep.mubr.bf16.mxu0 0
  %259 = vmatmul.mubr.bf16.gmra.mrb[0].mxu0 %v221
  %v260 = vpop.f32.mrb[0].mxu0
  %v261 = vadd.f32 0.0, %v260
  %v262 = vpop.f32.mrb[0].mxu0
  %v263 = vpop.f32.mrb[0].mxu0
  %v264 = vadd.f32 0.0, %v263
  %v265 = vpop.f32.mrb[0].mxu0
  %266 = vmatprep.mubr.bf16.mxu0 0
  %267 = vmatmul.mubr.bf16.gmra.mrb[0].mxu0 %v224
  %v268 = vpop.f32.mrb[0].mxu0
  %v269 = vadd.f32 0.0, %v268
  %v270 = vpop.f32.mrb[0].mxu0
  %v271 = vpop.f32.mrb[0].mxu0
  %v272 = vadd.f32 0.0, %v271
  %v273 = vpop.f32.mrb[0].mxu0
  %274 = vdwg.mxu0
  %v275 = vadd.f32 %v179, %v261
  %v276 = vadd.f32 %v182, %v264
  %v277 = vadd.f32 %v187, %v269
  %v278 = vadd.f32 %v190, %v272
  %v279 = vld [vmem:[%s0] sm:$0xc]
  %v280 = vld [vmem:[%s0 + $0x10] sm:$0x3]
  %s281 = scalar_lea.vmem %s1, 48
  %v282 = vld [vmem:[%s281] sm:$0xf]
  %v283 = vld [vmem:[%s281 + $0x4] sm:$0xf]
  %v284 = vld [vmem:[%s281 + $0x8] sm:$0xf]
  %v285 = vld [vmem:[%s281 + $0xc] sm:$0xf]
  %v288 = vunpack.c.l.b16 %v279
  %v289 = vunpack.c.l.b16 %v280
  %v290 = vpack.c.b16 %v32, %v288
  %v291 = vpack.c.b16 %v289, %v289
  %vm292 = vcmask 1045504
  %v293 = vrot.slane %v290, 2
  %v294 = vrot.slane %v37, 2
  %v295 = vsel %vm292, %v293, %v294
  %v296 = vrot.slane %v291, 2
  %v297 = vsel %vm292, %v294, %v296
  %v302 = vunpack.c.l.b16 %v282
  %v303 = vunpack.c.l.b16 %v283
  %v304 = vunpack.c.l.b16 %v284
  %v305 = vunpack.c.l.b16 %v285
  %v306 = vpack.c.b16 %v303, %v302
  %v307 = vpack.c.b16 %v305, %v304
  %v311 = vsel %vm72, %v295, 0
  %v314 = vsel %vm72, %v297, 0
  %316 = vmatprep.subr.bf16.mxu0 0
  %317 = vmatpush1.bf16.msra.mxu0 %v306
  %318 = vmatprep.subr.bf16.mxu0 0
  %319 = vmatpush1.bf16.msra.mxu0 %v307
  %320 = vmatprep.subr.bf16.mxu0 0
  %321 = vmatpush1.bf16.msra.mxu0 0
  %322 = vmatprep.subr.bf16.mxu0 0
  %323 = vmatpush1.bf16.msra.mxu0 0
  %324 = vmatprep.subr.bf16.mxu0 0
  %325 = vmatpush1.bf16.msra.mxu0 0
  %326 = vmatprep.subr.bf16.mxu0 0
  %327 = vmatpush1.bf16.msra.mxu0 0
  %328 = vmatprep.subr.bf16.mxu0 0
  %329 = vmatpush1.bf16.msra.mxu0 0
  %330 = vmatprep.subr.bf16.mxu0 0
  %331 = vmatpush1.bf16.msra.mxu0 0
  %332 = vmatprep.subr.bf16.mxu0 0
  %333 = vmatpush1.bf16.msra.mxu0 0
  %334 = vmatprep.subr.bf16.mxu0 0
  %335 = vmatpush1.bf16.msra.mxu0 0
  %336 = vmatprep.subr.bf16.mxu0 0
  %337 = vmatpush1.bf16.msra.mxu0 0
  %338 = vmatprep.subr.bf16.mxu0 0
  %339 = vmatpush1.bf16.msra.mxu0 0
  %340 = vmatprep.subr.bf16.mxu0 0
  %341 = vmatpush1.bf16.msra.mxu0 0
  %342 = vmatprep.subr.bf16.mxu0 0
  %343 = vmatpush1.bf16.msra.mxu0 0
  %344 = vmatprep.subr.bf16.mxu0 0
  %345 = vmatpush1.bf16.msra.mxu0 0
  %346 = vmatprep.subr.bf16.mxu0 0
  %347 = vmatpush1.bf16.msra.mxu0 0
  %348 = vmatprep.mubr.bf16.mxu0 0
  %349 = vmatmul.mubr.bf16.gmra.mrb[0].mxu0 %v311
  %v350 = vpop.f32.mrb[0].mxu0
  %v351 = vadd.f32 0.0, %v350
  %v352 = vpop.f32.mrb[0].mxu0
  %v353 = vpop.f32.mrb[0].mxu0
  %v354 = vadd.f32 0.0, %v353
  %v355 = vpop.f32.mrb[0].mxu0
  %356 = vmatprep.mubr.bf16.mxu0 0
  %357 = vmatmul.mubr.bf16.gmra.mrb[0].mxu0 %v314
  %v358 = vpop.f32.mrb[0].mxu0
  %v359 = vadd.f32 0.0, %v358
  %v360 = vpop.f32.mrb[0].mxu0
  %v361 = vpop.f32.mrb[0].mxu0
  %v362 = vadd.f32 0.0, %v361
  %v363 = vpop.f32.mrb[0].mxu0
  %364 = vdwg.mxu0
  %v365 = vadd.f32 %v275, %v351
  %v366 = vadd.f32 %v276, %v354
  %v367 = vadd.f32 %v277, %v359
  %v368 = vadd.f32 %v278, %v362
  %v369 = vld [vmem:[%s0 + $0x10] sm:$0x7]
  %s370 = scalar_lea.vmem %s1, 64
  %v371 = vld [vmem:[%s370] sm:$0xf]
  %v372 = vld [vmem:[%s370 + $0x4] sm:$0xf]
  %v373 = vld [vmem:[%s370 + $0x8] sm:$0xf]
  %v374 = vld [vmem:[%s370 + $0xc] sm:$0xf]
  %v376 = vunpack.c.l.b16 %v369
  %v377 = vpack.c.b16 %v376, %v376
  %vm378 = vsmask.f32 5376
  %v380 = vshrl.u32 %v290, 16
  %v382 = vrot.slane %v380, 2
  %v383 = vshll.u32 %v290, 16
  %v385 = vrot.slane %v383, 3
  %v386 = vor.u32 %v382, %v385
  %v387 = vrot.slane %v52, 2
  %v388 = vrot.slane %v48, 3
  %v389 = vor.u32 %v387, %v388
  %v390 = vsel %vm378, %v386, %v389
  %v392 = vshrl.u32 %v377, 16
  %v394 = vrot.slane %v392, 2
  %v395 = vshll.u32 %v377, 16
  %v397 = vrot.slane %v395, 3
  %v398 = vor.u32 %v394, %v397
  %v399 = vsel %vm378, %v389, %v398
  %v404 = vunpack.c.l.b16 %v371
  %v405 = vunpack.c.l.b16 %v372
  %v406 = vunpack.c.l.b16 %v373
  %v407 = vunpack.c.l.b16 %v374
  %v408 = vpack.c.b16 %v405, %v404
  %v409 = vpack.c.b16 %v407, %v406
  %v413 = vsel %vm72, %v390, 0
  %v416 = vsel %vm72, %v399, 0
  %418 = vmatprep.subr.bf16.mxu0 0
  %419 = vmatpush1.bf16.msra.mxu0 %v408
  %420 = vmatprep.subr.bf16.mxu0 0
  %421 = vmatpush1.bf16.msra.mxu0 %v409
  %422 = vmatprep.subr.bf16.mxu0 0
  %423 = vmatpush1.bf16.msra.mxu0 0
  %424 = vmatprep.subr.bf16.mxu0 0
  %425 = vmatpush1.bf16.msra.mxu0 0
  %426 = vmatprep.subr.bf16.mxu0 0
  %427 = vmatpush1.bf16.msra.mxu0 0
  %428 = vmatprep.subr.bf16.mxu0 0
  %429 = vmatpush1.bf16.msra.mxu0 0
  %430 = vmatprep.subr.bf16.mxu0 0
  %431 = vmatpush1.bf16.msra.mxu0 0
  %432 = vmatprep.subr.bf16.mxu0 0
  %433 = vmatpush1.bf16.msra.mxu0 0
  %434 = vmatprep.subr.bf16.mxu0 0
  %435 = vmatpush1.bf16.msra.mxu0 0
  %436 = vmatprep.subr.bf16.mxu0 0
  %437 = vmatpush1.bf16.msra.mxu0 0
  %438 = vmatprep.subr.bf16.mxu0 0
  %439 = vmatpush1.bf16.msra.mxu0 0
  %440 = vmatprep.subr.bf16.mxu0 0
  %441 = vmatpush1.bf16.msra.mxu0 0
  %442 = vmatprep.subr.bf16.mxu0 0
  %443 = vmatpush1.bf16.msra.mxu0 0
  %444 = vmatprep.subr.bf16.mxu0 0
  %445 = vmatpush1.bf16.msra.mxu0 0
  %446 = vmatprep.subr.bf16.mxu0 0
  %447 = vmatpush1.bf16.msra.mxu0 0
  %448 = vmatprep.subr.bf16.mxu0 0
  %449 = vmatpush1.bf16.msra.mxu0 0
  %450 = vmatprep.mubr.bf16.mxu0 0
  %451 = vmatmul.mubr.bf16.gmra.mrb[0].mxu0 %v413
  %v452 = vpop.f32.mrb[0].mxu0
  %v453 = vadd.f32 0.0, %v452
  %v454 = vpop.f32.mrb[0].mxu0
  %v455 = vpop.f32.mrb[0].mxu0
  %v456 = vadd.f32 0.0, %v455
  %v457 = vpop.f32.mrb[0].mxu0
  %458 = vmatprep.mubr.bf16.mxu0 0
  %459 = vmatmul.mubr.bf16.gmra.mrb[0].mxu0 %v416
  %v460 = vpop.f32.mrb[0].mxu0
  %v461 = vadd.f32 0.0, %v460
  %v462 = vpop.f32.mrb[0].mxu0
  %v463 = vpop.f32.mrb[0].mxu0
  %v464 = vadd.f32 0.0, %v463
  %v465 = vpop.f32.mrb[0].mxu0
  %466 = vdwg.mxu0
  %v467 = vadd.f32 %v365, %v453
  %v468 = vadd.f32 %v366, %v456
  %v469 = vadd.f32 %v367, %v461
  %v470 = vadd.f32 %v368, %v464
  %v471 = vld [vmem:[%s0] sm:$0x8]
  %s472 = scalar_lea.vmem %s1, 80
  %v473 = vld [vmem:[%s472] sm:$0xf]
  %v474 = vld [vmem:[%s472 + $0x4] sm:$0xf]
  %v475 = vld [vmem:[%s472 + $0x8] sm:$0xf]
  %v476 = vld [vmem:[%s472 + $0xc] sm:$0xf]
  %v478 = vunpack.c.l.b16 %v471
  %v479 = vpack.c.b16 %v32, %v478
  %vm480 = vcmask 1044480
  %v481 = vrot.slane %v479, 3
  %v482 = vrot.slane %v37, 3
  %v483 = vsel %vm480, %v481, %v482
  %v484 = vrot.slane %v377, 3
  %v485 = vsel %vm480, %v482, %v484
  %v490 = vunpack.c.l.b16 %v473
  %v491 = vunpack.c.l.b16 %v474
  %v492 = vunpack.c.l.b16 %v475
  %v493 = vunpack.c.l.b16 %v476
  %v494 = vpack.c.b16 %v491, %v490
  %v495 = vpack.c.b16 %v493, %v492
  %v499 = vsel %vm72, %v483, 0
  %v502 = vsel %vm72, %v485, 0
  %504 = vmatprep.subr.bf16.mxu0 0
  %505 = vmatpush1.bf16.msra.mxu0 %v494
  %506 = vmatprep.subr.bf16.mxu0 0
  %507 = vmatpush1.bf16.msra.mxu0 %v495
  %508 = vmatprep.subr.bf16.mxu0 0
  %509 = vmatpush1.bf16.msra.mxu0 0
  %510 = vmatprep.subr.bf16.mxu0 0
  %511 = vmatpush1.bf16.msra.mxu0 0
  %512 = vmatprep.subr.bf16.mxu0 0
  %513 = vmatpush1.bf16.msra.mxu0 0
  %514 = vmatprep.subr.bf16.mxu0 0
  %515 = vmatpush1.bf16.msra.mxu0 0
  %516 = vmatprep.subr.bf16.mxu0 0
  %517 = vmatpush1.bf16.msra.mxu0 0
  %518 = vmatprep.subr.bf16.mxu0 0
  %519 = vmatpush1.bf16.msra.mxu0 0
  %520 = vmatprep.subr.bf16.mxu0 0
  %521 = vmatpush1.bf16.msra.mxu0 0
  %522 = vmatprep.subr.bf16.mxu0 0
  %523 = vmatpush1.bf16.msra.mxu0 0
  %524 = vmatprep.subr.bf16.mxu0 0
  %525 = vmatpush1.bf16.msra.mxu0 0
  %526 = vmatprep.subr.bf16.mxu0 0
  %527 = vmatpush1.bf16.msra.mxu0 0
  %528 = vmatprep.subr.bf16.mxu0 0
  %529 = vmatpush1.bf16.msra.mxu0 0
  %530 = vmatprep.subr.bf16.mxu0 0
  %531 = vmatpush1.bf16.msra.mxu0 0
  %532 = vmatprep.subr.bf16.mxu0 0
  %533 = vmatpush1.bf16.msra.mxu0 0
  %534 = vmatprep.subr.bf16.mxu0 0
  %535 = vmatpush1.bf16.msra.mxu0 0
  %536 = vmatprep.mubr.bf16.mxu0 0
  %537 = vmatmul.mubr.bf16.gmra.mrb[0].mxu0 %v499
  %v538 = vpop.f32.mrb[0].mxu0
  %v539 = vadd.f32 0.0, %v538
  %v540 = vpop.f32.mrb[0].mxu0
  %v541 = vpop.f32.mrb[0].mxu0
  %v542 = vadd.f32 0.0, %v541
  %v543 = vpop.f32.mrb[0].mxu0
  %544 = vmatprep.mubr.bf16.mxu0 0
  %545 = vmatmul.mubr.bf16.gmra.mrb[0].mxu0 %v502
  %v546 = vpop.f32.mrb[0].mxu0
  %v547 = vadd.f32 0.0, %v546
  %v548 = vpop.f32.mrb[0].mxu0
  %v549 = vpop.f32.mrb[0].mxu0
  %v550 = vadd.f32 0.0, %v549
  %v551 = vpop.f32.mrb[0].mxu0
  %552 = vdwg.mxu0
  %v553 = vadd.f32 %v467, %v539
  %v554 = vadd.f32 %v468, %v542
  %v555 = vadd.f32 %v469, %v547
  %v556 = vadd.f32 %v470, %v550
  %v557 = vld [vmem:[%s0 + $0x10] sm:$0xf]
  %s558 = scalar_lea.vmem %s1, 96
  %v559 = vld [vmem:[%s558] sm:$0xf]
  %v560 = vld [vmem:[%s558 + $0x4] sm:$0xf]
  %v561 = vld [vmem:[%s558 + $0x8] sm:$0xf]
  %v562 = vld [vmem:[%s558 + $0xc] sm:$0xf]
  %v564 = vunpack.c.l.b16 %v557
  %v565 = vpack.c.b16 %v33, %v32
  %v566 = vpack.c.b16 %v564, %v34
  %v571 = vunpack.c.l.b16 %v559
  %v572 = vunpack.c.l.b16 %v560
  %v573 = vunpack.c.l.b16 %v561
  %v574 = vunpack.c.l.b16 %v562
  %v575 = vpack.c.b16 %v572, %v571
  %v576 = vpack.c.b16 %v574, %v573
  %v580 = vsel %vm72, %v565, 0
  %v583 = vsel %vm72, %v566, 0
  %585 = vmatprep.subr.bf16.mxu0 0
  %586 = vmatpush1.bf16.msra.mxu0 %v575
  %587 = vmatprep.subr.bf16.mxu0 0
  %588 = vmatpush1.bf16.msra.mxu0 %v576
  %589 = vmatprep.subr.bf16.mxu0 0
  %590 = vmatpush1.bf16.msra.mxu0 0
  %591 = vmatprep.subr.bf16.mxu0 0
  %592 = vmatpush1.bf16.msra.mxu0 0
  %593 = vmatprep.subr.bf16.mxu0 0
  %594 = vmatpush1.bf16.msra.mxu0 0
  %595 = vmatprep.subr.bf16.mxu0 0
  %596 = vmatpush1.bf16.msra.mxu0 0
  %597 = vmatprep.subr.bf16.mxu0 0
  %598 = vmatpush1.bf16.msra.mxu0 0
  %599 = vmatprep.subr.bf16.mxu0 0
  %600 = vmatpush1.bf16.msra.mxu0 0
  %601 = vmatprep.subr.bf16.mxu0 0
  %602 = vmatpush1.bf16.msra.mxu0 0
  %603 = vmatprep.subr.bf16.mxu0 0
  %604 = vmatpush1.bf16.msra.mxu0 0
  %605 = vmatprep.subr.bf16.mxu0 0
  %606 = vmatpush1.bf16.msra.mxu0 0
  %607 = vmatprep.subr.bf16.mxu0 0
  %608 = vmatpush1.bf16.msra.mxu0 0
  %609 = vmatprep.subr.bf16.mxu0 0
  %610 = vmatpush1.bf16.msra.mxu0 0
  %611 = vmatprep.subr.bf16.mxu0 0
  %612 = vmatpush1.bf16.msra.mxu0 0
  %613 = vmatprep.subr.bf16.mxu0 0
  %614 = vmatpush1.bf16.msra.mxu0 0
  %615 = vmatprep.subr.bf16.mxu0 0
  %616 = vmatpush1.bf16.msra.mxu0 0
  %617 = vmatprep.mubr.bf16.mxu0 0
  %618 = vmatmul.mubr.bf16.gmra.mrb[0].mxu0 %v580
  %v619 = vpop.f32.mrb[0].mxu0
  %v620 = vadd.f32 0.0, %v619
  %v621 = vpop.f32.mrb[0].mxu0
  %v622 = vpop.f32.mrb[0].mxu0
  %v623 = vadd.f32 0.0, %v622
  %v624 = vpop.f32.mrb[0].mxu0
  %625 = vmatprep.mubr.bf16.mxu0 0
  %626 = vmatmul.mubr.bf16.gmra.mrb[0].mxu0 %v583
  %v627 = vpop.f32.mrb[0].mxu0
  %v628 = vadd.f32 0.0, %v627
  %v629 = vpop.f32.mrb[0].mxu0
  %v630 = vpop.f32.mrb[0].mxu0
  %v631 = vadd.f32 0.0, %v630
  %v632 = vpop.f32.mrb[0].mxu0
  %633 = vdwg.mxu0
  %v634 = vadd.f32 %v553, %v620
  %v635 = vadd.f32 %v554, %v623
  %v636 = vadd.f32 %v555, %v628
  %v637 = vadd.f32 %v556, %v631
  %v638 = vld [vmem:[%s0 + $0x4] sm:$0xf]
  %v639 = vld [vmem:[%s0 + $0x8] sm:$0xf]
  %v640 = vld [vmem:[%s0 + $0xc] sm:$0xf]
  %v641 = vld [vmem:[%s0 + $0x10] sm:$0xf]
  %v642 = vld [vmem:[%s0 + $0x14] sm:$0x1]
  %s643 = scalar_lea.vmem %s1, 112
  %v644 = vld [vmem:[%s643] sm:$0xf]
  %v645 = vld [vmem:[%s643 + $0x4] sm:$0xf]
  %v646 = vld [vmem:[%s643 + $0x8] sm:$0xf]
  %v647 = vld [vmem:[%s643 + $0xc] sm:$0xf]
  %v653 = vunpack.c.l.b16 %v638
  %v654 = vunpack.c.l.b16 %v639
  %v655 = vunpack.c.l.b16 %v640
  %v656 = vunpack.c.l.b16 %v641
  %v657 = vunpack.c.l.b16 %v642
  %v658 = vpack.c.b16 %v654, %v653
  %v659 = vpack.c.b16 %v656, %v655
  %v660 = vpack.c.b16 %v657, %v657
  %v662 = vshrl.u32 %v658, 16
  %v664 = vshll.u32 %v658, 16
  %v666 = vrot.slane %v664, 1
  %v667 = vor.u32 %v662, %v666
  %v669 = vshll.u32 %v659, 16
  %v671 = vrot.slane %v669, 1
  %v672 = vsel %vm39, %v667, %v671
  %v673 = vshrl.u32 %v659, 16
  %v675 = vor.u32 %v673, %v671
  %v677 = vshll.u32 %v660, 16
  %v679 = vrot.slane %v677, 1
  %v680 = vsel %vm39, %v675, %v679
  %v685 = vunpack.c.l.b16 %v644
  %v686 = vunpack.c.l.b16 %v645
  %v687 = vunpack.c.l.b16 %v646
  %v688 = vunpack.c.l.b16 %v647
  %v689 = vpack.c.b16 %v686, %v685
  %v690 = vpack.c.b16 %v688, %v687
  %v694 = vsel %vm72, %v672, 0
  %v697 = vsel %vm72, %v680, 0
  %699 = vmatprep.subr.bf16.mxu0 0
  %700 = vmatpush1.bf16.msra.mxu0 %v689
  %701 = vmatprep.subr.bf16.mxu0 0
  %702 = vmatpush1.bf16.msra.mxu0 %v690
  %703 = vmatprep.subr.bf16.mxu0 0
  %704 = vmatpush1.bf16.msra.mxu0 0
  %705 = vmatprep.subr.bf16.mxu0 0
  %706 = vmatpush1.bf16.msra.mxu0 0
  %707 = vmatprep.subr.bf16.mxu0 0
  %708 = vmatpush1.bf16.msra.mxu0 0
  %709 = vmatprep.subr.bf16.mxu0 0
  %710 = vmatpush1.bf16.msra.mxu0 0
  %711 = vmatprep.subr.bf16.mxu0 0
  %712 = vmatpush1.bf16.msra.mxu0 0
  %713 = vmatprep.subr.bf16.mxu0 0
  %714 = vmatpush1.bf16.msra.mxu0 0
  %715 = vmatprep.subr.bf16.mxu0 0
  %716 = vmatpush1.bf16.msra.mxu0 0
  %717 = vmatprep.subr.bf16.mxu0 0
  %718 = vmatpush1.bf16.msra.mxu0 0
  %719 = vmatprep.subr.bf16.mxu0 0
  %720 = vmatpush1.bf16.msra.mxu0 0
  %721 = vmatprep.subr.bf16.mxu0 0
  %722 = vmatpush1.bf16.msra.mxu0 0
  %723 = vmatprep.subr.bf16.mxu0 0
  %724 = vmatpush1.bf16.msra.mxu0 0
  %725 = vmatprep.subr.bf16.mxu0 0
  %726 = vmatpush1.bf16.msra.mxu0 0
  %727 = vmatprep.subr.bf16.mxu0 0
  %728 = vmatpush1.bf16.msra.mxu0 0
  %729 = vmatprep.subr.bf16.mxu0 0
  %730 = vmatpush1.bf16.msra.mxu0 0
  %731 = vmatprep.mubr.bf16.mxu0 0
  %732 = vmatmul.mubr.bf16.gmra.mrb[0].mxu0 %v694
  %v733 = vpop.f32.mrb[0].mxu0
  %v734 = vadd.f32 0.0, %v733
  %v735 = vpop.f32.mrb[0].mxu0
  %v736 = vpop.f32.mrb[0].mxu0
  %v737 = vadd.f32 0.0, %v736
  %v738 = vpop.f32.mrb[0].mxu0
  %739 = vmatprep.mubr.bf16.mxu0 0
  %740 = vmatmul.mubr.bf16.gmra.mrb[0].mxu0 %v697
  %v741 = vpop.f32.mrb[0].mxu0
  %v742 = vadd.f32 0.0, %v741
  %v743 = vpop.f32.mrb[0].mxu0
  %v744 = vpop.f32.mrb[0].mxu0
  %v745 = vadd.f32 0.0, %v744
  %v746 = vpop.f32.mrb[0].mxu0
  %747 = vdwg.mxu0
  %v748 = vadd.f32 %v634, %v734
  %v749 = vadd.f32 %v635, %v737
  %v750 = vadd.f32 %v636, %v742
  %v751 = vadd.f32 %v637, %v745
  %v752 = vld [vmem:[%s0 + $0x4] sm:$0xe]
  %s753 = scalar_lea.vmem %s1, 128
  %v754 = vld [vmem:[%s753] sm:$0xf]
  %v755 = vld [vmem:[%s753 + $0x4] sm:$0xf]
  %v756 = vld [vmem:[%s753 + $0x8] sm:$0xf]
  %v757 = vld [vmem:[%s753 + $0xc] sm:$0xf]
  %v759 = vunpack.c.l.b16 %v752
  %v760 = vpack.c.b16 %v654, %v759
  %v761 = vrot.slane %v760, 1
  %v762 = vrot.slane %v659, 1
  %v763 = vsel %vm202, %v761, %v762
  %v764 = vrot.slane %v660, 1
  %v765 = vsel %vm202, %v762, %v764
  %v770 = vunpack.c.l.b16 %v754
  %v771 = vunpack.c.l.b16 %v755
  %v772 = vunpack.c.l.b16 %v756
  %v773 = vunpack.c.l.b16 %v757
  %v774 = vpack.c.b16 %v771, %v770
  %v775 = vpack.c.b16 %v773, %v772
  %v779 = vsel %vm72, %v763, 0
  %v782 = vsel %vm72, %v765, 0
  %784 = vmatprep.subr.bf16.mxu0 0
  %785 = vmatpush1.bf16.msra.mxu0 %v774
  %786 = vmatprep.subr.bf16.mxu0 0
  %787 = vmatpush1.bf16.msra.mxu0 %v775
  %788 = vmatprep.subr.bf16.mxu0 0
  %789 = vmatpush1.bf16.msra.mxu0 0
  %790 = vmatprep.subr.bf16.mxu0 0
  %791 = vmatpush1.bf16.msra.mxu0 0
  %792 = vmatprep.subr.bf16.mxu0 0
  %793 = vmatpush1.bf16.msra.mxu0 0
  %794 = vmatprep.subr.bf16.mxu0 0
  %795 = vmatpush1.bf16.msra.mxu0 0
  %796 = vmatprep.subr.bf16.mxu0 0
  %797 = vmatpush1.bf16.msra.mxu0 0
  %798 = vmatprep.subr.bf16.mxu0 0
  %799 = vmatpush1.bf16.msra.mxu0 0
  %800 = vmatprep.subr.bf16.mxu0 0
  %801 = vmatpush1.bf16.msra.mxu0 0
  %802 = vmatprep.subr.bf16.mxu0 0
  %803 = vmatpush1.bf16.msra.mxu0 0
  %804 = vmatprep.subr.bf16.mxu0 0
  %805 = vmatpush1.bf16.msra.mxu0 0
  %806 = vmatprep.subr.bf16.mxu0 0
  %807 = vmatpush1.bf16.msra.mxu0 0
  %808 = vmatprep.subr.bf16.mxu0 0
  %809 = vmatpush1.bf16.msra.mxu0 0
  %810 = vmatprep.subr.bf16.mxu0 0
  %811 = vmatpush1.bf16.msra.mxu0 0
  %812 = vmatprep.subr.bf16.mxu0 0
  %813 = vmatpush1.bf16.msra.mxu0 0
  %814 = vmatprep.subr.bf16.mxu0 0
  %815 = vmatpush1.bf16.msra.mxu0 0
  %816 = vmatprep.mubr.bf16.mxu0 0
  %817 = vmatmul.mubr.bf16.gmra.mrb[0].mxu0 %v779
  %v818 = vpop.f32.mrb[0].mxu0
  %v819 = vadd.f32 0.0, %v818
  %v820 = vpop.f32.mrb[0].mxu0
  %v821 = vpop.f32.mrb[0].mxu0
  %v822 = vadd.f32 0.0, %v821
  %v823 = vpop.f32.mrb[0].mxu0
  %824 = vmatprep.mubr.bf16.mxu0 0
  %825 = vmatmul.mubr.bf16.gmra.mrb[0].mxu0 %v782
  %v826 = vpop.f32.mrb[0].mxu0
  %v827 = vadd.f32 0.0, %v826
  %v828 = vpop.f32.mrb[0].mxu0
  %v829 = vpop.f32.mrb[0].mxu0
  %v830 = vadd.f32 0.0, %v829
  %v831 = vpop.f32.mrb[0].mxu0
  %832 = vdwg.mxu0
  %v833 = vadd.f32 %v748, %v819
  %v834 = vadd.f32 %v749, %v822
  %v835 = vadd.f32 %v750, %v827
  %v836 = vadd.f32 %v751, %v830
  %v837 = vpack.c.bf16 %v834, %v833
  %v838 = vpack.c.bf16 %v836, %v835
  %v841 = vunpack.c.l.b16 %v837
  %v842 = vunpack.c.h.b16 %v837
  %v843 = vunpack.c.l.b16 %v838
  %v844 = vunpack.c.h.b16 %v838
  %v845 = vpack.c.b16 %v841, %v841
  %v846 = vpack.c.b16 %v842, %v842
  %v847 = vpack.c.b16 %v843, %v843
  %v848 = vpack.c.b16 %v844, %v844
  %853 = vst [vmem:[%s2] sm:$0xf] %v845
  %854 = vst [vmem:[%s2 + $0x4] sm:$0xf] %v846
  %855 = vst [vmem:[%s2 + $0x8] sm:$0xf] %v847
  %856 = vst [vmem:[%s2 + $0xc] sm:$0xf] %v848
  // Predicated region
  $region10: #{densenet_forward.22} parent=0 // pred_check
    _
  $region11: #{densenet_forward.22} parent=0 // pred_check_branch
    %858 = sbr.rel (0) target = $region13
  $region12: #{densenet_forward.22} parent=0 // pred_region
    _
  $region13: #{densenet_forward.22} parent=0 // pred_fallthru
    _
  // Predicated region
  $region14: #{densenet_forward.22} parent=0 // pred_check
    _
  $region15: #{densenet_forward.22} parent=0 // pred_check_branch
    %860 = sbr.rel (0) target = $region17
  $region16: #{densenet_forward.22} parent=0 // pred_region
    _
  $region17: #{densenet_forward.22} parent=0 // pred_fallthru
    _

// kernel: densenet_forward.25
$region0: #{densenet_forward.25}
  #allocation0 [shape = 'u32[]', space=smem, size = 0x4, offset = 0x4, fixed_abs, tag = 'smem constant byte address 0x4 - core index']
  #allocation1 [shape = 'u32[144,128]{1,0:T(1,128)}', space=vmem, size = 0x12000, scoped, tag = 'internal scratch']
  %s0 = inlined_call_operand.vmem [shape: bf16[2,4,32], index: 0, kind: input, shape index: {}]
  %s1 = inlined_call_operand.vmem [shape: f32[1,1,32], index: 1, kind: input, shape index: {}]
  %s2 = inlined_call_operand.vmem [shape: f32[1,1,32], index: 2, kind: input, shape index: {}]
  %s3 = inlined_call_operand.vmem [shape: f32[32,128], index: 3, kind: input, shape index: {}]
  %s4 = inlined_call_operand.vmem [shape: f32[1,128], index: 4, kind: input, shape index: {}]
  %s5 = inlined_call_operand.hbm [shape: f32[2,128], index: 5, kind: output, shape index: {}]
  %s6 = sld [smem:[#allocation0]]
  $region30: #{densenet_forward.25} parent=0
    _
  %s8 = ssub.s32 1, %s6
  %s9 = scalar_select 0, %s8, %s6
  $region1: #{densenet_forward.25} parent=0
    #allocation2 [shape = 'u8[1024]{0}', space=vmem, size = 0x400, scoped, tag = 'output window, operand 0, single buffered']
    #allocation3 [shape = 's32[1]{0}', space=sflag, size = 0x4, scoped, tag = 'scoped memory for densenet_forward.25']
    %10 = vsyncpa [#allocation3], 0
    // Predicated region
    $region2: #{densenet_forward.25} parent=1 // pred_check
      _
    $region3: #{densenet_forward.25} parent=1 // pred_check_branch
      %12 = sbr.rel (0) target = $region5
    $region4: #{densenet_forward.25} parent=1 // pred_region
      _
    $region5: #{densenet_forward.25} parent=1 // pred_fallthru
      _
    // Predicated region
    $region6: #{densenet_forward.25} parent=1 // pred_check
      _
    $region7: #{densenet_forward.25} parent=1 // pred_check_branch
      %14 = sbr.rel (0) target = $region9
    $region8: #{densenet_forward.25} parent=1 // pred_region
      _
    $region9: #{densenet_forward.25} parent=1 // pred_fallthru
      _
    // Predicated region
    $region10: #{densenet_forward.25} parent=1 // pred_check
      _
    $region11: #{densenet_forward.25} parent=1 // pred_check_branch
      %16 = sbr.rel (0) target = $region13
    $region12: #{densenet_forward.25} parent=1 // pred_region
      _
    $region13: #{densenet_forward.25} parent=1 // pred_fallthru
      _
    // Predicated region
    $region14: #{densenet_forward.25} parent=1 // pred_check
      _
    $region15: #{densenet_forward.25} parent=1 // pred_check_branch
      %18 = sbr.rel (0) target = $region17
    $region16: #{densenet_forward.25} parent=1 // pred_region
      _
    $region17: #{densenet_forward.25} parent=1 // pred_fallthru
      _
    // Predicated region
    $region18: #{densenet_forward.25} parent=1 // pred_check
      _
    $region19: #{densenet_forward.25} parent=1 // pred_check_branch
      %20 = sbr.rel (0) target = $region21
    $region20: #{densenet_forward.25} parent=1 // pred_region
      _
    $region21: #{densenet_forward.25} parent=1 // pred_fallthru
      _
    %v21 = vld [vmem:[%s0] sm:$0x3]
    %v22 = vld [vmem:[%s0 + $0x2] sm:$0x3]
    %v23 = vunpack.c.l.bf16 %v21
    %v24 = vunpack.c.l.bf16 %v22
    %v25 = vld [vmem:[%s1] sm:$0x1]
    %v27 = vlaneseq
    %v28 = vshrl.u32 %v27, 7
    %v29 = vsub.s32 0, %v28
    %v30 = vrot.slane %v25, %v29
    %v32 = vmul.f32 %v23, %v30
    %v33 = vmul.f32 %v24, %v30
    %v34 = vld [vmem:[%s2] sm:$0x1]
    %v36 = vlaneseq
    %v37 = vshrl.u32 %v36, 7
    %v38 = vsub.s32 0, %v37
    %v39 = vrot.slane %v34, %v38
    %v41 = vadd.f32 %v32, %v39
    %v42 = vadd.f32 %v33, %v39
    %v43 = vmax.f32 %v41, 0.0
    %v44 = vmax.f32 %v42, 0.0
    %vm45 = vcmask 257024
    %v46 = vsel %vm45, %v43, 0.0
    %v47 = vrot.slane %v46, 4
    %v48 = vadd.f32 %v46, %v47
    %v49 = vrot.slane %v48, 2
    %v50 = vadd.f32 %v48, %v49
    %v51 = vrot.slane %v50, 1
    %v52 = vadd.f32 %v50, %v51
    %v53 = vsel %vm45, %v44, 0.0
    %v54 = vrot.slane %v53, 4
    %v55 = vadd.f32 %v53, %v54
    %v56 = vrot.slane %v55, 2
    %v57 = vadd.f32 %v55, %v56
    %v58 = vrot.slane %v57, 1
    %v59 = vadd.f32 %v57, %v58
    %v60 = vrcp.pop 4.0
    %v61 = vmul.f32 %v52, %v60
    %v62 = vmul.f32 %v59, %v60
    %v63 = vld [vmem:[%s3] sm:$0xff]
    %v64 = vld [vmem:[%s3 + $0x8] sm:$0xff]
    %v65 = vld [vmem:[%s3 + $0x10] sm:$0xff]
    %v66 = vld [vmem:[%s3 + $0x18] sm:$0xff]
    %v67 = vld [vmem:[%s4] sm:$0x1]
    %v69 = vlaneseq
    %v70 = vshrl.u32 %v69, 7
    %v71 = vsub.s32 0, %v70
    %v72 = vrot.slane %v67, %v71
    %vm76 = vcmask 1041409
    %v77 = vsel %vm76, %v62, %v61
    %vm78 = vcmask 261120
    %v79 = vsel %vm78, %v77, 0
    %81 = vmatprep.subr.mxu0 0.0
    %82 = vmatpush1.msra.mxu0 %v63
    %83 = vmatprep.subr.mxu0 0.0
    %84 = vmatpush1.msra.mxu0 %v64
    %85 = vmatprep.subr.mxu0 0.0
    %86 = vmatpush1.msra.mxu0 %v65
    %87 = vmatprep.subr.mxu0 0.0
    %88 = vmatpush1.msra.mxu0 %v66
    %89 = vmatprep.subr.mxu0 0.0
    %90 = vmatpush1.msra.mxu0 0.0
    %91 = vmatprep.subr.mxu0 0.0
    %92 = vmatpush1.msra.mxu0 0.0
    %93 = vmatprep.subr.mxu0 0.0
    %94 = vmatpush1.msra.mxu0 0.0
    %95 = vmatprep.subr.mxu0 0.0
    %96 = vmatpush1.msra.mxu0 0.0
    %97 = vmatprep.subr.mxu0 0.0
    %98 = vmatpush1.msra.mxu0 0.0
    %99 = vmatprep.subr.mxu0 0.0
    %100 = vmatpush1.msra.mxu0 0.0
    %101 = vmatprep.subr.mxu0 0.0
    %102 = vmatpush1.msra.mxu0 0.0
    %103 = vmatprep.subr.mxu0 0.0
    %104 = vmatpush1.msra.mxu0 0.0
    %105 = vmatprep.subr.mxu0 0.0
    %106 = vmatpush1.msra.mxu0 0.0
    %107 = vmatprep.subr.mxu0 0.0
    %108 = vmatpush1.msra.mxu0 0.0
    %109 = vmatprep.subr.mxu0 0.0
    %110 = vmatpush1.msra.mxu0 0.0
    %111 = vmatprep.subr.mxu0 0.0
    %112 = vmatpush1.msra.mxu0 0.0
    %113 = vmatprep.subr.mxu0 0.0
    %114 = vmatpush1.msra.mxu0 0.0
    %115 = vmatprep.subr.mxu0 0.0
    %116 = vmatpush1.msra.mxu0 0.0
    %117 = vmatprep.subr.mxu0 0.0
    %118 = vmatpush1.msra.mxu0 0.0
    %119 = vmatprep.subr.mxu0 0.0
    %120 = vmatpush1.msra.mxu0 0.0
    %121 = vmatprep.subr.mxu0 0.0
    %122 = vmatpush1.msra.mxu0 0.0
    %123 = vmatprep.subr.mxu0 0.0
    %124 = vmatpush1.msra.mxu0 0.0
    %125 = vmatprep.subr.mxu0 0.0
    %126 = vmatpush1.msra.mxu0 0.0
    %127 = vmatprep.subr.mxu0 0.0
    %128 = vmatpush1.msra.mxu0 0.0
    %129 = vmatprep.subr.mxu0 0.0
    %130 = vmatpush1.msra.mxu0 0.0
    %131 = vmatprep.subr.mxu0 0.0
    %132 = vmatpush1.msra.mxu0 0.0
    %133 = vmatprep.subr.mxu0 0.0
    %134 = vmatpush1.msra.mxu0 0.0
    %135 = vmatprep.subr.mxu0 0.0
    %136 = vmatpush1.msra.mxu0 0.0
    %137 = vmatprep.subr.mxu0 0.0
    %138 = vmatpush1.msra.mxu0 0.0
    %139 = vmatprep.subr.mxu0 0.0
    %140 = vmatpush1.msra.mxu0 0.0
    %141 = vmatprep.subr.mxu0 0.0
    %142 = vmatpush1.msra.mxu0 0.0
    %143 = vmatprep.subr.mxu0 0.0
    %144 = vmatpush1.msra.mxu0 0.0
    %145 = vmatprep.mubr.f32.mxu0 0.0
    %146 = vmatmul.mubr.f32.gmra.mrb[0].mxu0 %v79
    %v147 = vpop.f32.mrb[0].mxu0
    %v148 = vadd.f32 %v72, %v147
    %v149 = vpop.f32.mrb[0].mxu0
    %150 = vdwg.mxu0
    %151 = vst [vmem:[#allocation2] sm:$0x3] %v148
    // Predicated region
    $region22: #{densenet_forward.25} parent=1 // pred_check
      _
    $region23: #{densenet_forward.25} parent=1 // pred_check_branch
      %153 = sbr.rel (0) target = $region25
    $region24: #{densenet_forward.25} parent=1 // pred_region
      %s155 = ssub.s32 32, 32
      %156 = vsyncadd [#allocation3], %s155
      %s158 = sshll.u32 [#allocation2], 4
      %s159 = int_to_ptr.vmem [resolvable:$true] %s158
      %161 = dma.vmem_to_hbm [thread:$0]  %s159, 32, %s5, [#allocation3]
    $region25: #{densenet_forward.25} parent=1 // pred_fallthru
      _
    // Predicated region
    $region26: #{densenet_forward.25} parent=1 // pred_check
      _
    $region27: #{densenet_forward.25} parent=1 // pred_check_branch
      %163 = sbr.rel (0) target = $region29
    $region28: #{densenet_forward.25} parent=1 // pred_region
      %164 = dma.done [#allocation3], 32
    $region29: #{densenet_forward.25} parent=1 // pred_fallthru
      _
    %165 = vsyncpa [#allocation3], 1

</llo_original>
